<compile_context>
chip_gen: v6e
topology: v6e:2x2x1
jax: 0.10.0
libtpu: 0.0.40
codegen_flags: <defaults>
</compile_context>

<pallas_src>
import jax
import jax.numpy as jnp
from jax import lax
from jax.experimental import pallas as pl
from jax.experimental.pallas import tpu as pltpu

EPS = 1e-5

TILE_M_MATMUL = 512   # row tile for the first-conv im2col matmul
TILE_M_DSCONV = 256   # row tile for the fused DSConv (9 taps resident per row)
# VMEM note: double-buffered DSConv block ~ 2*(9*TM*C + TM*Cout)*4 B; at
# TM=256, C=64 that's ~1.3 MiB -- far below the 32 MiB scoped limit even on
# v7x (64 MiB physical); v5e/v6e (128 MiB) could take 512-2048-row tiles.


# --------------------------- Pallas kernels ---------------------------------

def _matmul_bias_relu_kernel(x_ref, w_ref, b_ref, o_ref):
    # x: (TM, K) bf16   w: (K, Cout) bf16 (BN scale pre-folded)
    # b: (1, Cout) f32  o: (TM, Cout) f32
    acc = jnp.dot(x_ref[...], w_ref[...], preferred_element_type=jnp.float32)
    o_ref[...] = jnp.maximum(acc + b_ref[...], 0.0)


def _fused_dsconv_kernel(t_ref, wd_ref, bd_ref, wp_ref, bp_ref, o_ref):
    # t:  (9, TM, C)  f32  depthwise taps, (kh*3 + kw) major
    # wd: (9, 1, C)   f32  depthwise weights with BN scale folded in
    # bd: (1, C)      f32  depthwise BN bias
    # wp: (C, Cout)   bf16 pointwise weights with BN scale folded in
    # bp: (1, Cout)   f32  pointwise BN bias
    # o:  (TM, Cout)  f32
    acc = t_ref[0] * wd_ref[0]
    for k in range(1, 9):                       # static unrolled tap loop (VPU)
        acc = acc + t_ref[k] * wd_ref[k]
    dw = jnp.maximum(acc + bd_ref[...], 0.0)    # depthwise BN + ReLU in f32
    pw = jnp.dot(dw.astype(jnp.bfloat16), wp_ref[...],
                 preferred_element_type=jnp.float32)   # pointwise on the MXU
    o_ref[...] = jnp.maximum(pw + bp_ref[...], 0.0)


# --------------------------- pallas_call wrappers ----------------------------

def _round_up(x, m):
    return (x + m - 1) // m * m


def _pick_tile(m, tile_max):
    return min(tile_max, _round_up(m, 8))


def _compiler_params():
    return pltpu.CompilerParams(
        dimension_semantics=("parallel",),          # shard row tiles across TCs
        vmem_limit_bytes=32 * 1024 * 1024,
    )


def matmul_bias_relu(x, w, bias, tile_m):
    Mp, K = x.shape
    Cout = w.shape[1]
    return pl.pallas_call(
        _matmul_bias_relu_kernel,
        out_shape=jax.ShapeDtypeStruct((Mp, Cout), jnp.float32),
        grid=(Mp // tile_m,),
        in_specs=[
            pl.BlockSpec((tile_m, K), lambda i: (i, 0)),
            pl.BlockSpec((K, Cout), lambda i: (0, 0)),
            pl.BlockSpec((1, Cout), lambda i: (0, 0)),
        ],
        out_specs=pl.BlockSpec((tile_m, Cout), lambda i: (i, 0)),
        compiler_params=_compiler_params(),
    )(x, w, bias)


def fused_dsconv(taps, wd, bd, wp, bp, tile_m):
    _, Mp, C = taps.shape
    Cout = wp.shape[1]
    return pl.pallas_call(
        _fused_dsconv_kernel,
        out_shape=jax.ShapeDtypeStruct((Mp, Cout), jnp.float32),
        grid=(Mp // tile_m,),
        in_specs=[
            pl.BlockSpec((9, tile_m, C), lambda i: (0, i, 0)),
            pl.BlockSpec((9, 1, C), lambda i: (0, 0, 0)),
            pl.BlockSpec((1, C), lambda i: (0, 0)),
            pl.BlockSpec((C, Cout), lambda i: (0, 0)),
            pl.BlockSpec((1, Cout), lambda i: (0, 0)),
        ],
        out_specs=pl.BlockSpec((tile_m, Cout), lambda i: (i, 0)),
        compiler_params=_compiler_params(),
    )(taps, wd, bd, wp, bp)


# --------------------------- JAX glue ----------------------------------------

def _extract_taps(x_nhwc, k, stride, pad):
    """Return (k*k, N, Ho, Wo, C) taps in (kh, kw) row-major order (XLA glue)."""
    N, H, W, C = x_nhwc.shape
    if pad > 0:
        x_nhwc = jnp.pad(x_nhwc, ((0, 0), (pad, pad), (pad, pad), (0, 0)))
    Hp, Wp = H + 2 * pad, W + 2 * pad
    Ho = (Hp - k) // stride + 1
    Wo = (Wp - k) // stride + 1
    taps = []
    for kh in range(k):
        for kw in range(k):
            taps.append(lax.slice(
                x_nhwc,
                (0, kh, kw, 0),
                (N, kh + stride * (Ho - 1) + 1, kw + stride * (Wo - 1) + 1, C),
                (1, stride, stride, 1)))
    return jnp.stack(taps, axis=0), (N, Ho, Wo, C)


def learning_to_downsample(x_nchw, p):
    x = jnp.transpose(x_nchw, (0, 2, 3, 1)).astype(jnp.float32)  # NHWC

    # ---- _ConvBNReLU: 3x3, stride 2, padding 0 (im2col matmul) ----
    st, (N, Ho, Wo, Cin) = _extract_taps(x, 3, 2, 0)
    M = N * Ho * Wo
    K = 9 * Cin
    patches = jnp.transpose(st, (1, 2, 3, 0, 4)).reshape(M, K)
    Kp = _round_up(K, 32)                       # pad ragged K=27 -> 32
    tm = _pick_tile(M, TILE_M_MATMUL)
    Mp = _round_up(M, tm)
    patches = jnp.pad(patches, ((0, Mp - M), (0, Kp - K))).astype(jnp.bfloat16)

    w1 = jnp.transpose(p['w1'], (2, 3, 1, 0)).reshape(K, -1)     # (kh,kw,ci,co)
    w1 = w1 * p['s1'][None, :]                                   # fold BN scale
    w1 = jnp.pad(w1, ((0, Kp - K), (0, 0))).astype(jnp.bfloat16)
    y = matmul_bias_relu(patches, w1, p['b1'][None, :], tm)[:M]
    x = y.reshape(N, Ho, Wo, -1)

    # ---- _DSConv: fused depthwise3x3 s2 p1 + BN + ReLU + pointwise + BN + ReLU
    def dsconv(x, wd, sd, bd, wp, sp, bp):
        C = x.shape[-1]
        st, (N, Ho, Wo, _) = _extract_taps(x, 3, 2, 1)
        M = N * Ho * Wo
        tm = _pick_tile(M, TILE_M_DSCONV)
        Mp = _round_up(M, tm)
        taps = jnp.pad(st.reshape(9, M, C), ((0, 0), (0, Mp - M), (0, 0)))
        wdw = (jnp.transpose(wd.reshape(C, 9), (1, 0)) * sd[None, :])  # (9, C)
        wdw = wdw.reshape(9, 1, C)
        wpw = jnp.transpose(wp.reshape(wp.shape[0], C), (1, 0)) * sp[None, :]
        y = fused_dsconv(taps, wdw, bd[None, :],
                         wpw.astype(jnp.bfloat16), bp[None, :], tm)[:M]
        return y.reshape(N, Ho, Wo, -1)

    x = dsconv(x, p['wd1'], p['sd1'], p['bd1'], p['wp1'], p['sp1'], p['bp1'])
    x = dsconv(x, p['wd2'], p['sd2'], p['bd2'], p['wp2'], p['sp2'], p['bp2'])

    return jnp.transpose(x, (0, 3, 1, 2))  # back to NCHW


# --------------------------- parameters --------------------------------------

def init_params(key, in_ch=3, c1=32, c2=48, c3=64):
    ks = jax.random.split(key, 10)

    def conv_w(k, shape):  # PyTorch conv weight layout (Cout, Cin/groups, kh, kw)
        fan_in = shape[1] * shape[2] * shape[3]
        return jax.random.normal(k, shape, jnp.float32) / jnp.sqrt(float(fan_in))

    def bn_fold(k, c):  # eval-mode BN folded into per-channel scale / bias
        k1, k2, k3, k4 = jax.random.split(k, 4)
        gamma = jax.random.uniform(k1, (c,), jnp.float32, 0.5, 1.5)
        beta = jax.random.normal(k2, (c,), jnp.float32) * 0.1
        mean = jax.random.normal(k3, (c,), jnp.float32) * 0.1
        var = jax.random.uniform(k4, (c,), jnp.float32, 0.5, 1.5)
        scale = gamma / jnp.sqrt(var + EPS)
        return scale, beta - mean * scale

    p = {}
    p['w1'] = conv_w(ks[0], (c1, in_ch, 3, 3)); p['s1'], p['b1'] = bn_fold(ks[1], c1)
    p['wd1'] = conv_w(ks[2], (c1, 1, 3, 3));    p['sd1'], p['bd1'] = bn_fold(ks[3], c1)
    p['wp1'] = conv_w(ks[4], (c2, c1, 1, 1));   p['sp1'], p['bp1'] = bn_fold(ks[5], c2)
    p['wd2'] = conv_w(ks[6], (c2, 1, 3, 3));    p['sd2'], p['bd2'] = bn_fold(ks[7], c2)
    p['wp2'] = conv_w(ks[8], (c3, c2, 1, 1));   p['sp2'], p['bp2'] = bn_fold(ks[9], c3)
    return p


# --------------------------- pure-JAX reference -------------------------------

def ref_forward(x_nchw, p):
    def cbr(y, w, scale, bias, stride, pad, groups=1):
        y = lax.conv_general_dilated(
            y, w, window_strides=(stride, stride),
            padding=[(pad, pad), (pad, pad)],
            dimension_numbers=('NCHW', 'OIHW', 'NCHW'),
            feature_group_count=groups)
        y = y * scale[None, :, None, None] + bias[None, :, None, None]
        return jnp.maximum(y, 0.0)

    y = cbr(x_nchw, p['w1'], p['s1'], p['b1'], 2, 0)
    y = cbr(y, p['wd1'], p['sd1'], p['bd1'], 2, 1, groups=p['wd1'].shape[0])
    y = cbr(y, p['wp1'], p['sp1'], p['bp1'], 1, 0)
    y = cbr(y, p['wd2'], p['sd2'], p['bd2'], 2, 1, groups=p['wd2'].shape[0])
    y = cbr(y, p['wp2'], p['sp2'], p['bp2'], 1, 0)
    return y


# --------------------------- main ---------------------------------------------

if __name__ == "__main__":
    key = jax.random.PRNGKey(0)
    kx, kp = jax.random.split(key)

    # NCHW input like PyTorch; 64x64 so three stride-2 stages stay non-trivial
    # and the row grids actually tile (conv1: grid=4, dsconv1: grid=2).
    x = jax.random.normal(kx, (2, 3, 64, 64), jnp.float32)
    params = init_params(kp)

    out = jax.jit(learning_to_downsample)(x, params)
    out = jax.block_until_ready(out)

    assert out.shape == (2, 64, 8, 8), out.shape
    ref = ref_forward(x, params)
    max_err = float(jnp.max(jnp.abs(out - ref)))
    mean_err = float(jnp.mean(jnp.abs(out - ref)))
    # bf16 MXU operands -> tolerance looser than the pure-f32 version.
    assert jnp.allclose(out, ref, rtol=5e-2, atol=1e-1), (max_err, mean_err)
    assert mean_err < 2e-2, mean_err

    print("KERNEL_OK")
</pallas_src>

<mosaic_0001>
module attributes {stable_mosaic.version = 11 : i64} {
  func.func @_matmul_bias_relu_kernel(%arg0: i32, %arg1: memref<512x32xbf16, #tpu.memory_space<vmem>>, %arg2: memref<32x32xbf16, #tpu.memory_space<vmem>>, %arg3: memref<1x32xf32, #tpu.memory_space<vmem>>, %arg4: memref<512x32xf32, #tpu.memory_space<vmem>>) attributes {dimension_semantics = [#tpu.dimension_semantics<parallel>], iteration_bounds = array<i64: 4>, scalar_prefetch = 0 : i64, scratch_operands = 0 : i64, tpu.core_type = #tpu.core_type<tc>, window_params = [{transform_indices = @transform_0, window_bounds = array<i64: 512, 32>}, {pipeline_mode = #tpu.pipeline_mode<synchronous>, transform_indices = @transform_1, window_bounds = array<i64: 32, 32>}, {pipeline_mode = #tpu.pipeline_mode<synchronous>, transform_indices = @transform_2, window_bounds = array<i64: 1, 32>}, {transform_indices = @transform_3, window_bounds = array<i64: 512, 32>}]} {
    %c0 = arith.constant 0 : index
    %c0_0 = arith.constant 0 : index
    %0 = vector.load %arg1[%c0, %c0_0] : memref<512x32xbf16, #tpu.memory_space<vmem>>, vector<512x32xbf16>
    %c0_1 = arith.constant 0 : index
    %c0_2 = arith.constant 0 : index
    %1 = vector.load %arg2[%c0_1, %c0_2] : memref<32x32xbf16, #tpu.memory_space<vmem>>, vector<32x32xbf16>
    %cst = arith.constant dense<0.000000e+00> : vector<512x32xf32>
    %2 = tpu.matmul %0, %1, %cst {dimension_numbers = #tpu.dot_dimension_numbers<[1], [0], [0], [1], [0, 0, 1, 1], [], []>} : vector<512x32xbf16>, vector<32x32xbf16>, vector<512x32xf32> -> vector<512x32xf32>
    %c0_3 = arith.constant 0 : index
    %c0_4 = arith.constant 0 : index
    %3 = vector.load %arg3[%c0_3, %c0_4] : memref<1x32xf32, #tpu.memory_space<vmem>>, vector<1x32xf32>
    %4 = vector.broadcast %3 : vector<1x32xf32> to vector<512x32xf32>
    %5 = arith.addf %2, %4 : vector<512x32xf32>
    %cst_5 = arith.constant 0.000000e+00 : f32
    %6 = vector.broadcast %cst_5 : f32 to vector<512x32xf32>
    %7 = arith.maximumf %5, %6 : vector<512x32xf32>
    %c0_6 = arith.constant 0 : index
    %c0_7 = arith.constant 0 : index
    %8 = vector.load %arg4[%c0_6, %c0_7] : memref<512x32xf32, #tpu.memory_space<vmem>>, vector<512x32xf32>
    tpu.vector_store %arg4[%c0_6, %c0_7], %7 {strides = array<i32>} : memref<512x32xf32, #tpu.memory_space<vmem>>, vector<512x32xf32>,
    return
  }
  func.func @transform_0(%arg0: i32) -> (i32, i32) {
    %c0_i32 = arith.constant 0 : i32
    %c0_i32_0 = arith.constant 0 : i32
    return %arg0, %c0_i32 : i32, i32
  }
  func.func @transform_1(%arg0: i32) -> (i32, i32) {
    %c0_i32 = arith.constant 0 : i32
    %c0_i32_0 = arith.constant 0 : i32
    %c0_i32_1 = arith.constant 0 : i32
    return %c0_i32, %c0_i32_0 : i32, i32
  }
  func.func @transform_2(%arg0: i32) -> (i32, i32) {
    %c0_i32 = arith.constant 0 : i32
    %c0_i32_0 = arith.constant 0 : i32
    %c0_i32_1 = arith.constant 0 : i32
    return %c0_i32, %c0_i32_0 : i32, i32
  }
  func.func @transform_3(%arg0: i32) -> (i32, i32) {
    %c0_i32 = arith.constant 0 : i32
    %c0_i32_0 = arith.constant 0 : i32
    return %arg0, %c0_i32 : i32, i32
  }
}

module attributes {stable_mosaic.version = 11 : i64} {
  func.func @_fused_dsconv_kernel(%arg0: i32, %arg1: memref<9x256x32xf32, #tpu.memory_space<vmem>>, %arg2: memref<9x1x32xf32, #tpu.memory_space<vmem>>, %arg3: memref<1x32xf32, #tpu.memory_space<vmem>>, %arg4: memref<32x48xbf16, #tpu.memory_space<vmem>>, %arg5: memref<1x48xf32, #tpu.memory_space<vmem>>, %arg6: memref<256x48xf32, #tpu.memory_space<vmem>>) attributes {dimension_semantics = [#tpu.dimension_semantics<parallel>], iteration_bounds = array<i64: 2>, scalar_prefetch = 0 : i64, scratch_operands = 0 : i64, tpu.core_type = #tpu.core_type<tc>, window_params = [{transform_indices = @transform_0, window_bounds = array<i64: 9, 256, 32>}, {pipeline_mode = #tpu.pipeline_mode<synchronous>, transform_indices = @transform_1, window_bounds = array<i64: 9, 1, 32>}, {pipeline_mode = #tpu.pipeline_mode<synchronous>, transform_indices = @transform_2, window_bounds = array<i64: 1, 32>}, {pipeline_mode = #tpu.pipeline_mode<synchronous>, transform_indices = @transform_3, window_bounds = array<i64: 32, 48>}, {pipeline_mode = #tpu.pipeline_mode<synchronous>, transform_indices = @transform_4, window_bounds = array<i64: 1, 48>}, {transform_indices = @transform_5, window_bounds = array<i64: 256, 48>}]} {
    %c0 = arith.constant 0 : index
    %c0_0 = arith.constant 0 : index
    %c0_1 = arith.constant 0 : index
    %0 = vector.load %arg1[%c0, %c0_0, %c0_1] : memref<9x256x32xf32, #tpu.memory_space<vmem>>, vector<1x256x32xf32>
    %1 = vector.shape_cast %0 : vector<1x256x32xf32> to vector<256x32xf32>
    %c0_2 = arith.constant 0 : index
    %c0_3 = arith.constant 0 : index
    %c0_4 = arith.constant 0 : index
    %2 = vector.load %arg2[%c0_2, %c0_3, %c0_4] : memref<9x1x32xf32, #tpu.memory_space<vmem>>, vector<1x1x32xf32>
    %3 = vector.shape_cast %2 : vector<1x1x32xf32> to vector<1x32xf32>
    %4 = vector.broadcast %3 : vector<1x32xf32> to vector<256x32xf32>
    %5 = arith.mulf %1, %4 : vector<256x32xf32>
    %c1 = arith.constant 1 : index
    %c0_5 = arith.constant 0 : index
    %c0_6 = arith.constant 0 : index
    %6 = vector.load %arg1[%c1, %c0_5, %c0_6] : memref<9x256x32xf32, #tpu.memory_space<vmem>>, vector<1x256x32xf32>
    %7 = vector.shape_cast %6 : vector<1x256x32xf32> to vector<256x32xf32>
    %c1_7 = arith.constant 1 : index
    %c0_8 = arith.constant 0 : index
    %c0_9 = arith.constant 0 : index
    %8 = vector.load %arg2[%c1_7, %c0_8, %c0_9] : memref<9x1x32xf32, #tpu.memory_space<vmem>>, vector<1x1x32xf32>
    %9 = vector.shape_cast %8 : vector<1x1x32xf32> to vector<1x32xf32>
    %10 = vector.broadcast %9 : vector<1x32xf32> to vector<256x32xf32>
    %11 = arith.mulf %7, %10 : vector<256x32xf32>
    %12 = arith.addf %5, %11 : vector<256x32xf32>
    %c2 = arith.constant 2 : index
    %c0_10 = arith.constant 0 : index
    %c0_11 = arith.constant 0 : index
    %13 = vector.load %arg1[%c2, %c0_10, %c0_11] : memref<9x256x32xf32, #tpu.memory_space<vmem>>, vector<1x256x32xf32>
    %14 = vector.shape_cast %13 : vector<1x256x32xf32> to vector<256x32xf32>
    %c2_12 = arith.constant 2 : index
    %c0_13 = arith.constant 0 : index
    %c0_14 = arith.constant 0 : index
    %15 = vector.load %arg2[%c2_12, %c0_13, %c0_14] : memref<9x1x32xf32, #tpu.memory_space<vmem>>, vector<1x1x32xf32>
    %16 = vector.shape_cast %15 : vector<1x1x32xf32> to vector<1x32xf32>
    %17 = vector.broadcast %16 : vector<1x32xf32> to vector<256x32xf32>
    %18 = arith.mulf %14, %17 : vector<256x32xf32>
    %19 = arith.addf %12, %18 : vector<256x32xf32>
    %c3 = arith.constant 3 : index
    %c0_15 = arith.constant 0 : index
    %c0_16 = arith.constant 0 : index
    %20 = vector.load %arg1[%c3, %c0_15, %c0_16] : memref<9x256x32xf32, #tpu.memory_space<vmem>>, vector<1x256x32xf32>
    %21 = vector.shape_cast %20 : vector<1x256x32xf32> to vector<256x32xf32>
    %c3_17 = arith.constant 3 : index
    %c0_18 = arith.constant 0 : index
    %c0_19 = arith.constant 0 : index
    %22 = vector.load %arg2[%c3_17, %c0_18, %c0_19] : memref<9x1x32xf32, #tpu.memory_space<vmem>>, vector<1x1x32xf32>
    %23 = vector.shape_cast %22 : vector<1x1x32xf32> to vector<1x32xf32>
    %24 = vector.broadcast %23 : vector<1x32xf32> to vector<256x32xf32>
    %25 = arith.mulf %21, %24 : vector<256x32xf32>
    %26 = arith.addf %19, %25 : vector<256x32xf32>
    %c4 = arith.constant 4 : index
    %c0_20 = arith.constant 0 : index
    %c0_21 = arith.constant 0 : index
    %27 = vector.load %arg1[%c4, %c0_20, %c0_21] : memref<9x256x32xf32, #tpu.memory_space<vmem>>, vector<1x256x32xf32>
    %28 = vector.shape_cast %27 : vector<1x256x32xf32> to vector<256x32xf32>
    %c4_22 = arith.constant 4 : index
    %c0_23 = arith.constant 0 : index
    %c0_24 = arith.constant 0 : index
    %29 = vector.load %arg2[%c4_22, %c0_23, %c0_24] : memref<9x1x32xf32, #tpu.memory_space<vmem>>, vector<1x1x32xf32>
    %30 = vector.shape_cast %29 : vector<1x1x32xf32> to vector<1x32xf32>
    %31 = vector.broadcast %30 : vector<1x32xf32> to vector<256x32xf32>
    %32 = arith.mulf %28, %31 : vector<256x32xf32>
    %33 = arith.addf %26, %32 : vector<256x32xf32>
    %c5 = arith.constant 5 : index
    %c0_25 = arith.constant 0 : index
    %c0_26 = arith.constant 0 : index
    %34 = vector.load %arg1[%c5, %c0_25, %c0_26] : memref<9x256x32xf32, #tpu.memory_space<vmem>>, vector<1x256x32xf32>
    %35 = vector.shape_cast %34 : vector<1x256x32xf32> to vector<256x32xf32>
    %c5_27 = arith.constant 5 : index
    %c0_28 = arith.constant 0 : index
    %c0_29 = arith.constant 0 : index
    %36 = vector.load %arg2[%c5_27, %c0_28, %c0_29] : memref<9x1x32xf32, #tpu.memory_space<vmem>>, vector<1x1x32xf32>
    %37 = vector.shape_cast %36 : vector<1x1x32xf32> to vector<1x32xf32>
    %38 = vector.broadcast %37 : vector<1x32xf32> to vector<256x32xf32>
    %39 = arith.mulf %35, %38 : vector<256x32xf32>
    %40 = arith.addf %33, %39 : vector<256x32xf32>
    %c6 = arith.constant 6 : index
    %c0_30 = arith.constant 0 : index
    %c0_31 = arith.constant 0 : index
    %41 = vector.load %arg1[%c6, %c0_30, %c0_31] : memref<9x256x32xf32, #tpu.memory_space<vmem>>, vector<1x256x32xf32>
    %42 = vector.shape_cast %41 : vector<1x256x32xf32> to vector<256x32xf32>
    %c6_32 = arith.constant 6 : index
    %c0_33 = arith.constant 0 : index
    %c0_34 = arith.constant 0 : index
    %43 = vector.load %arg2[%c6_32, %c0_33, %c0_34] : memref<9x1x32xf32, #tpu.memory_space<vmem>>, vector<1x1x32xf32>
    %44 = vector.shape_cast %43 : vector<1x1x32xf32> to vector<1x32xf32>
    %45 = vector.broadcast %44 : vector<1x32xf32> to vector<256x32xf32>
    %46 = arith.mulf %42, %45 : vector<256x32xf32>
    %47 = arith.addf %40, %46 : vector<256x32xf32>
    %c7 = arith.constant 7 : index
    %c0_35 = arith.constant 0 : index
    %c0_36 = arith.constant 0 : index
    %48 = vector.load %arg1[%c7, %c0_35, %c0_36] : memref<9x256x32xf32, #tpu.memory_space<vmem>>, vector<1x256x32xf32>
    %49 = vector.shape_cast %48 : vector<1x256x32xf32> to vector<256x32xf32>
    %c7_37 = arith.constant 7 : index
    %c0_38 = arith.constant 0 : index
    %c0_39 = arith.constant 0 : index
    %50 = vector.load %arg2[%c7_37, %c0_38, %c0_39] : memref<9x1x32xf32, #tpu.memory_space<vmem>>, vector<1x1x32xf32>
    %51 = vector.shape_cast %50 : vector<1x1x32xf32> to vector<1x32xf32>
    %52 = vector.broadcast %51 : vector<1x32xf32> to vector<256x32xf32>
    %53 = arith.mulf %49, %52 : vector<256x32xf32>
    %54 = arith.addf %47, %53 : vector<256x32xf32>
    %c8 = arith.constant 8 : index
    %c0_40 = arith.constant 0 : index
    %c0_41 = arith.constant 0 : index
    %55 = vector.load %arg1[%c8, %c0_40, %c0_41] : memref<9x256x32xf32, #tpu.memory_space<vmem>>, vector<1x256x32xf32>
    %56 = vector.shape_cast %55 : vector<1x256x32xf32> to vector<256x32xf32>
    %c8_42 = arith.constant 8 : index
    %c0_43 = arith.constant 0 : index
    %c0_44 = arith.constant 0 : index
    %57 = vector.load %arg2[%c8_42, %c0_43, %c0_44] : memref<9x1x32xf32, #tpu.memory_space<vmem>>, vector<1x1x32xf32>
    %58 = vector.shape_cast %57 : vector<1x1x32xf32> to vector<1x32xf32>
    %59 = vector.broadcast %58 : vector<1x32xf32> to vector<256x32xf32>
    %60 = arith.mulf %56, %59 : vector<256x32xf32>
    %61 = arith.addf %54, %60 : vector<256x32xf32>
    %c0_45 = arith.constant 0 : index
    %c0_46 = arith.constant 0 : index
    %62 = vector.load %arg3[%c0_45, %c0_46] : memref<1x32xf32, #tpu.memory_space<vmem>>, vector<1x32xf32>
    %63 = vector.broadcast %62 : vector<1x32xf32> to vector<256x32xf32>
    %64 = arith.addf %61, %63 : vector<256x32xf32>
    %cst = arith.constant 0.000000e+00 : f32
    %65 = vector.broadcast %cst : f32 to vector<256x32xf32>
    %66 = arith.maximumf %64, %65 : vector<256x32xf32>
    %67 = arith.truncf %66 : vector<256x32xf32> to vector<256x32xbf16>
    %c0_47 = arith.constant 0 : index
    %c0_48 = arith.constant 0 : index
    %68 = vector.load %arg4[%c0_47, %c0_48] : memref<32x48xbf16, #tpu.memory_space<vmem>>, vector<32x48xbf16>
    %cst_49 = arith.constant dense<0.000000e+00> : vector<256x48xf32>
    %69 = tpu.matmul %67, %68, %cst_49 {dimension_numbers = #tpu.dot_dimension_numbers<[1], [0], [0], [1], [0, 0, 1, 1], [], []>} : vector<256x32xbf16>, vector<32x48xbf16>, vector<256x48xf32> -> vector<256x48xf32>
    %c0_50 = arith.constant 0 : index
    %c0_51 = arith.constant 0 : index
    %70 = vector.load %arg5[%c0_50, %c0_51] : memref<1x48xf32, #tpu.memory_space<vmem>>, vector<1x48xf32>
    %71 = vector.broadcast %70 : vector<1x48xf32> to vector<256x48xf32>
    %72 = arith.addf %69, %71 : vector<256x48xf32>
    %cst_52 = arith.constant 0.000000e+00 : f32
    %73 = vector.broadcast %cst_52 : f32 to vector<256x48xf32>
    %74 = arith.maximumf %72, %73 : vector<256x48xf32>
    %c0_53 = arith.constant 0 : index
    %c0_54 = arith.constant 0 : index
    %75 = vector.load %arg6[%c0_53, %c0_54] : memref<256x48xf32, #tpu.memory_space<vmem>>, vector<256x48xf32>
    tpu.vector_store %arg6[%c0_53, %c0_54], %74 {strides = array<i32>} : memref<256x48xf32, #tpu.memory_space<vmem>>, vector<256x48xf32>,
    return
  }
  func.func @transform_0(%arg0: i32) -> (i32, i32, i32) {
    %c0_i32 = arith.constant 0 : i32
    %c0_i32_0 = arith.constant 0 : i32
    %c0_i32_1 = arith.constant 0 : i32
    return %c0_i32, %arg0, %c0_i32_0 : i32, i32, i32
  }
  func.func @transform_1(%arg0: i32) -> (i32, i32, i32) {
    %c0_i32 = arith.constant 0 : i32
    %c0_i32_0 = arith.constant 0 : i32
    %c0_i32_1 = arith.constant 0 : i32
    %c0_i32_2 = arith.constant 0 : i32
    return %c0_i32, %c0_i32_0, %c0_i32_1 : i32, i32, i32
  }
  func.func @transform_2(%arg0: i32) -> (i32, i32) {
    %c0_i32 = arith.constant 0 : i32
    %c0_i32_0 = arith.constant 0 : i32
    %c0_i32_1 = arith.constant 0 : i32
    return %c0_i32, %c0_i32_0 : i32, i32
  }
  func.func @transform_3(%arg0: i32) -> (i32, i32) {
    %c0_i32 = arith.constant 0 : i32
    %c0_i32_0 = arith.constant 0 : i32
    %c0_i32_1 = arith.constant 0 : i32
    return %c0_i32, %c0_i32_0 : i32, i32
  }
  func.func @transform_4(%arg0: i32) -> (i32, i32) {
    %c0_i32 = arith.constant 0 : i32
    %c0_i32_0 = arith.constant 0 : i32
    %c0_i32_1 = arith.constant 0 : i32
    return %c0_i32, %c0_i32_0 : i32, i32
  }
  func.func @transform_5(%arg0: i32) -> (i32, i32) {
    %c0_i32 = arith.constant 0 : i32
    %c0_i32_0 = arith.constant 0 : i32
    return %arg0, %c0_i32 : i32, i32
  }
}

module attributes {stable_mosaic.version = 11 : i64} {
  func.func @_fused_dsconv_kernel(%arg0: i32, %arg1: memref<9x128x48xf32, #tpu.memory_space<vmem>>, %arg2: memref<9x1x48xf32, #tpu.memory_space<vmem>>, %arg3: memref<1x48xf32, #tpu.memory_space<vmem>>, %arg4: memref<48x64xbf16, #tpu.memory_space<vmem>>, %arg5: memref<1x64xf32, #tpu.memory_space<vmem>>, %arg6: memref<128x64xf32, #tpu.memory_space<vmem>>) attributes {dimension_semantics = [#tpu.dimension_semantics<parallel>], iteration_bounds = array<i64: 1>, scalar_prefetch = 0 : i64, scratch_operands = 0 : i64, tpu.core_type = #tpu.core_type<tc>, window_params = [{transform_indices = @transform_0, window_bounds = array<i64: 9, 128, 48>}, {pipeline_mode = #tpu.pipeline_mode<synchronous>, transform_indices = @transform_1, window_bounds = array<i64: 9, 1, 48>}, {pipeline_mode = #tpu.pipeline_mode<synchronous>, transform_indices = @transform_2, window_bounds = array<i64: 1, 48>}, {pipeline_mode = #tpu.pipeline_mode<synchronous>, transform_indices = @transform_3, window_bounds = array<i64: 48, 64>}, {pipeline_mode = #tpu.pipeline_mode<synchronous>, transform_indices = @transform_4, window_bounds = array<i64: 1, 64>}, {transform_indices = @transform_5, window_bounds = array<i64: 128, 64>}]} {
    %c0 = arith.constant 0 : index
    %c0_0 = arith.constant 0 : index
    %c0_1 = arith.constant 0 : index
    %0 = vector.load %arg1[%c0, %c0_0, %c0_1] : memref<9x128x48xf32, #tpu.memory_space<vmem>>, vector<1x128x48xf32>
    %1 = vector.shape_cast %0 : vector<1x128x48xf32> to vector<128x48xf32>
    %c0_2 = arith.constant 0 : index
    %c0_3 = arith.constant 0 : index
    %c0_4 = arith.constant 0 : index
    %2 = vector.load %arg2[%c0_2, %c0_3, %c0_4] : memref<9x1x48xf32, #tpu.memory_space<vmem>>, vector<1x1x48xf32>
    %3 = vector.shape_cast %2 : vector<1x1x48xf32> to vector<1x48xf32>
    %4 = vector.broadcast %3 : vector<1x48xf32> to vector<128x48xf32>
    %5 = arith.mulf %1, %4 : vector<128x48xf32>
    %c1 = arith.constant 1 : index
    %c0_5 = arith.constant 0 : index
    %c0_6 = arith.constant 0 : index
    %6 = vector.load %arg1[%c1, %c0_5, %c0_6] : memref<9x128x48xf32, #tpu.memory_space<vmem>>, vector<1x128x48xf32>
    %7 = vector.shape_cast %6 : vector<1x128x48xf32> to vector<128x48xf32>
    %c1_7 = arith.constant 1 : index
    %c0_8 = arith.constant 0 : index
    %c0_9 = arith.constant 0 : index
    %8 = vector.load %arg2[%c1_7, %c0_8, %c0_9] : memref<9x1x48xf32, #tpu.memory_space<vmem>>, vector<1x1x48xf32>
    %9 = vector.shape_cast %8 : vector<1x1x48xf32> to vector<1x48xf32>
    %10 = vector.broadcast %9 : vector<1x48xf32> to vector<128x48xf32>
    %11 = arith.mulf %7, %10 : vector<128x48xf32>
    %12 = arith.addf %5, %11 : vector<128x48xf32>
    %c2 = arith.constant 2 : index
    %c0_10 = arith.constant 0 : index
    %c0_11 = arith.constant 0 : index
    %13 = vector.load %arg1[%c2, %c0_10, %c0_11] : memref<9x128x48xf32, #tpu.memory_space<vmem>>, vector<1x128x48xf32>
    %14 = vector.shape_cast %13 : vector<1x128x48xf32> to vector<128x48xf32>
    %c2_12 = arith.constant 2 : index
    %c0_13 = arith.constant 0 : index
    %c0_14 = arith.constant 0 : index
    %15 = vector.load %arg2[%c2_12, %c0_13, %c0_14] : memref<9x1x48xf32, #tpu.memory_space<vmem>>, vector<1x1x48xf32>
    %16 = vector.shape_cast %15 : vector<1x1x48xf32> to vector<1x48xf32>
    %17 = vector.broadcast %16 : vector<1x48xf32> to vector<128x48xf32>
    %18 = arith.mulf %14, %17 : vector<128x48xf32>
    %19 = arith.addf %12, %18 : vector<128x48xf32>
    %c3 = arith.constant 3 : index
    %c0_15 = arith.constant 0 : index
    %c0_16 = arith.constant 0 : index
    %20 = vector.load %arg1[%c3, %c0_15, %c0_16] : memref<9x128x48xf32, #tpu.memory_space<vmem>>, vector<1x128x48xf32>
    %21 = vector.shape_cast %20 : vector<1x128x48xf32> to vector<128x48xf32>
    %c3_17 = arith.constant 3 : index
    %c0_18 = arith.constant 0 : index
    %c0_19 = arith.constant 0 : index
    %22 = vector.load %arg2[%c3_17, %c0_18, %c0_19] : memref<9x1x48xf32, #tpu.memory_space<vmem>>, vector<1x1x48xf32>
    %23 = vector.shape_cast %22 : vector<1x1x48xf32> to vector<1x48xf32>
    %24 = vector.broadcast %23 : vector<1x48xf32> to vector<128x48xf32>
    %25 = arith.mulf %21, %24 : vector<128x48xf32>
    %26 = arith.addf %19, %25 : vector<128x48xf32>
    %c4 = arith.constant 4 : index
    %c0_20 = arith.constant 0 : index
    %c0_21 = arith.constant 0 : index
    %27 = vector.load %arg1[%c4, %c0_20, %c0_21] : memref<9x128x48xf32, #tpu.memory_space<vmem>>, vector<1x128x48xf32>
    %28 = vector.shape_cast %27 : vector<1x128x48xf32> to vector<128x48xf32>
    %c4_22 = arith.constant 4 : index
    %c0_23 = arith.constant 0 : index
    %c0_24 = arith.constant 0 : index
    %29 = vector.load %arg2[%c4_22, %c0_23, %c0_24] : memref<9x1x48xf32, #tpu.memory_space<vmem>>, vector<1x1x48xf32>
    %30 = vector.shape_cast %29 : vector<1x1x48xf32> to vector<1x48xf32>
    %31 = vector.broadcast %30 : vector<1x48xf32> to vector<128x48xf32>
    %32 = arith.mulf %28, %31 : vector<128x48xf32>
    %33 = arith.addf %26, %32 : vector<128x48xf32>
    %c5 = arith.constant 5 : index
    %c0_25 = arith.constant 0 : index
    %c0_26 = arith.constant 0 : index
    %34 = vector.load %arg1[%c5, %c0_25, %c0_26] : memref<9x128x48xf32, #tpu.memory_space<vmem>>, vector<1x128x48xf32>
    %35 = vector.shape_cast %34 : vector<1x128x48xf32> to vector<128x48xf32>
    %c5_27 = arith.constant 5 : index
    %c0_28 = arith.constant 0 : index
    %c0_29 = arith.constant 0 : index
    %36 = vector.load %arg2[%c5_27, %c0_28, %c0_29] : memref<9x1x48xf32, #tpu.memory_space<vmem>>, vector<1x1x48xf32>
    %37 = vector.shape_cast %36 : vector<1x1x48xf32> to vector<1x48xf32>
    %38 = vector.broadcast %37 : vector<1x48xf32> to vector<128x48xf32>
    %39 = arith.mulf %35, %38 : vector<128x48xf32>
    %40 = arith.addf %33, %39 : vector<128x48xf32>
    %c6 = arith.constant 6 : index
    %c0_30 = arith.constant 0 : index
    %c0_31 = arith.constant 0 : index
    %41 = vector.load %arg1[%c6, %c0_30, %c0_31] : memref<9x128x48xf32, #tpu.memory_space<vmem>>, vector<1x128x48xf32>
    %42 = vector.shape_cast %41 : vector<1x128x48xf32> to vector<128x48xf32>
    %c6_32 = arith.constant 6 : index
    %c0_33 = arith.constant 0 : index
    %c0_34 = arith.constant 0 : index
    %43 = vector.load %arg2[%c6_32, %c0_33, %c0_34] : memref<9x1x48xf32, #tpu.memory_space<vmem>>, vector<1x1x48xf32>
    %44 = vector.shape_cast %43 : vector<1x1x48xf32> to vector<1x48xf32>
    %45 = vector.broadcast %44 : vector<1x48xf32> to vector<128x48xf32>
    %46 = arith.mulf %42, %45 : vector<128x48xf32>
    %47 = arith.addf %40, %46 : vector<128x48xf32>
    %c7 = arith.constant 7 : index
    %c0_35 = arith.constant 0 : index
    %c0_36 = arith.constant 0 : index
    %48 = vector.load %arg1[%c7, %c0_35, %c0_36] : memref<9x128x48xf32, #tpu.memory_space<vmem>>, vector<1x128x48xf32>
    %49 = vector.shape_cast %48 : vector<1x128x48xf32> to vector<128x48xf32>
    %c7_37 = arith.constant 7 : index
    %c0_38 = arith.constant 0 : index
    %c0_39 = arith.constant 0 : index
    %50 = vector.load %arg2[%c7_37, %c0_38, %c0_39] : memref<9x1x48xf32, #tpu.memory_space<vmem>>, vector<1x1x48xf32>
    %51 = vector.shape_cast %50 : vector<1x1x48xf32> to vector<1x48xf32>
    %52 = vector.broadcast %51 : vector<1x48xf32> to vector<128x48xf32>
    %53 = arith.mulf %49, %52 : vector<128x48xf32>
    %54 = arith.addf %47, %53 : vector<128x48xf32>
    %c8 = arith.constant 8 : index
    %c0_40 = arith.constant 0 : index
    %c0_41 = arith.constant 0 : index
    %55 = vector.load %arg1[%c8, %c0_40, %c0_41] : memref<9x128x48xf32, #tpu.memory_space<vmem>>, vector<1x128x48xf32>
    %56 = vector.shape_cast %55 : vector<1x128x48xf32> to vector<128x48xf32>
    %c8_42 = arith.constant 8 : index
    %c0_43 = arith.constant 0 : index
    %c0_44 = arith.constant 0 : index
    %57 = vector.load %arg2[%c8_42, %c0_43, %c0_44] : memref<9x1x48xf32, #tpu.memory_space<vmem>>, vector<1x1x48xf32>
    %58 = vector.shape_cast %57 : vector<1x1x48xf32> to vector<1x48xf32>
    %59 = vector.broadcast %58 : vector<1x48xf32> to vector<128x48xf32>
    %60 = arith.mulf %56, %59 : vector<128x48xf32>
    %61 = arith.addf %54, %60 : vector<128x48xf32>
    %c0_45 = arith.constant 0 : index
    %c0_46 = arith.constant 0 : index
    %62 = vector.load %arg3[%c0_45, %c0_46] : memref<1x48xf32, #tpu.memory_space<vmem>>, vector<1x48xf32>
    %63 = vector.broadcast %62 : vector<1x48xf32> to vector<128x48xf32>
    %64 = arith.addf %61, %63 : vector<128x48xf32>
    %cst = arith.constant 0.000000e+00 : f32
    %65 = vector.broadcast %cst : f32 to vector<128x48xf32>
    %66 = arith.maximumf %64, %65 : vector<128x48xf32>
    %67 = arith.truncf %66 : vector<128x48xf32> to vector<128x48xbf16>
    %c0_47 = arith.constant 0 : index
    %c0_48 = arith.constant 0 : index
    %68 = vector.load %arg4[%c0_47, %c0_48] : memref<48x64xbf16, #tpu.memory_space<vmem>>, vector<48x64xbf16>
    %cst_49 = arith.constant dense<0.000000e+00> : vector<128x64xf32>
    %69 = tpu.matmul %67, %68, %cst_49 {dimension_numbers = #tpu.dot_dimension_numbers<[1], [0], [0], [1], [0, 0, 1, 1], [], []>} : vector<128x48xbf16>, vector<48x64xbf16>, vector<128x64xf32> -> vector<128x64xf32>
    %c0_50 = arith.constant 0 : index
    %c0_51 = arith.constant 0 : index
    %70 = vector.load %arg5[%c0_50, %c0_51] : memref<1x64xf32, #tpu.memory_space<vmem>>, vector<1x64xf32>
    %71 = vector.broadcast %70 : vector<1x64xf32> to vector<128x64xf32>
    %72 = arith.addf %69, %71 : vector<128x64xf32>
    %cst_52 = arith.constant 0.000000e+00 : f32
    %73 = vector.broadcast %cst_52 : f32 to vector<128x64xf32>
    %74 = arith.maximumf %72, %73 : vector<128x64xf32>
    %c0_53 = arith.constant 0 : index
    %c0_54 = arith.constant 0 : index
    %75 = vector.load %arg6[%c0_53, %c0_54] : memref<128x64xf32, #tpu.memory_space<vmem>>, vector<128x64xf32>
    tpu.vector_store %arg6[%c0_53, %c0_54], %74 {strides = array<i32>} : memref<128x64xf32, #tpu.memory_space<vmem>>, vector<128x64xf32>,
    return
  }
  func.func @transform_0(%arg0: i32) -> (i32, i32, i32) {
    %c0_i32 = arith.constant 0 : i32
    %c0_i32_0 = arith.constant 0 : i32
    %c0_i32_1 = arith.constant 0 : i32
    return %c0_i32, %arg0, %c0_i32_0 : i32, i32, i32
  }
  func.func @transform_1(%arg0: i32) -> (i32, i32, i32) {
    %c0_i32 = arith.constant 0 : i32
    %c0_i32_0 = arith.constant 0 : i32
    %c0_i32_1 = arith.constant 0 : i32
    %c0_i32_2 = arith.constant 0 : i32
    return %c0_i32, %c0_i32_0, %c0_i32_1 : i32, i32, i32
  }
  func.func @transform_2(%arg0: i32) -> (i32, i32) {
    %c0_i32 = arith.constant 0 : i32
    %c0_i32_0 = arith.constant 0 : i32
    %c0_i32_1 = arith.constant 0 : i32
    return %c0_i32, %c0_i32_0 : i32, i32
  }
  func.func @transform_3(%arg0: i32) -> (i32, i32) {
    %c0_i32 = arith.constant 0 : i32
    %c0_i32_0 = arith.constant 0 : i32
    %c0_i32_1 = arith.constant 0 : i32
    return %c0_i32, %c0_i32_0 : i32, i32
  }
  func.func @transform_4(%arg0: i32) -> (i32, i32) {
    %c0_i32 = arith.constant 0 : i32
    %c0_i32_0 = arith.constant 0 : i32
    %c0_i32_1 = arith.constant 0 : i32
    return %c0_i32, %c0_i32_0 : i32, i32
  }
  func.func @transform_5(%arg0: i32) -> (i32, i32) {
    %c0_i32 = arith.constant 0 : i32
    %c0_i32_0 = arith.constant 0 : i32
    return %arg0, %c0_i32 : i32, i32
  }
}

</mosaic_0001>

<llo_original>
// kernel: learning_to_downsample.3
$region0: #{learning_to_downsample.3}
  #allocation0 [shape = 'u32[]', space=smem, size = 0x4, offset = 0x4, fixed_abs, tag = 'smem constant byte address 0x4 - core index']
  #allocation1 [shape = 'u32[144,128]{1,0:T(1,128)}', space=vmem, size = 0x12000, scoped, tag = 'internal scratch']
  %s0 = inlined_call_operand.vmem [shape: bf16[2048,32], index: 0, kind: input, shape index: {}]
  %s1 = inlined_call_operand.vmem [shape: bf16[32,32], index: 1, kind: input, shape index: {}]
  %s2 = inlined_call_operand.vmem [shape: f32[1,32], index: 2, kind: input, shape index: {}]
  %s3 = inlined_call_operand.vmem [shape: f32[2048,32], index: 3, kind: output, shape index: {}]
  %s4 = sld [smem:[#allocation0]]
  $region45: #{learning_to_downsample.3} parent=0
    _
  %s6 = ssub.s32 1, %s4
  %s7 = scalar_select 0, %s6, %s4
  loop: start=0, step=1, limit=6
  $region2: #{learning_to_downsample.3} parent=0 // loop_pre_header
    _
  $region3: #{learning_to_downsample.3} parent=0 // loop_header
    %s9 = sphi 0, %s13
    %p10 = scmp.ge.s32.totalorder %s9, 6
    %s19 = sphi 0, %s21
    %s22 = sphi 0, %s19
    %s23 = sphi 0, %s22
    %s39 = sphi 0, %s23
    %s43 = sphi 0, %s43
    %s45 = sphi 0, %s43
    %s46 = sphi 0, %s45
    %s60 = sphi 0, %s46
    %s64 = sphi 0, %s64
    %s66 = sphi 0, %s64
    %s67 = sphi 0, %s66
    %s81 = sphi 0, %s67
    %s87 = sphi 0, %s89
    %s90 = sphi 0, %s87
    %s91 = sphi 0, %s90
    %s107 = sphi 0, %s91
  $region4: #{learning_to_downsample.3} parent=0 // loop_header_branch
    %12 = sbr.rel (%p10) target = $region8
  $region5: #{learning_to_downsample.3} parent=0 // loop_body
    %s14 = ssub.s32 %s9, 1
    %s15 = ssub.s32 %s9, 2
    %s16 = sadd.s32 %s9, 1
    %s17 = ssub.s32 %s9, %s16
    %p18 = scmp.eq.s32.totalorder %s17, 0
    %s20 = sadd.s32 %s19, 1
    %s21 = scalar_select %p18, %s19, %s20
    %p24 = pneg %p18
    %p25 = scmp.eq.s32.totalorder %s9, 3
    %p26 = por %p24, %p25
    %p27 = scmp.ne.s32.totalorder %s19, %s22
    %p28 = scmp.eq.s32.totalorder %s9, 0
    %p29 = por %p27, %p28
    %p30 = scmp.ne.s32.totalorder %s19, %s22
    %p31 = scmp.eq.s32.totalorder %s14, 3
    %p32 = por %p30, %p31
    %p33 = scmp.ne.s32.totalorder %s22, %s23
    %p34 = scmp.eq.s32.totalorder %s14, 0
    %p35 = por %p33, %p34
    %p36 = scmp.ne.s32.totalorder %s22, %s23
    %p37 = scmp.eq.s32.totalorder %s15, 3
    %p38 = por %p36, %p37
    %p40 = scmp.ne.s32.totalorder %s23, %s39
    %p41 = scmp.eq.s32.totalorder %s15, 0
    %p42 = por %p40, %p41
    %s44 = sadd.s32 %s43, 1
    %p47 = scmp.eq.s32.totalorder %s9, 3
    %p48 = scmp.ne.s32.totalorder %s43, %s45
    %p49 = scmp.eq.s32.totalorder %s9, 0
    %p50 = por %p48, %p49
    %p51 = scmp.ne.s32.totalorder %s43, %s45
    %p52 = scmp.eq.s32.totalorder %s14, 3
    %p53 = por %p51, %p52
    %p54 = scmp.ne.s32.totalorder %s45, %s46
    %p55 = scmp.eq.s32.totalorder %s14, 0
    %p56 = por %p54, %p55
    %p57 = scmp.ne.s32.totalorder %s45, %s46
    %p58 = scmp.eq.s32.totalorder %s15, 3
    %p59 = por %p57, %p58
    %p61 = scmp.ne.s32.totalorder %s46, %s60
    %p62 = scmp.eq.s32.totalorder %s15, 0
    %p63 = por %p61, %p62
    %s65 = sadd.s32 %s64, 1
    %p68 = scmp.eq.s32.totalorder %s9, 3
    %p69 = scmp.ne.s32.totalorder %s64, %s66
    %p70 = scmp.eq.s32.totalorder %s9, 0
    %p71 = por %p69, %p70
    %p72 = scmp.ne.s32.totalorder %s64, %s66
    %p73 = scmp.eq.s32.totalorder %s14, 3
    %p74 = por %p72, %p73
    %p75 = scmp.ne.s32.totalorder %s66, %s67
    %p76 = scmp.eq.s32.totalorder %s14, 0
    %p77 = por %p75, %p76
    %p78 = scmp.ne.s32.totalorder %s66, %s67
    %p79 = scmp.eq.s32.totalorder %s15, 3
    %p80 = por %p78, %p79
    %p82 = scmp.ne.s32.totalorder %s67, %s81
    %p83 = scmp.eq.s32.totalorder %s15, 0
    %p84 = por %p82, %p83
    %s85 = ssub.s32 %s9, %s16
    %p86 = scmp.eq.s32.totalorder %s85, 0
    %s88 = sadd.s32 %s87, 1
    %s89 = scalar_select %p86, %s87, %s88
    %p92 = pneg %p86
    %p93 = scmp.eq.s32.totalorder %s9, 3
    %p94 = por %p92, %p93
    %p95 = scmp.ne.s32.totalorder %s87, %s90
    %p96 = scmp.eq.s32.totalorder %s9, 0
    %p97 = por %p95, %p96
    %p98 = scmp.ne.s32.totalorder %s87, %s90
    %p99 = scmp.eq.s32.totalorder %s14, 3
    %p100 = por %p98, %p99
    %p101 = scmp.ne.s32.totalorder %s90, %s91
    %p102 = scmp.eq.s32.totalorder %s14, 0
    %p103 = por %p101, %p102
    %p104 = scmp.ne.s32.totalorder %s90, %s91
    %p105 = scmp.eq.s32.totalorder %s15, 3
    %p106 = por %p104, %p105
    %p108 = scmp.ne.s32.totalorder %s91, %s107
    %p109 = scmp.eq.s32.totalorder %s15, 0
    %p110 = por %p108, %p109
    %p111 = scmp.le.s32.totalorder 1, %s9
    %p112 = scmp.lt.s32.totalorder %s9, 5
    %p113 = pnand %p111, %p112
    %p114 = pneg %p113
    // Predicated region
    $region9: #{learning_to_downsample.3} parent=5 // pred_check
      _
    $region10: #{learning_to_downsample.3} parent=5 // pred_check_branch
      %116 = sbr.rel (%p113) target = $region12
    $region11: #{learning_to_downsample.3} parent=5 // pred_region
      %s117 = ssub.s32 %s9, 1
      // Predicated region
      $region13: #{learning_to_downsample.3} parent=11 // pred_check
        %p118 = pneg %p56
      $region14: #{learning_to_downsample.3} parent=11 // pred_check_branch
        %120 = sbr.rel (%p118) target = $region16
      $region15: #{learning_to_downsample.3} parent=11 // pred_region
        _
      $region16: #{learning_to_downsample.3} parent=11 // pred_fallthru
        _
      // Predicated region
      $region17: #{learning_to_downsample.3} parent=11 // pred_check
        %p121 = pneg %p77
      $region18: #{learning_to_downsample.3} parent=11 // pred_check_branch
        %123 = sbr.rel (%p121) target = $region20
      $region19: #{learning_to_downsample.3} parent=11 // pred_region
        _
      $region20: #{learning_to_downsample.3} parent=11 // pred_fallthru
        _
    $region12: #{learning_to_downsample.3} parent=5 // pred_fallthru
      _
    %p124 = scmp.lt.s32.totalorder %s9, 4
    // Predicated region
    $region21: #{learning_to_downsample.3} parent=5 // pred_check
      %p125 = pneg %p124
    $region22: #{learning_to_downsample.3} parent=5 // pred_check_branch
      %127 = sbr.rel (%p125) target = $region24
    $region23: #{learning_to_downsample.3} parent=5 // pred_region
      // Predicated region
      $region25: #{learning_to_downsample.3} parent=23 // pred_check
        %p128 = pneg %p29
      $region26: #{learning_to_downsample.3} parent=23 // pred_check_branch
        %130 = sbr.rel (%p128) target = $region28
      $region27: #{learning_to_downsample.3} parent=23 // pred_region
        %s131 = smul.u32 64, %s9
        %p132 = scmp.lt.s32.totalorder %s131, 255
        %s133 = scalar_select %p132, %s131, 255
        %s134 = smul.addr %s133, 4
        %s135 = scalar_lea.vmem %s0, %s134
        %s136 = smul.u32 64, %s9
      $region28: #{learning_to_downsample.3} parent=23 // pred_fallthru
        _
    $region24: #{learning_to_downsample.3} parent=5 // pred_fallthru
      _
    %p137 = scmp.le.s32.totalorder 1, %s9
    %p138 = scmp.lt.s32.totalorder %s9, 5
    %p139 = pnand %p137, %p138
    %p140 = pneg %p139
    // Predicated region
    $region29: #{learning_to_downsample.3} parent=5 // pred_check
      _
    $region30: #{learning_to_downsample.3} parent=5 // pred_check_branch
      %142 = sbr.rel (%p139) target = $region32
    $region31: #{learning_to_downsample.3} parent=5 // pred_region
      %s143 = ssub.s32 %s9, 1
      %s144 = smul.u32 64, %s14
      %p145 = scmp.lt.s32.totalorder %s144, 255
      %s146 = scalar_select %p145, %s144, 255
      %s147 = smul.addr %s146, 4
      %s148 = scalar_lea.vmem %s0, %s147
      %p149 = pneg %p35
      %p150 = pneg %p32
      %p151 = pneg %p56
      %p152 = pneg %p53
      %p153 = pneg %p77
      %p154 = pneg %p74
      %p155 = pneg %p103
      %p156 = pneg %p100
      %s157 = smul.u32 64, %s14
      %p158 = scmp.lt.s32.totalorder %s157, 255
      %s159 = scalar_select %p158, %s157, 255
      %s160 = smul.addr %s159, 8
      %s161 = scalar_lea.vmem %s3, %s160
      %s162 = smul.u32 64, %s14
      %p163 = scmp.lt.s32.totalorder %s162, 255
      %s164 = scalar_select %p163, %s162, 255
      %s165 = smul.addr %s164, 4
      %s166 = scalar_lea.vmem %s0, %s165
      %s167 = smul.u32 64, %s14
      %s168 = smul.u32 64, %s14
      %p169 = scmp.lt.s32.totalorder %s168, 255
      %s170 = scalar_select %p169, %s168, 255
      %s171 = smul.addr %s170, 8
      %s172 = scalar_lea.vmem %s3, %s171
      %s173 = smul.u32 64, %s14
      %v175 = vld [vmem:[%s166] sm:$0xf]
      %v176 = vld [vmem:[%s166 + $0x4] sm:$0xf]
      %v177 = vld [vmem:[%s166 + $0x8] sm:$0xf]
      %v178 = vld [vmem:[%s166 + $0xc] sm:$0xf]
      %v179 = vld [vmem:[%s166 + $0x10] sm:$0xf]
      %v180 = vld [vmem:[%s166 + $0x14] sm:$0xf]
      %v181 = vld [vmem:[%s166 + $0x18] sm:$0xf]
      %v182 = vld [vmem:[%s166 + $0x1c] sm:$0xf]
      %v183 = vld [vmem:[%s166 + $0x20] sm:$0xf]
      %v184 = vld [vmem:[%s166 + $0x24] sm:$0xf]
      %v185 = vld [vmem:[%s166 + $0x28] sm:$0xf]
      %v186 = vld [vmem:[%s166 + $0x2c] sm:$0xf]
      %v187 = vld [vmem:[%s166 + $0x30] sm:$0xf]
      %v188 = vld [vmem:[%s166 + $0x34] sm:$0xf]
      %v189 = vld [vmem:[%s166 + $0x38] sm:$0xf]
      %v190 = vld [vmem:[%s166 + $0x3c] sm:$0xf]
      %v191 = vld [vmem:[%s166 + $0x40] sm:$0xf]
      %v192 = vld [vmem:[%s166 + $0x44] sm:$0xf]
      %v193 = vld [vmem:[%s166 + $0x48] sm:$0xf]
      %v194 = vld [vmem:[%s166 + $0x4c] sm:$0xf]
      %v195 = vld [vmem:[%s166 + $0x50] sm:$0xf]
      %v196 = vld [vmem:[%s166 + $0x54] sm:$0xf]
      %v197 = vld [vmem:[%s166 + $0x58] sm:$0xf]
      %v198 = vld [vmem:[%s166 + $0x5c] sm:$0xf]
      %v199 = vld [vmem:[%s166 + $0x60] sm:$0xf]
      %v200 = vld [vmem:[%s166 + $0x64] sm:$0xf]
      %v201 = vld [vmem:[%s166 + $0x68] sm:$0xf]
      %v202 = vld [vmem:[%s166 + $0x6c] sm:$0xf]
      %v203 = vld [vmem:[%s166 + $0x70] sm:$0xf]
      %v204 = vld [vmem:[%s166 + $0x74] sm:$0xf]
      %v205 = vld [vmem:[%s166 + $0x78] sm:$0xf]
      %v206 = vld [vmem:[%s166 + $0x7c] sm:$0xf]
      %v207 = vld [vmem:[%s166 + $0x80] sm:$0xf]
      %v208 = vld [vmem:[%s166 + $0x84] sm:$0xf]
      %v209 = vld [vmem:[%s166 + $0x88] sm:$0xf]
      %v210 = vld [vmem:[%s166 + $0x8c] sm:$0xf]
      %v211 = vld [vmem:[%s166 + $0x90] sm:$0xf]
      %v212 = vld [vmem:[%s166 + $0x94] sm:$0xf]
      %v213 = vld [vmem:[%s166 + $0x98] sm:$0xf]
      %v214 = vld [vmem:[%s166 + $0x9c] sm:$0xf]
      %v215 = vld [vmem:[%s166 + $0xa0] sm:$0xf]
      %v216 = vld [vmem:[%s166 + $0xa4] sm:$0xf]
      %v217 = vld [vmem:[%s166 + $0xa8] sm:$0xf]
      %v218 = vld [vmem:[%s166 + $0xac] sm:$0xf]
      %v219 = vld [vmem:[%s166 + $0xb0] sm:$0xf]
      %v220 = vld [vmem:[%s166 + $0xb4] sm:$0xf]
      %v221 = vld [vmem:[%s166 + $0xb8] sm:$0xf]
      %v222 = vld [vmem:[%s166 + $0xbc] sm:$0xf]
      %v223 = vld [vmem:[%s166 + $0xc0] sm:$0xf]
      %v224 = vld [vmem:[%s166 + $0xc4] sm:$0xf]
      %v225 = vld [vmem:[%s166 + $0xc8] sm:$0xf]
      %v226 = vld [vmem:[%s166 + $0xcc] sm:$0xf]
      %v227 = vld [vmem:[%s166 + $0xd0] sm:$0xf]
      %v228 = vld [vmem:[%s166 + $0xd4] sm:$0xf]
      %v229 = vld [vmem:[%s166 + $0xd8] sm:$0xf]
      %v230 = vld [vmem:[%s166 + $0xdc] sm:$0xf]
      %v231 = vld [vmem:[%s166 + $0xe0] sm:$0xf]
      %v232 = vld [vmem:[%s166 + $0xe4] sm:$0xf]
      %v233 = vld [vmem:[%s166 + $0xe8] sm:$0xf]
      %v234 = vld [vmem:[%s166 + $0xec] sm:$0xf]
      %v235 = vld [vmem:[%s166 + $0xf0] sm:$0xf]
      %v236 = vld [vmem:[%s166 + $0xf4] sm:$0xf]
      %v237 = vld [vmem:[%s166 + $0xf8] sm:$0xf]
      %v238 = vld [vmem:[%s166 + $0xfc] sm:$0xf]
      %v239 = vld [vmem:[%s1] sm:$0xf]
      %v240 = vld [vmem:[%s1 + $0x4] sm:$0xf]
      %v241 = vld [vmem:[%s1 + $0x8] sm:$0xf]
      %v242 = vld [vmem:[%s1 + $0xc] sm:$0xf]
      %v243 = vld [vmem:[%s2] sm:$0x1]
      %v245 = vlaneseq
      %v246 = vshrl.u32 %v245, 7
      %v247 = vsub.s32 0, %v246
      %v248 = vrot.slane %v243, %v247
      %v314 = vunpack.c.l.b16 %v175
      %v315 = vunpack.c.l.b16 %v176
      %v316 = vunpack.c.l.b16 %v177
      %v317 = vunpack.c.l.b16 %v178
      %v318 = vunpack.c.l.b16 %v179
      %v319 = vunpack.c.l.b16 %v180
      %v320 = vunpack.c.l.b16 %v181
      %v321 = vunpack.c.l.b16 %v182
      %v322 = vunpack.c.l.b16 %v183
      %v323 = vunpack.c.l.b16 %v184
      %v324 = vunpack.c.l.b16 %v185
      %v325 = vunpack.c.l.b16 %v186
      %v326 = vunpack.c.l.b16 %v187
      %v327 = vunpack.c.l.b16 %v188
      %v328 = vunpack.c.l.b16 %v189
      %v329 = vunpack.c.l.b16 %v190
      %v330 = vunpack.c.l.b16 %v191
      %v331 = vunpack.c.l.b16 %v192
      %v332 = vunpack.c.l.b16 %v193
      %v333 = vunpack.c.l.b16 %v194
      %v334 = vunpack.c.l.b16 %v195
      %v335 = vunpack.c.l.b16 %v196
      %v336 = vunpack.c.l.b16 %v197
      %v337 = vunpack.c.l.b16 %v198
      %v338 = vunpack.c.l.b16 %v199
      %v339 = vunpack.c.l.b16 %v200
      %v340 = vunpack.c.l.b16 %v201
      %v341 = vunpack.c.l.b16 %v202
      %v342 = vunpack.c.l.b16 %v203
      %v343 = vunpack.c.l.b16 %v204
      %v344 = vunpack.c.l.b16 %v205
      %v345 = vunpack.c.l.b16 %v206
      %v346 = vunpack.c.l.b16 %v207
      %v347 = vunpack.c.l.b16 %v208
      %v348 = vunpack.c.l.b16 %v209
      %v349 = vunpack.c.l.b16 %v210
      %v350 = vunpack.c.l.b16 %v211
      %v351 = vunpack.c.l.b16 %v212
      %v352 = vunpack.c.l.b16 %v213
      %v353 = vunpack.c.l.b16 %v214
      %v354 = vunpack.c.l.b16 %v215
      %v355 = vunpack.c.l.b16 %v216
      %v356 = vunpack.c.l.b16 %v217
      %v357 = vunpack.c.l.b16 %v218
      %v358 = vunpack.c.l.b16 %v219
      %v359 = vunpack.c.l.b16 %v220
      %v360 = vunpack.c.l.b16 %v221
      %v361 = vunpack.c.l.b16 %v222
      %v362 = vunpack.c.l.b16 %v223
      %v363 = vunpack.c.l.b16 %v224
      %v364 = vunpack.c.l.b16 %v225
      %v365 = vunpack.c.l.b16 %v226
      %v366 = vunpack.c.l.b16 %v227
      %v367 = vunpack.c.l.b16 %v228
      %v368 = vunpack.c.l.b16 %v229
      %v369 = vunpack.c.l.b16 %v230
      %v370 = vunpack.c.l.b16 %v231
      %v371 = vunpack.c.l.b16 %v232
      %v372 = vunpack.c.l.b16 %v233
      %v373 = vunpack.c.l.b16 %v234
      %v374 = vunpack.c.l.b16 %v235
      %v375 = vunpack.c.l.b16 %v236
      %v376 = vunpack.c.l.b16 %v237
      %v377 = vunpack.c.l.b16 %v238
      %v378 = vpack.c.b16 %v315, %v314
      %v379 = vpack.c.b16 %v317, %v316
      %v380 = vpack.c.b16 %v319, %v318
      %v381 = vpack.c.b16 %v321, %v320
      %v382 = vpack.c.b16 %v323, %v322
      %v383 = vpack.c.b16 %v325, %v324
      %v384 = vpack.c.b16 %v327, %v326
      %v385 = vpack.c.b16 %v329, %v328
      %v386 = vpack.c.b16 %v331, %v330
      %v387 = vpack.c.b16 %v333, %v332
      %v388 = vpack.c.b16 %v335, %v334
      %v389 = vpack.c.b16 %v337, %v336
      %v390 = vpack.c.b16 %v339, %v338
      %v391 = vpack.c.b16 %v341, %v340
      %v392 = vpack.c.b16 %v343, %v342
      %v393 = vpack.c.b16 %v345, %v344
      %v394 = vpack.c.b16 %v347, %v346
      %v395 = vpack.c.b16 %v349, %v348
      %v396 = vpack.c.b16 %v351, %v350
      %v397 = vpack.c.b16 %v353, %v352
      %v398 = vpack.c.b16 %v355, %v354
      %v399 = vpack.c.b16 %v357, %v356
      %v400 = vpack.c.b16 %v359, %v358
      %v401 = vpack.c.b16 %v361, %v360
      %v402 = vpack.c.b16 %v363, %v362
      %v403 = vpack.c.b16 %v365, %v364
      %v404 = vpack.c.b16 %v367, %v366
      %v405 = vpack.c.b16 %v369, %v368
      %v406 = vpack.c.b16 %v371, %v370
      %v407 = vpack.c.b16 %v373, %v372
      %v408 = vpack.c.b16 %v375, %v374
      %v409 = vpack.c.b16 %v377, %v376
      %v414 = vunpack.c.l.b16 %v239
      %v415 = vunpack.c.l.b16 %v240
      %v416 = vunpack.c.l.b16 %v241
      %v417 = vunpack.c.l.b16 %v242
      %v418 = vpack.c.b16 %v415, %v414
      %v419 = vpack.c.b16 %v417, %v416
      %vm422 = vcmask 261120
      %v424 = vsel %vm422, %v378, 0
      %v427 = vsel %vm422, %v379, 0
      %v430 = vsel %vm422, %v380, 0
      %v433 = vsel %vm422, %v381, 0
      %v436 = vsel %vm422, %v382, 0
      %v439 = vsel %vm422, %v383, 0
      %v442 = vsel %vm422, %v384, 0
      %v445 = vsel %vm422, %v385, 0
      %v448 = vsel %vm422, %v386, 0
      %v451 = vsel %vm422, %v387, 0
      %v454 = vsel %vm422, %v388, 0
      %v457 = vsel %vm422, %v389, 0
      %v460 = vsel %vm422, %v390, 0
      %v463 = vsel %vm422, %v391, 0
      %v466 = vsel %vm422, %v392, 0
      %v469 = vsel %vm422, %v393, 0
      %v472 = vsel %vm422, %v394, 0
      %v475 = vsel %vm422, %v395, 0
      %v478 = vsel %vm422, %v396, 0
      %v481 = vsel %vm422, %v397, 0
      %v484 = vsel %vm422, %v398, 0
      %v487 = vsel %vm422, %v399, 0
      %v490 = vsel %vm422, %v400, 0
      %v493 = vsel %vm422, %v401, 0
      %v496 = vsel %vm422, %v402, 0
      %v499 = vsel %vm422, %v403, 0
      %v502 = vsel %vm422, %v404, 0
      %v505 = vsel %vm422, %v405, 0
      %v508 = vsel %vm422, %v406, 0
      %v511 = vsel %vm422, %v407, 0
      %v514 = vsel %vm422, %v408, 0
      %v517 = vsel %vm422, %v409, 0
      %519 = vmatprep.subr.bf16.mxu0 0
      %520 = vmatpush1.bf16.msra.mxu0 0
      %521 = vmatprep.subr.bf16.mxu0 0
      %522 = vmatpush1.bf16.msra.mxu0 0
      %523 = vmatprep.subr.bf16.mxu0 0
      %524 = vmatpush1.bf16.msra.mxu0 0
      %525 = vmatprep.subr.bf16.mxu0 0
      %526 = vmatpush1.bf16.msra.mxu0 0
      %527 = vmatprep.subr.bf16.mxu0 0
      %528 = vmatpush1.bf16.msra.mxu0 0
      %529 = vmatprep.subr.bf16.mxu0 0
      %530 = vmatpush1.bf16.msra.mxu0 0
      %531 = vmatprep.subr.bf16.mxu0 0
      %532 = vmatpush1.bf16.msra.mxu0 %v419
      %533 = vmatprep.subr.bf16.mxu0 0
      %534 = vmatpush1.bf16.msra.mxu0 %v418
      %535 = vmatprep.subr.bf16.mxu0 0
      %536 = vmatpush2.bf16.msra.mxu0 0
      %537 = vmatprep.subr.bf16.mxu0 0
      %538 = vmatpush2.bf16.msra.mxu0 0
      %539 = vmatprep.subr.bf16.mxu0 0
      %540 = vmatpush2.bf16.msra.mxu0 0
      %541 = vmatprep.subr.bf16.mxu0 0
      %542 = vmatpush2.bf16.msra.mxu0 0
      %543 = vmatprep.subr.bf16.mxu0 0
      %544 = vmatpush2.bf16.msra.mxu0 0
      %545 = vmatprep.subr.bf16.mxu0 0
      %546 = vmatpush2.bf16.msra.mxu0 0
      %547 = vmatprep.subr.bf16.mxu0 0
      %548 = vmatpush2.bf16.msra.mxu0 0
      %549 = vmatprep.subr.bf16.mxu0 0
      %550 = vmatpush2.bf16.msra.mxu0 0
      %551 = vmatprep.mubr.bf16.mxu0 0
      %552 = vmatmul.mubr.bf16.gmra.mxu0 %v424
      %v553 = vpop.f32.mrf.mxu0
      %v554 = vadd.f32 %v248, %v553
      %v555 = vpop.f32.mrf.mxu0
      %v556 = vpop.f32.mrf.mxu0
      %v557 = vadd.f32 %v248, %v556
      %v558 = vpop.f32.mrf.mxu0
      %559 = vmatprep.mubr.bf16.mxu0 0
      %560 = vmatmul.mubr.bf16.gmra.mxu0 %v427
      %v561 = vpop.f32.mrf.mxu0
      %v562 = vadd.f32 %v248, %v561
      %v563 = vpop.f32.mrf.mxu0
      %v564 = vpop.f32.mrf.mxu0
      %v565 = vadd.f32 %v248, %v564
      %v566 = vpop.f32.mrf.mxu0
      %567 = vmatprep.mubr.bf16.mxu0 0
      %568 = vmatmul.mubr.bf16.gmra.mxu0 %v430
      %v569 = vpop.f32.mrf.mxu0
      %v570 = vadd.f32 %v248, %v569
      %v571 = vpop.f32.mrf.mxu0
      %v572 = vpop.f32.mrf.mxu0
      %v573 = vadd.f32 %v248, %v572
      %v574 = vpop.f32.mrf.mxu0
      %575 = vmatprep.mubr.bf16.mxu0 0
      %576 = vmatmul.mubr.bf16.gmra.mxu0 %v433
      %v577 = vpop.f32.mrf.mxu0
      %v578 = vadd.f32 %v248, %v577
      %v579 = vpop.f32.mrf.mxu0
      %v580 = vpop.f32.mrf.mxu0
      %v581 = vadd.f32 %v248, %v580
      %v582 = vpop.f32.mrf.mxu0
      %583 = vmatprep.mubr.bf16.mxu0 0
      %584 = vmatmul.mubr.bf16.gmra.mxu0 %v436
      %v585 = vpop.f32.mrf.mxu0
      %v586 = vadd.f32 %v248, %v585
      %v587 = vpop.f32.mrf.mxu0
      %v588 = vpop.f32.mrf.mxu0
      %v589 = vadd.f32 %v248, %v588
      %v590 = vpop.f32.mrf.mxu0
      %591 = vmatprep.mubr.bf16.mxu0 0
      %592 = vmatmul.mubr.bf16.gmra.mxu0 %v439
      %v593 = vpop.f32.mrf.mxu0
      %v594 = vadd.f32 %v248, %v593
      %v595 = vpop.f32.mrf.mxu0
      %v596 = vpop.f32.mrf.mxu0
      %v597 = vadd.f32 %v248, %v596
      %v598 = vpop.f32.mrf.mxu0
      %599 = vmatprep.mubr.bf16.mxu0 0
      %600 = vmatmul.mubr.bf16.gmra.mxu0 %v442
      %v601 = vpop.f32.mrf.mxu0
      %v602 = vadd.f32 %v248, %v601
      %v603 = vpop.f32.mrf.mxu0
      %v604 = vpop.f32.mrf.mxu0
      %v605 = vadd.f32 %v248, %v604
      %v606 = vpop.f32.mrf.mxu0
      %607 = vmatprep.mubr.bf16.mxu0 0
      %608 = vmatmul.mubr.bf16.gmra.mxu0 %v445
      %v609 = vpop.f32.mrf.mxu0
      %v610 = vadd.f32 %v248, %v609
      %v611 = vpop.f32.mrf.mxu0
      %v612 = vpop.f32.mrf.mxu0
      %v613 = vadd.f32 %v248, %v612
      %v614 = vpop.f32.mrf.mxu0
      %615 = vmatprep.mubr.bf16.mxu0 0
      %616 = vmatmul.mubr.bf16.gmra.mxu0 %v448
      %v617 = vpop.f32.mrf.mxu0
      %v618 = vadd.f32 %v248, %v617
      %v619 = vpop.f32.mrf.mxu0
      %v620 = vpop.f32.mrf.mxu0
      %v621 = vadd.f32 %v248, %v620
      %v622 = vpop.f32.mrf.mxu0
      %623 = vmatprep.mubr.bf16.mxu0 0
      %624 = vmatmul.mubr.bf16.gmra.mxu0 %v451
      %v625 = vpop.f32.mrf.mxu0
      %v626 = vadd.f32 %v248, %v625
      %v627 = vpop.f32.mrf.mxu0
      %v628 = vpop.f32.mrf.mxu0
      %v629 = vadd.f32 %v248, %v628
      %v630 = vpop.f32.mrf.mxu0
      %631 = vmatprep.mubr.bf16.mxu0 0
      %632 = vmatmul.mubr.bf16.gmra.mxu0 %v454
      %v633 = vpop.f32.mrf.mxu0
      %v634 = vadd.f32 %v248, %v633
      %v635 = vpop.f32.mrf.mxu0
      %v636 = vpop.f32.mrf.mxu0
      %v637 = vadd.f32 %v248, %v636
      %v638 = vpop.f32.mrf.mxu0
      %639 = vmatprep.mubr.bf16.mxu0 0
      %640 = vmatmul.mubr.bf16.gmra.mxu0 %v457
      %v641 = vpop.f32.mrf.mxu0
      %v642 = vadd.f32 %v248, %v641
      %v643 = vpop.f32.mrf.mxu0
      %v644 = vpop.f32.mrf.mxu0
      %v645 = vadd.f32 %v248, %v644
      %v646 = vpop.f32.mrf.mxu0
      %647 = vmatprep.mubr.bf16.mxu0 0
      %648 = vmatmul.mubr.bf16.gmra.mxu0 %v460
      %v649 = vpop.f32.mrf.mxu0
      %v650 = vadd.f32 %v248, %v649
      %v651 = vpop.f32.mrf.mxu0
      %v652 = vpop.f32.mrf.mxu0
      %v653 = vadd.f32 %v248, %v652
      %v654 = vpop.f32.mrf.mxu0
      %655 = vmatprep.mubr.bf16.mxu0 0
      %656 = vmatmul.mubr.bf16.gmra.mxu0 %v463
      %v657 = vpop.f32.mrf.mxu0
      %v658 = vadd.f32 %v248, %v657
      %v659 = vpop.f32.mrf.mxu0
      %v660 = vpop.f32.mrf.mxu0
      %v661 = vadd.f32 %v248, %v660
      %v662 = vpop.f32.mrf.mxu0
      %663 = vmatprep.mubr.bf16.mxu0 0
      %664 = vmatmul.mubr.bf16.gmra.mxu0 %v466
      %v665 = vpop.f32.mrf.mxu0
      %v666 = vadd.f32 %v248, %v665
      %v667 = vpop.f32.mrf.mxu0
      %v668 = vpop.f32.mrf.mxu0
      %v669 = vadd.f32 %v248, %v668
      %v670 = vpop.f32.mrf.mxu0
      %671 = vmatprep.mubr.bf16.mxu0 0
      %672 = vmatmul.mubr.bf16.gmra.mxu0 %v469
      %v673 = vpop.f32.mrf.mxu0
      %v674 = vadd.f32 %v248, %v673
      %v675 = vpop.f32.mrf.mxu0
      %v676 = vpop.f32.mrf.mxu0
      %v677 = vadd.f32 %v248, %v676
      %v678 = vpop.f32.mrf.mxu0
      %679 = vmatprep.mubr.bf16.mxu0 0
      %680 = vmatmul.mubr.bf16.gmra.mxu0 %v472
      %v681 = vpop.f32.mrf.mxu0
      %v682 = vadd.f32 %v248, %v681
      %v683 = vpop.f32.mrf.mxu0
      %v684 = vpop.f32.mrf.mxu0
      %v685 = vadd.f32 %v248, %v684
      %v686 = vpop.f32.mrf.mxu0
      %687 = vmatprep.mubr.bf16.mxu0 0
      %688 = vmatmul.mubr.bf16.gmra.mxu0 %v475
      %v689 = vpop.f32.mrf.mxu0
      %v690 = vadd.f32 %v248, %v689
      %v691 = vpop.f32.mrf.mxu0
      %v692 = vpop.f32.mrf.mxu0
      %v693 = vadd.f32 %v248, %v692
      %v694 = vpop.f32.mrf.mxu0
      %695 = vmatprep.mubr.bf16.mxu0 0
      %696 = vmatmul.mubr.bf16.gmra.mxu0 %v478
      %v697 = vpop.f32.mrf.mxu0
      %v698 = vadd.f32 %v248, %v697
      %v699 = vpop.f32.mrf.mxu0
      %v700 = vpop.f32.mrf.mxu0
      %v701 = vadd.f32 %v248, %v700
      %v702 = vpop.f32.mrf.mxu0
      %703 = vmatprep.mubr.bf16.mxu0 0
      %704 = vmatmul.mubr.bf16.gmra.mxu0 %v481
      %v705 = vpop.f32.mrf.mxu0
      %v706 = vadd.f32 %v248, %v705
      %v707 = vpop.f32.mrf.mxu0
      %v708 = vpop.f32.mrf.mxu0
      %v709 = vadd.f32 %v248, %v708
      %v710 = vpop.f32.mrf.mxu0
      %711 = vmatprep.mubr.bf16.mxu0 0
      %712 = vmatmul.mubr.bf16.gmra.mxu0 %v484
      %v713 = vpop.f32.mrf.mxu0
      %v714 = vadd.f32 %v248, %v713
      %v715 = vpop.f32.mrf.mxu0
      %v716 = vpop.f32.mrf.mxu0
      %v717 = vadd.f32 %v248, %v716
      %v718 = vpop.f32.mrf.mxu0
      %719 = vmatprep.mubr.bf16.mxu0 0
      %720 = vmatmul.mubr.bf16.gmra.mxu0 %v487
      %v721 = vpop.f32.mrf.mxu0
      %v722 = vadd.f32 %v248, %v721
      %v723 = vpop.f32.mrf.mxu0
      %v724 = vpop.f32.mrf.mxu0
      %v725 = vadd.f32 %v248, %v724
      %v726 = vpop.f32.mrf.mxu0
      %727 = vmatprep.mubr.bf16.mxu0 0
      %728 = vmatmul.mubr.bf16.gmra.mxu0 %v490
      %v729 = vpop.f32.mrf.mxu0
      %v730 = vadd.f32 %v248, %v729
      %v731 = vpop.f32.mrf.mxu0
      %v732 = vpop.f32.mrf.mxu0
      %v733 = vadd.f32 %v248, %v732
      %v734 = vpop.f32.mrf.mxu0
      %735 = vmatprep.mubr.bf16.mxu0 0
      %736 = vmatmul.mubr.bf16.gmra.mxu0 %v493
      %v737 = vpop.f32.mrf.mxu0
      %v738 = vadd.f32 %v248, %v737
      %v739 = vpop.f32.mrf.mxu0
      %v740 = vpop.f32.mrf.mxu0
      %v741 = vadd.f32 %v248, %v740
      %v742 = vpop.f32.mrf.mxu0
      %743 = vmatprep.mubr.bf16.mxu0 0
      %744 = vmatmul.mubr.bf16.gmra.mxu0 %v496
      %v745 = vpop.f32.mrf.mxu0
      %v746 = vadd.f32 %v248, %v745
      %v747 = vpop.f32.mrf.mxu0
      %v748 = vpop.f32.mrf.mxu0
      %v749 = vadd.f32 %v248, %v748
      %v750 = vpop.f32.mrf.mxu0
      %751 = vmatprep.mubr.bf16.mxu0 0
      %752 = vmatmul.mubr.bf16.gmra.mxu0 %v499
      %v753 = vpop.f32.mrf.mxu0
      %v754 = vadd.f32 %v248, %v753
      %v755 = vpop.f32.mrf.mxu0
      %v756 = vpop.f32.mrf.mxu0
      %v757 = vadd.f32 %v248, %v756
      %v758 = vpop.f32.mrf.mxu0
      %759 = vmatprep.mubr.bf16.mxu0 0
      %760 = vmatmul.mubr.bf16.gmra.mxu0 %v502
      %v761 = vpop.f32.mrf.mxu0
      %v762 = vadd.f32 %v248, %v761
      %v763 = vpop.f32.mrf.mxu0
      %v764 = vpop.f32.mrf.mxu0
      %v765 = vadd.f32 %v248, %v764
      %v766 = vpop.f32.mrf.mxu0
      %767 = vmatprep.mubr.bf16.mxu0 0
      %768 = vmatmul.mubr.bf16.gmra.mxu0 %v505
      %v769 = vpop.f32.mrf.mxu0
      %v770 = vadd.f32 %v248, %v769
      %v771 = vpop.f32.mrf.mxu0
      %v772 = vpop.f32.mrf.mxu0
      %v773 = vadd.f32 %v248, %v772
      %v774 = vpop.f32.mrf.mxu0
      %775 = vmatprep.mubr.bf16.mxu0 0
      %776 = vmatmul.mubr.bf16.gmra.mxu0 %v508
      %v777 = vpop.f32.mrf.mxu0
      %v778 = vadd.f32 %v248, %v777
      %v779 = vpop.f32.mrf.mxu0
      %v780 = vpop.f32.mrf.mxu0
      %v781 = vadd.f32 %v248, %v780
      %v782 = vpop.f32.mrf.mxu0
      %783 = vmatprep.mubr.bf16.mxu0 0
      %784 = vmatmul.mubr.bf16.gmra.mxu0 %v511
      %v785 = vpop.f32.mrf.mxu0
      %v786 = vadd.f32 %v248, %v785
      %v787 = vpop.f32.mrf.mxu0
      %v788 = vpop.f32.mrf.mxu0
      %v789 = vadd.f32 %v248, %v788
      %v790 = vpop.f32.mrf.mxu0
      %791 = vmatprep.mubr.bf16.mxu0 0
      %792 = vmatmul.mubr.bf16.gmra.mxu0 %v514
      %v793 = vpop.f32.mrf.mxu0
      %v794 = vadd.f32 %v248, %v793
      %v795 = vpop.f32.mrf.mxu0
      %v796 = vpop.f32.mrf.mxu0
      %v797 = vadd.f32 %v248, %v796
      %v798 = vpop.f32.mrf.mxu0
      %799 = vmatprep.mubr.bf16.mxu0 0
      %800 = vmatmul.mubr.bf16.gmra.mxu0 %v517
      %v801 = vpop.f32.mrf.mxu0
      %v802 = vadd.f32 %v248, %v801
      %v803 = vpop.f32.mrf.mxu0
      %v804 = vpop.f32.mrf.mxu0
      %v805 = vadd.f32 %v248, %v804
      %v806 = vpop.f32.mrf.mxu0
      %807 = vdwg.mxu0
      %v808 = vmax.f32 %v554, 0.0
      %v809 = vmax.f32 %v557, 0.0
      %v810 = vmax.f32 %v562, 0.0
      %v811 = vmax.f32 %v565, 0.0
      %v812 = vmax.f32 %v570, 0.0
      %v813 = vmax.f32 %v573, 0.0
      %v814 = vmax.f32 %v578, 0.0
      %v815 = vmax.f32 %v581, 0.0
      %v816 = vmax.f32 %v586, 0.0
      %v817 = vmax.f32 %v589, 0.0
      %v818 = vmax.f32 %v594, 0.0
      %v819 = vmax.f32 %v597, 0.0
      %v820 = vmax.f32 %v602, 0.0
      %v821 = vmax.f32 %v605, 0.0
      %v822 = vmax.f32 %v610, 0.0
      %v823 = vmax.f32 %v613, 0.0
      %v824 = vmax.f32 %v618, 0.0
      %v825 = vmax.f32 %v621, 0.0
      %v826 = vmax.f32 %v626, 0.0
      %v827 = vmax.f32 %v629, 0.0
      %v828 = vmax.f32 %v634, 0.0
      %v829 = vmax.f32 %v637, 0.0
      %v830 = vmax.f32 %v642, 0.0
      %v831 = vmax.f32 %v645, 0.0
      %v832 = vmax.f32 %v650, 0.0
      %v833 = vmax.f32 %v653, 0.0
      %v834 = vmax.f32 %v658, 0.0
      %v835 = vmax.f32 %v661, 0.0
      %v836 = vmax.f32 %v666, 0.0
      %v837 = vmax.f32 %v669, 0.0
      %v838 = vmax.f32 %v674, 0.0
      %v839 = vmax.f32 %v677, 0.0
      %v840 = vmax.f32 %v682, 0.0
      %v841 = vmax.f32 %v685, 0.0
      %v842 = vmax.f32 %v690, 0.0
      %v843 = vmax.f32 %v693, 0.0
      %v844 = vmax.f32 %v698, 0.0
      %v845 = vmax.f32 %v701, 0.0
      %v846 = vmax.f32 %v706, 0.0
      %v847 = vmax.f32 %v709, 0.0
      %v848 = vmax.f32 %v714, 0.0
      %v849 = vmax.f32 %v717, 0.0
      %v850 = vmax.f32 %v722, 0.0
      %v851 = vmax.f32 %v725, 0.0
      %v852 = vmax.f32 %v730, 0.0
      %v853 = vmax.f32 %v733, 0.0
      %v854 = vmax.f32 %v738, 0.0
      %v855 = vmax.f32 %v741, 0.0
      %v856 = vmax.f32 %v746, 0.0
      %v857 = vmax.f32 %v749, 0.0
      %v858 = vmax.f32 %v754, 0.0
      %v859 = vmax.f32 %v757, 0.0
      %v860 = vmax.f32 %v762, 0.0
      %v861 = vmax.f32 %v765, 0.0
      %v862 = vmax.f32 %v770, 0.0
      %v863 = vmax.f32 %v773, 0.0
      %v864 = vmax.f32 %v778, 0.0
      %v865 = vmax.f32 %v781, 0.0
      %v866 = vmax.f32 %v786, 0.0
      %v867 = vmax.f32 %v789, 0.0
      %v868 = vmax.f32 %v794, 0.0
      %v869 = vmax.f32 %v797, 0.0
      %v870 = vmax.f32 %v802, 0.0
      %v871 = vmax.f32 %v805, 0.0
      %872 = vst.msk [vmem:[%s172] sm:$0xff] %vm422, %v808
      %873 = vst.msk [vmem:[%s172 + $0x8] sm:$0xff] %vm422, %v809
      %874 = vst.msk [vmem:[%s172 + $0x10] sm:$0xff] %vm422, %v810
      %875 = vst.msk [vmem:[%s172 + $0x18] sm:$0xff] %vm422, %v811
      %876 = vst.msk [vmem:[%s172 + $0x20] sm:$0xff] %vm422, %v812
      %877 = vst.msk [vmem:[%s172 + $0x28] sm:$0xff] %vm422, %v813
      %878 = vst.msk [vmem:[%s172 + $0x30] sm:$0xff] %vm422, %v814
      %879 = vst.msk [vmem:[%s172 + $0x38] sm:$0xff] %vm422, %v815
      %880 = vst.msk [vmem:[%s172 + $0x40] sm:$0xff] %vm422, %v816
      %881 = vst.msk [vmem:[%s172 + $0x48] sm:$0xff] %vm422, %v817
      %882 = vst.msk [vmem:[%s172 + $0x50] sm:$0xff] %vm422, %v818
      %883 = vst.msk [vmem:[%s172 + $0x58] sm:$0xff] %vm422, %v819
      %884 = vst.msk [vmem:[%s172 + $0x60] sm:$0xff] %vm422, %v820
      %885 = vst.msk [vmem:[%s172 + $0x68] sm:$0xff] %vm422, %v821
      %886 = vst.msk [vmem:[%s172 + $0x70] sm:$0xff] %vm422, %v822
      %887 = vst.msk [vmem:[%s172 + $0x78] sm:$0xff] %vm422, %v823
      %888 = vst.msk [vmem:[%s172 + $0x80] sm:$0xff] %vm422, %v824
      %889 = vst.msk [vmem:[%s172 + $0x88] sm:$0xff] %vm422, %v825
      %890 = vst.msk [vmem:[%s172 + $0x90] sm:$0xff] %vm422, %v826
      %891 = vst.msk [vmem:[%s172 + $0x98] sm:$0xff] %vm422, %v827
      %892 = vst.msk [vmem:[%s172 + $0xa0] sm:$0xff] %vm422, %v828
      %893 = vst.msk [vmem:[%s172 + $0xa8] sm:$0xff] %vm422, %v829
      %894 = vst.msk [vmem:[%s172 + $0xb0] sm:$0xff] %vm422, %v830
      %895 = vst.msk [vmem:[%s172 + $0xb8] sm:$0xff] %vm422, %v831
      %896 = vst.msk [vmem:[%s172 + $0xc0] sm:$0xff] %vm422, %v832
      %897 = vst.msk [vmem:[%s172 + $0xc8] sm:$0xff] %vm422, %v833
      %898 = vst.msk [vmem:[%s172 + $0xd0] sm:$0xff] %vm422, %v834
      %899 = vst.msk [vmem:[%s172 + $0xd8] sm:$0xff] %vm422, %v835
      %900 = vst.msk [vmem:[%s172 + $0xe0] sm:$0xff] %vm422, %v836
      %901 = vst.msk [vmem:[%s172 + $0xe8] sm:$0xff] %vm422, %v837
      %902 = vst.msk [vmem:[%s172 + $0xf0] sm:$0xff] %vm422, %v838
      %903 = vst.msk [vmem:[%s172 + $0xf8] sm:$0xff] %vm422, %v839
      %904 = vst.msk [vmem:[%s172 + $0x100] sm:$0xff] %vm422, %v840
      %905 = vst.msk [vmem:[%s172 + $0x108] sm:$0xff] %vm422, %v841
      %906 = vst.msk [vmem:[%s172 + $0x110] sm:$0xff] %vm422, %v842
      %907 = vst.msk [vmem:[%s172 + $0x118] sm:$0xff] %vm422, %v843
      %908 = vst.msk [vmem:[%s172 + $0x120] sm:$0xff] %vm422, %v844
      %909 = vst.msk [vmem:[%s172 + $0x128] sm:$0xff] %vm422, %v845
      %910 = vst.msk [vmem:[%s172 + $0x130] sm:$0xff] %vm422, %v846
      %911 = vst.msk [vmem:[%s172 + $0x138] sm:$0xff] %vm422, %v847
      %912 = vst.msk [vmem:[%s172 + $0x140] sm:$0xff] %vm422, %v848
      %913 = vst.msk [vmem:[%s172 + $0x148] sm:$0xff] %vm422, %v849
      %914 = vst.msk [vmem:[%s172 + $0x150] sm:$0xff] %vm422, %v850
      %915 = vst.msk [vmem:[%s172 + $0x158] sm:$0xff] %vm422, %v851
      %916 = vst.msk [vmem:[%s172 + $0x160] sm:$0xff] %vm422, %v852
      %917 = vst.msk [vmem:[%s172 + $0x168] sm:$0xff] %vm422, %v853
      %918 = vst.msk [vmem:[%s172 + $0x170] sm:$0xff] %vm422, %v854
      %919 = vst.msk [vmem:[%s172 + $0x178] sm:$0xff] %vm422, %v855
      %920 = vst.msk [vmem:[%s172 + $0x180] sm:$0xff] %vm422, %v856
      %921 = vst.msk [vmem:[%s172 + $0x188] sm:$0xff] %vm422, %v857
      %922 = vst.msk [vmem:[%s172 + $0x190] sm:$0xff] %vm422, %v858
      %923 = vst.msk [vmem:[%s172 + $0x198] sm:$0xff] %vm422, %v859
      %924 = vst.msk [vmem:[%s172 + $0x1a0] sm:$0xff] %vm422, %v860
      %925 = vst.msk [vmem:[%s172 + $0x1a8] sm:$0xff] %vm422, %v861
      %926 = vst.msk [vmem:[%s172 + $0x1b0] sm:$0xff] %vm422, %v862
      %927 = vst.msk [vmem:[%s172 + $0x1b8] sm:$0xff] %vm422, %v863
      %928 = vst.msk [vmem:[%s172 + $0x1c0] sm:$0xff] %vm422, %v864
      %929 = vst.msk [vmem:[%s172 + $0x1c8] sm:$0xff] %vm422, %v865
      %930 = vst.msk [vmem:[%s172 + $0x1d0] sm:$0xff] %vm422, %v866
      %931 = vst.msk [vmem:[%s172 + $0x1d8] sm:$0xff] %vm422, %v867
      %932 = vst.msk [vmem:[%s172 + $0x1e0] sm:$0xff] %vm422, %v868
      %933 = vst.msk [vmem:[%s172 + $0x1e8] sm:$0xff] %vm422, %v869
      %934 = vst.msk [vmem:[%s172 + $0x1f0] sm:$0xff] %vm422, %v870
      %935 = vst.msk [vmem:[%s172 + $0x1f8] sm:$0xff] %vm422, %v871
      %s936 = smul.u32 64, %s14
      %p937 = scmp.lt.s32.totalorder %s936, 255
      %s938 = scalar_select %p937, %s936, 255
      %s939 = smul.addr %s938, 8
      %s940 = scalar_lea.vmem %s3, %s939
      // Predicated region
      $region33: #{learning_to_downsample.3} parent=31 // pred_check
        %p941 = pneg %p100
      $region34: #{learning_to_downsample.3} parent=31 // pred_check_branch
        %943 = sbr.rel (%p941) target = $region36
      $region35: #{learning_to_downsample.3} parent=31 // pred_region
        %s944 = smul.u32 64, %s14
      $region36: #{learning_to_downsample.3} parent=31 // pred_fallthru
        _
    $region32: #{learning_to_downsample.3} parent=5 // pred_fallthru
      _
    %p945 = scmp.le.s32.totalorder 2, %s9
    // Predicated region
    $region37: #{learning_to_downsample.3} parent=5 // pred_check
      %p946 = pneg %p945
    $region38: #{learning_to_downsample.3} parent=5 // pred_check_branch
      %948 = sbr.rel (%p946) target = $region40
    $region39: #{learning_to_downsample.3} parent=5 // pred_region
      %s949 = ssub.s32 %s9, 2
      // Predicated region
      $region41: #{learning_to_downsample.3} parent=39 // pred_check
        %p950 = pneg %p106
      $region42: #{learning_to_downsample.3} parent=39 // pred_check_branch
        %952 = sbr.rel (%p950) target = $region44
      $region43: #{learning_to_downsample.3} parent=39 // pred_region
        %s953 = smul.u32 64, %s15
        %p954 = scmp.lt.s32.totalorder %s953, 255
        %s955 = scalar_select %p954, %s953, 255
        %s956 = smul.addr %s955, 8
        %s957 = scalar_lea.vmem %s3, %s956
      $region44: #{learning_to_downsample.3} parent=39 // pred_fallthru
        _
    $region40: #{learning_to_downsample.3} parent=5 // pred_fallthru
      _
  $region6: #{learning_to_downsample.3} parent=0 // loop_footer
    %s13 = sadd.s32 1, %s9
  $region7: #{learning_to_downsample.3} parent=0 // loop_footer_branch
    %8 = sbr.rel target = $region3
  $region8: #{learning_to_downsample.3} parent=0 // loop_exit
    _

// kernel: learning_to_downsample.4
$region0: #{learning_to_downsample.4}
  #allocation0 [shape = 'u32[]', space=smem, size = 0x4, offset = 0x4, fixed_abs, tag = 'smem constant byte address 0x4 - core index']
  #allocation1 [shape = 'u32[144,128]{1,0:T(1,128)}', space=vmem, size = 0x12000, scoped, tag = 'internal scratch']
  %s0 = inlined_call_operand.vmem [shape: f32[9,512,32], index: 0, kind: input, shape index: {}]
  %s1 = inlined_call_operand.vmem [shape: f32[9,1,32], index: 1, kind: input, shape index: {}]
  %s2 = inlined_call_operand.vmem [shape: f32[1,32], index: 2, kind: input, shape index: {}]
  %s3 = inlined_call_operand.vmem [shape: bf16[32,48], index: 3, kind: input, shape index: {}]
  %s4 = inlined_call_operand.vmem [shape: f32[1,48], index: 4, kind: input, shape index: {}]
  %s5 = inlined_call_operand.vmem [shape: f32[512,48], index: 5, kind: output, shape index: {}]
  %s6 = sld [smem:[#allocation0]]
  $region91: #{learning_to_downsample.4} parent=0
    _
  %s8 = ssub.s32 1, %s6
  %s9 = scalar_select 0, %s8, %s6
  $region1: #{learning_to_downsample.4} parent=0
    #allocation2 [shape = 'u8[2359296]{0}', space=vmem, size = 0x240000, scoped, tag = 'input window, operand 0']
    loop: start=0, step=1, limit=4
    $region2: #{learning_to_downsample.4} parent=1 // loop_pre_header
      _
    $region3: #{learning_to_downsample.4} parent=1 // loop_header
      %s11 = sphi 0, %s15
      %p12 = scmp.ge.s32.totalorder %s11, 4
      %s21 = sphi 0, %s23
      %s24 = sphi 0, %s21
      %s25 = sphi 0, %s24
      %s41 = sphi 0, %s25
      %s45 = sphi 0, %s45
      %s47 = sphi 0, %s45
      %s48 = sphi 0, %s47
      %s62 = sphi 0, %s48
      %s66 = sphi 0, %s66
      %s68 = sphi 0, %s66
      %s69 = sphi 0, %s68
      %s83 = sphi 0, %s69
      %s87 = sphi 0, %s87
      %s89 = sphi 0, %s87
      %s90 = sphi 0, %s89
      %s104 = sphi 0, %s90
      %s108 = sphi 0, %s108
      %s110 = sphi 0, %s108
      %s111 = sphi 0, %s110
      %s125 = sphi 0, %s111
      %s131 = sphi 0, %s133
      %s134 = sphi 0, %s131
      %s135 = sphi 0, %s134
      %s151 = sphi 0, %s135
    $region4: #{learning_to_downsample.4} parent=1 // loop_header_branch
      %14 = sbr.rel (%p12) target = $region8
    $region5: #{learning_to_downsample.4} parent=1 // loop_body
      %s16 = ssub.s32 %s11, 1
      %s17 = ssub.s32 %s11, 2
      %s18 = sadd.s32 %s11, 1
      %s19 = ssub.s32 %s11, %s18
      %p20 = scmp.eq.s32.totalorder %s19, 0
      %s22 = sadd.s32 %s21, 1
      %s23 = scalar_select %p20, %s21, %s22
      %p26 = pneg %p20
      %p27 = scmp.eq.s32.totalorder %s11, 1
      %p28 = por %p26, %p27
      %p29 = scmp.ne.s32.totalorder %s21, %s24
      %p30 = scmp.eq.s32.totalorder %s11, 0
      %p31 = por %p29, %p30
      %p32 = scmp.ne.s32.totalorder %s21, %s24
      %p33 = scmp.eq.s32.totalorder %s16, 1
      %p34 = por %p32, %p33
      %p35 = scmp.ne.s32.totalorder %s24, %s25
      %p36 = scmp.eq.s32.totalorder %s16, 0
      %p37 = por %p35, %p36
      %p38 = scmp.ne.s32.totalorder %s24, %s25
      %p39 = scmp.eq.s32.totalorder %s17, 1
      %p40 = por %p38, %p39
      %p42 = scmp.ne.s32.totalorder %s25, %s41
      %p43 = scmp.eq.s32.totalorder %s17, 0
      %p44 = por %p42, %p43
      %s46 = sadd.s32 %s45, 1
      %p49 = scmp.eq.s32.totalorder %s11, 1
      %p50 = scmp.ne.s32.totalorder %s45, %s47
      %p51 = scmp.eq.s32.totalorder %s11, 0
      %p52 = por %p50, %p51
      %p53 = scmp.ne.s32.totalorder %s45, %s47
      %p54 = scmp.eq.s32.totalorder %s16, 1
      %p55 = por %p53, %p54
      %p56 = scmp.ne.s32.totalorder %s47, %s48
      %p57 = scmp.eq.s32.totalorder %s16, 0
      %p58 = por %p56, %p57
      %p59 = scmp.ne.s32.totalorder %s47, %s48
      %p60 = scmp.eq.s32.totalorder %s17, 1
      %p61 = por %p59, %p60
      %p63 = scmp.ne.s32.totalorder %s48, %s62
      %p64 = scmp.eq.s32.totalorder %s17, 0
      %p65 = por %p63, %p64
      %s67 = sadd.s32 %s66, 1
      %p70 = scmp.eq.s32.totalorder %s11, 1
      %p71 = scmp.ne.s32.totalorder %s66, %s68
      %p72 = scmp.eq.s32.totalorder %s11, 0
      %p73 = por %p71, %p72
      %p74 = scmp.ne.s32.totalorder %s66, %s68
      %p75 = scmp.eq.s32.totalorder %s16, 1
      %p76 = por %p74, %p75
      %p77 = scmp.ne.s32.totalorder %s68, %s69
      %p78 = scmp.eq.s32.totalorder %s16, 0
      %p79 = por %p77, %p78
      %p80 = scmp.ne.s32.totalorder %s68, %s69
      %p81 = scmp.eq.s32.totalorder %s17, 1
      %p82 = por %p80, %p81
      %p84 = scmp.ne.s32.totalorder %s69, %s83
      %p85 = scmp.eq.s32.totalorder %s17, 0
      %p86 = por %p84, %p85
      %s88 = sadd.s32 %s87, 1
      %p91 = scmp.eq.s32.totalorder %s11, 1
      %p92 = scmp.ne.s32.totalorder %s87, %s89
      %p93 = scmp.eq.s32.totalorder %s11, 0
      %p94 = por %p92, %p93
      %p95 = scmp.ne.s32.totalorder %s87, %s89
      %p96 = scmp.eq.s32.totalorder %s16, 1
      %p97 = por %p95, %p96
      %p98 = scmp.ne.s32.totalorder %s89, %s90
      %p99 = scmp.eq.s32.totalorder %s16, 0
      %p100 = por %p98, %p99
      %p101 = scmp.ne.s32.totalorder %s89, %s90
      %p102 = scmp.eq.s32.totalorder %s17, 1
      %p103 = por %p101, %p102
      %p105 = scmp.ne.s32.totalorder %s90, %s104
      %p106 = scmp.eq.s32.totalorder %s17, 0
      %p107 = por %p105, %p106
      %s109 = sadd.s32 %s108, 1
      %p112 = scmp.eq.s32.totalorder %s11, 1
      %p113 = scmp.ne.s32.totalorder %s108, %s110
      %p114 = scmp.eq.s32.totalorder %s11, 0
      %p115 = por %p113, %p114
      %p116 = scmp.ne.s32.totalorder %s108, %s110
      %p117 = scmp.eq.s32.totalorder %s16, 1
      %p118 = por %p116, %p117
      %p119 = scmp.ne.s32.totalorder %s110, %s111
      %p120 = scmp.eq.s32.totalorder %s16, 0
      %p121 = por %p119, %p120
      %p122 = scmp.ne.s32.totalorder %s110, %s111
      %p123 = scmp.eq.s32.totalorder %s17, 1
      %p124 = por %p122, %p123
      %p126 = scmp.ne.s32.totalorder %s111, %s125
      %p127 = scmp.eq.s32.totalorder %s17, 0
      %p128 = por %p126, %p127
      %s129 = ssub.s32 %s11, %s18
      %p130 = scmp.eq.s32.totalorder %s129, 0
      %s132 = sadd.s32 %s131, 1
      %s133 = scalar_select %p130, %s131, %s132
      %p136 = pneg %p130
      %p137 = scmp.eq.s32.totalorder %s11, 1
      %p138 = por %p136, %p137
      %p139 = scmp.ne.s32.totalorder %s131, %s134
      %p140 = scmp.eq.s32.totalorder %s11, 0
      %p141 = por %p139, %p140
      %p142 = scmp.ne.s32.totalorder %s131, %s134
      %p143 = scmp.eq.s32.totalorder %s16, 1
      %p144 = por %p142, %p143
      %p145 = scmp.ne.s32.totalorder %s134, %s135
      %p146 = scmp.eq.s32.totalorder %s16, 0
      %p147 = por %p145, %p146
      %p148 = scmp.ne.s32.totalorder %s134, %s135
      %p149 = scmp.eq.s32.totalorder %s17, 1
      %p150 = por %p148, %p149
      %p152 = scmp.ne.s32.totalorder %s135, %s151
      %p153 = scmp.eq.s32.totalorder %s17, 0
      %p154 = por %p152, %p153
      %p155 = scmp.le.s32.totalorder 1, %s11
      %p156 = scmp.lt.s32.totalorder %s11, 3
      %p157 = pnand %p155, %p156
      %p158 = pneg %p157
      // Predicated region
      $region9: #{learning_to_downsample.4} parent=5 // pred_check
        _
      $region10: #{learning_to_downsample.4} parent=5 // pred_check_branch
        %160 = sbr.rel (%p157) target = $region12
      $region11: #{learning_to_downsample.4} parent=5 // pred_region
        %s161 = ssub.s32 %s11, 1
        // Predicated region
        $region13: #{learning_to_downsample.4} parent=11 // pred_check
          %p162 = pneg %p58
        $region14: #{learning_to_downsample.4} parent=11 // pred_check_branch
          %164 = sbr.rel (%p162) target = $region16
        $region15: #{learning_to_downsample.4} parent=11 // pred_region
          _
        $region16: #{learning_to_downsample.4} parent=11 // pred_fallthru
          _
        // Predicated region
        $region17: #{learning_to_downsample.4} parent=11 // pred_check
          %p165 = pneg %p79
        $region18: #{learning_to_downsample.4} parent=11 // pred_check_branch
          %167 = sbr.rel (%p165) target = $region20
        $region19: #{learning_to_downsample.4} parent=11 // pred_region
          _
        $region20: #{learning_to_downsample.4} parent=11 // pred_fallthru
          _
        // Predicated region
        $region21: #{learning_to_downsample.4} parent=11 // pred_check
          %p168 = pneg %p100
        $region22: #{learning_to_downsample.4} parent=11 // pred_check_branch
          %170 = sbr.rel (%p168) target = $region24
        $region23: #{learning_to_downsample.4} parent=11 // pred_region
          _
        $region24: #{learning_to_downsample.4} parent=11 // pred_fallthru
          _
        // Predicated region
        $region25: #{learning_to_downsample.4} parent=11 // pred_check
          %p171 = pneg %p121
        $region26: #{learning_to_downsample.4} parent=11 // pred_check_branch
          %173 = sbr.rel (%p171) target = $region28
        $region27: #{learning_to_downsample.4} parent=11 // pred_region
          _
        $region28: #{learning_to_downsample.4} parent=11 // pred_fallthru
          _
      $region12: #{learning_to_downsample.4} parent=5 // pred_fallthru
        _
      %p174 = scmp.lt.s32.totalorder %s11, 2
      // Predicated region
      $region29: #{learning_to_downsample.4} parent=5 // pred_check
        %p175 = pneg %p174
      $region30: #{learning_to_downsample.4} parent=5 // pred_check_branch
        %177 = sbr.rel (%p175) target = $region32
      $region31: #{learning_to_downsample.4} parent=5 // pred_region
        // Predicated region
        $region33: #{learning_to_downsample.4} parent=31 // pred_check
          %p178 = pneg %p31
        $region34: #{learning_to_downsample.4} parent=31 // pred_check_branch
          %180 = sbr.rel (%p178) target = $region36
        $region35: #{learning_to_downsample.4} parent=31 // pred_region
          %s181 = sand.u32 %s21, 1
          %s182 = sand.u32 %s21, 1
          %s183 = smul.addr %s182, 2304
          %s184 = scalar_lea.vmem [#allocation2], %s183
          %s185 = smul.u32 32, %s11
          %s186 = smul.addr %s185, 8
          %s187 = scalar_lea.vmem %s0, %s186
          // Predicated region
          $region37: #{learning_to_downsample.4} parent=35 // pred_check
            _
          $region38: #{learning_to_downsample.4} parent=35 // pred_check_branch
            %189 = sbr.rel (0) target = $region40
          $region39: #{learning_to_downsample.4} parent=35 // pred_region
            // Predicated region
            $region41: #{learning_to_downsample.4} parent=39 // pred_check
              _
            $region42: #{learning_to_downsample.4} parent=39 // pred_check_branch
              %191 = sbr.rel (0) target = $region44
            $region43: #{learning_to_downsample.4} parent=39 // pred_region
              // Predicated region
              $region56: #{learning_to_downsample.4} parent=43 // pred_check
                _
              $region57: #{learning_to_downsample.4} parent=43 // pred_check_branch
                %781 = sbr.rel (0) target = $region59
              $region58: #{learning_to_downsample.4} parent=43 // pred_region
                loop: start=0, step=1, limit=1
                $region60: #{learning_to_downsample.4} parent=58 // loop_pre_header
                  _
                $region61: #{learning_to_downsample.4} parent=58 // loop_header
                  %s783 = sphi 0, %s787
                  %p784 = scmp.ge.s32.totalorder %s783, 1
                  %s788 = sphi %s187, %s187
                  %s789 = sphi %s184, %s184
                $region62: #{learning_to_downsample.4} parent=58 // loop_header_branch
                  %786 = sbr.rel (%p784) target = $region66
                $region63: #{learning_to_downsample.4} parent=58 // loop_body
                  %v790 = vld [vmem:[%s788] sm:$0xff]
                  %791 = vst [vmem:[%s789] sm:$0xff] %v790
                  %v792 = vld [vmem:[%s788 + $0x8] sm:$0xff]
                  %793 = vst [vmem:[%s789 + $0x8] sm:$0xff] %v792
                  %v794 = vld [vmem:[%s788 + $0x10] sm:$0xff]
                  %795 = vst [vmem:[%s789 + $0x10] sm:$0xff] %v794
                  %v796 = vld [vmem:[%s788 + $0x18] sm:$0xff]
                  %797 = vst [vmem:[%s789 + $0x18] sm:$0xff] %v796
                  %v798 = vld [vmem:[%s788 + $0x20] sm:$0xff]
                  %799 = vst [vmem:[%s789 + $0x20] sm:$0xff] %v798
                  %v800 = vld [vmem:[%s788 + $0x28] sm:$0xff]
                  %801 = vst [vmem:[%s789 + $0x28] sm:$0xff] %v800
                  %v802 = vld [vmem:[%s788 + $0x30] sm:$0xff]
                  %803 = vst [vmem:[%s789 + $0x30] sm:$0xff] %v802
                  %v804 = vld [vmem:[%s788 + $0x38] sm:$0xff]
                  %805 = vst [vmem:[%s789 + $0x38] sm:$0xff] %v804
                  %v806 = vld [vmem:[%s788 + $0x40] sm:$0xff]
                  %807 = vst [vmem:[%s789 + $0x40] sm:$0xff] %v806
                  %v808 = vld [vmem:[%s788 + $0x48] sm:$0xff]
                  %809 = vst [vmem:[%s789 + $0x48] sm:$0xff] %v808
                  %v810 = vld [vmem:[%s788 + $0x50] sm:$0xff]
                  %811 = vst [vmem:[%s789 + $0x50] sm:$0xff] %v810
                  %v812 = vld [vmem:[%s788 + $0x58] sm:$0xff]
                  %813 = vst [vmem:[%s789 + $0x58] sm:$0xff] %v812
                  %v814 = vld [vmem:[%s788 + $0x60] sm:$0xff]
                  %815 = vst [vmem:[%s789 + $0x60] sm:$0xff] %v814
                  %v816 = vld [vmem:[%s788 + $0x68] sm:$0xff]
                  %817 = vst [vmem:[%s789 + $0x68] sm:$0xff] %v816
                  %v818 = vld [vmem:[%s788 + $0x70] sm:$0xff]
                  %819 = vst [vmem:[%s789 + $0x70] sm:$0xff] %v818
                  %v820 = vld [vmem:[%s788 + $0x78] sm:$0xff]
                  %821 = vst [vmem:[%s789 + $0x78] sm:$0xff] %v820
                  %v822 = vld [vmem:[%s788 + $0x80] sm:$0xff]
                  %823 = vst [vmem:[%s789 + $0x80] sm:$0xff] %v822
                  %v824 = vld [vmem:[%s788 + $0x88] sm:$0xff]
                  %825 = vst [vmem:[%s789 + $0x88] sm:$0xff] %v824
                  %v826 = vld [vmem:[%s788 + $0x90] sm:$0xff]
                  %827 = vst [vmem:[%s789 + $0x90] sm:$0xff] %v826
                  %v828 = vld [vmem:[%s788 + $0x98] sm:$0xff]
                  %829 = vst [vmem:[%s789 + $0x98] sm:$0xff] %v828
                  %v830 = vld [vmem:[%s788 + $0xa0] sm:$0xff]
                  %831 = vst [vmem:[%s789 + $0xa0] sm:$0xff] %v830
                  %v832 = vld [vmem:[%s788 + $0xa8] sm:$0xff]
                  %833 = vst [vmem:[%s789 + $0xa8] sm:$0xff] %v832
                  %v834 = vld [vmem:[%s788 + $0xb0] sm:$0xff]
                  %835 = vst [vmem:[%s789 + $0xb0] sm:$0xff] %v834
                  %v836 = vld [vmem:[%s788 + $0xb8] sm:$0xff]
                  %837 = vst [vmem:[%s789 + $0xb8] sm:$0xff] %v836
                  %v838 = vld [vmem:[%s788 + $0xc0] sm:$0xff]
                  %839 = vst [vmem:[%s789 + $0xc0] sm:$0xff] %v838
                  %v840 = vld [vmem:[%s788 + $0xc8] sm:$0xff]
                  %841 = vst [vmem:[%s789 + $0xc8] sm:$0xff] %v840
                  %v842 = vld [vmem:[%s788 + $0xd0] sm:$0xff]
                  %843 = vst [vmem:[%s789 + $0xd0] sm:$0xff] %v842
                  %v844 = vld [vmem:[%s788 + $0xd8] sm:$0xff]
                  %845 = vst [vmem:[%s789 + $0xd8] sm:$0xff] %v844
                  %v846 = vld [vmem:[%s788 + $0xe0] sm:$0xff]
                  %847 = vst [vmem:[%s789 + $0xe0] sm:$0xff] %v846
                  %v848 = vld [vmem:[%s788 + $0xe8] sm:$0xff]
                  %849 = vst [vmem:[%s789 + $0xe8] sm:$0xff] %v848
                  %v850 = vld [vmem:[%s788 + $0xf0] sm:$0xff]
                  %851 = vst [vmem:[%s789 + $0xf0] sm:$0xff] %v850
                  %v852 = vld [vmem:[%s788 + $0xf8] sm:$0xff]
                  %853 = vst [vmem:[%s789 + $0xf8] sm:$0xff] %v852
                  %v854 = vld [vmem:[%s788 + $0x200] sm:$0xff]
                  %855 = vst [vmem:[%s789 + $0x100] sm:$0xff] %v854
                  %v856 = vld [vmem:[%s788 + $0x208] sm:$0xff]
                  %857 = vst [vmem:[%s789 + $0x108] sm:$0xff] %v856
                  %v858 = vld [vmem:[%s788 + $0x210] sm:$0xff]
                  %859 = vst [vmem:[%s789 + $0x110] sm:$0xff] %v858
                  %v860 = vld [vmem:[%s788 + $0x218] sm:$0xff]
                  %861 = vst [vmem:[%s789 + $0x118] sm:$0xff] %v860
                  %v862 = vld [vmem:[%s788 + $0x220] sm:$0xff]
                  %863 = vst [vmem:[%s789 + $0x120] sm:$0xff] %v862
                  %v864 = vld [vmem:[%s788 + $0x228] sm:$0xff]
                  %865 = vst [vmem:[%s789 + $0x128] sm:$0xff] %v864
                  %v866 = vld [vmem:[%s788 + $0x230] sm:$0xff]
                  %867 = vst [vmem:[%s789 + $0x130] sm:$0xff] %v866
                  %v868 = vld [vmem:[%s788 + $0x238] sm:$0xff]
                  %869 = vst [vmem:[%s789 + $0x138] sm:$0xff] %v868
                  %v870 = vld [vmem:[%s788 + $0x240] sm:$0xff]
                  %871 = vst [vmem:[%s789 + $0x140] sm:$0xff] %v870
                  %v872 = vld [vmem:[%s788 + $0x248] sm:$0xff]
                  %873 = vst [vmem:[%s789 + $0x148] sm:$0xff] %v872
                  %v874 = vld [vmem:[%s788 + $0x250] sm:$0xff]
                  %875 = vst [vmem:[%s789 + $0x150] sm:$0xff] %v874
                  %v876 = vld [vmem:[%s788 + $0x258] sm:$0xff]
                  %877 = vst [vmem:[%s789 + $0x158] sm:$0xff] %v876
                  %v878 = vld [vmem:[%s788 + $0x260] sm:$0xff]
                  %879 = vst [vmem:[%s789 + $0x160] sm:$0xff] %v878
                  %v880 = vld [vmem:[%s788 + $0x268] sm:$0xff]
                  %881 = vst [vmem:[%s789 + $0x168] sm:$0xff] %v880
                  %v882 = vld [vmem:[%s788 + $0x270] sm:$0xff]
                  %883 = vst [vmem:[%s789 + $0x170] sm:$0xff] %v882
                  %v884 = vld [vmem:[%s788 + $0x278] sm:$0xff]
                  %885 = vst [vmem:[%s789 + $0x178] sm:$0xff] %v884
                  %v886 = vld [vmem:[%s788 + $0x280] sm:$0xff]
                  %887 = vst [vmem:[%s789 + $0x180] sm:$0xff] %v886
                  %v888 = vld [vmem:[%s788 + $0x288] sm:$0xff]
                  %889 = vst [vmem:[%s789 + $0x188] sm:$0xff] %v888
                  %v890 = vld [vmem:[%s788 + $0x290] sm:$0xff]
                  %891 = vst [vmem:[%s789 + $0x190] sm:$0xff] %v890
                  %v892 = vld [vmem:[%s788 + $0x298] sm:$0xff]
                  %893 = vst [vmem:[%s789 + $0x198] sm:$0xff] %v892
                  %v894 = vld [vmem:[%s788 + $0x2a0] sm:$0xff]
                  %895 = vst [vmem:[%s789 + $0x1a0] sm:$0xff] %v894
                  %v896 = vld [vmem:[%s788 + $0x2a8] sm:$0xff]
                  %897 = vst [vmem:[%s789 + $0x1a8] sm:$0xff] %v896
                  %v898 = vld [vmem:[%s788 + $0x2b0] sm:$0xff]
                  %899 = vst [vmem:[%s789 + $0x1b0] sm:$0xff] %v898
                  %v900 = vld [vmem:[%s788 + $0x2b8] sm:$0xff]
                  %901 = vst [vmem:[%s789 + $0x1b8] sm:$0xff] %v900
                  %v902 = vld [vmem:[%s788 + $0x2c0] sm:$0xff]
                  %903 = vst [vmem:[%s789 + $0x1c0] sm:$0xff] %v902
                  %v904 = vld [vmem:[%s788 + $0x2c8] sm:$0xff]
                  %905 = vst [vmem:[%s789 + $0x1c8] sm:$0xff] %v904
                  %v906 = vld [vmem:[%s788 + $0x2d0] sm:$0xff]
                  %907 = vst [vmem:[%s789 + $0x1d0] sm:$0xff] %v906
                  %v908 = vld [vmem:[%s788 + $0x2d8] sm:$0xff]
                  %909 = vst [vmem:[%s789 + $0x1d8] sm:$0xff] %v908
                  %v910 = vld [vmem:[%s788 + $0x2e0] sm:$0xff]
                  %911 = vst [vmem:[%s789 + $0x1e0] sm:$0xff] %v910
                  %v912 = vld [vmem:[%s788 + $0x2e8] sm:$0xff]
                  %913 = vst [vmem:[%s789 + $0x1e8] sm:$0xff] %v912
                  %v914 = vld [vmem:[%s788 + $0x2f0] sm:$0xff]
                  %915 = vst [vmem:[%s789 + $0x1f0] sm:$0xff] %v914
                  %v916 = vld [vmem:[%s788 + $0x2f8] sm:$0xff]
                  %917 = vst [vmem:[%s789 + $0x1f8] sm:$0xff] %v916
                  %v918 = vld [vmem:[%s788 + $0x400] sm:$0xff]
                  %919 = vst [vmem:[%s789 + $0x200] sm:$0xff] %v918
                  %v920 = vld [vmem:[%s788 + $0x408] sm:$0xff]
                  %921 = vst [vmem:[%s789 + $0x208] sm:$0xff] %v920
                  %v922 = vld [vmem:[%s788 + $0x410] sm:$0xff]
                  %923 = vst [vmem:[%s789 + $0x210] sm:$0xff] %v922
                  %v924 = vld [vmem:[%s788 + $0x418] sm:$0xff]
                  %925 = vst [vmem:[%s789 + $0x218] sm:$0xff] %v924
                  %v926 = vld [vmem:[%s788 + $0x420] sm:$0xff]
                  %927 = vst [vmem:[%s789 + $0x220] sm:$0xff] %v926
                  %v928 = vld [vmem:[%s788 + $0x428] sm:$0xff]
                  %929 = vst [vmem:[%s789 + $0x228] sm:$0xff] %v928
                  %v930 = vld [vmem:[%s788 + $0x430] sm:$0xff]
                  %931 = vst [vmem:[%s789 + $0x230] sm:$0xff] %v930
                  %v932 = vld [vmem:[%s788 + $0x438] sm:$0xff]
                  %933 = vst [vmem:[%s789 + $0x238] sm:$0xff] %v932
                  %v934 = vld [vmem:[%s788 + $0x440] sm:$0xff]
                  %935 = vst [vmem:[%s789 + $0x240] sm:$0xff] %v934
                  %v936 = vld [vmem:[%s788 + $0x448] sm:$0xff]
                  %937 = vst [vmem:[%s789 + $0x248] sm:$0xff] %v936
                  %v938 = vld [vmem:[%s788 + $0x450] sm:$0xff]
                  %939 = vst [vmem:[%s789 + $0x250] sm:$0xff] %v938
                  %v940 = vld [vmem:[%s788 + $0x458] sm:$0xff]
                  %941 = vst [vmem:[%s789 + $0x258] sm:$0xff] %v940
                  %v942 = vld [vmem:[%s788 + $0x460] sm:$0xff]
                  %943 = vst [vmem:[%s789 + $0x260] sm:$0xff] %v942
                  %v944 = vld [vmem:[%s788 + $0x468] sm:$0xff]
                  %945 = vst [vmem:[%s789 + $0x268] sm:$0xff] %v944
                  %v946 = vld [vmem:[%s788 + $0x470] sm:$0xff]
                  %947 = vst [vmem:[%s789 + $0x270] sm:$0xff] %v946
                  %v948 = vld [vmem:[%s788 + $0x478] sm:$0xff]
                  %949 = vst [vmem:[%s789 + $0x278] sm:$0xff] %v948
                  %v950 = vld [vmem:[%s788 + $0x480] sm:$0xff]
                  %951 = vst [vmem:[%s789 + $0x280] sm:$0xff] %v950
                  %v952 = vld [vmem:[%s788 + $0x488] sm:$0xff]
                  %953 = vst [vmem:[%s789 + $0x288] sm:$0xff] %v952
                  %v954 = vld [vmem:[%s788 + $0x490] sm:$0xff]
                  %955 = vst [vmem:[%s789 + $0x290] sm:$0xff] %v954
                  %v956 = vld [vmem:[%s788 + $0x498] sm:$0xff]
                  %957 = vst [vmem:[%s789 + $0x298] sm:$0xff] %v956
                  %v958 = vld [vmem:[%s788 + $0x4a0] sm:$0xff]
                  %959 = vst [vmem:[%s789 + $0x2a0] sm:$0xff] %v958
                  %v960 = vld [vmem:[%s788 + $0x4a8] sm:$0xff]
                  %961 = vst [vmem:[%s789 + $0x2a8] sm:$0xff] %v960
                  %v962 = vld [vmem:[%s788 + $0x4b0] sm:$0xff]
                  %963 = vst [vmem:[%s789 + $0x2b0] sm:$0xff] %v962
                  %v964 = vld [vmem:[%s788 + $0x4b8] sm:$0xff]
                  %965 = vst [vmem:[%s789 + $0x2b8] sm:$0xff] %v964
                  %v966 = vld [vmem:[%s788 + $0x4c0] sm:$0xff]
                  %967 = vst [vmem:[%s789 + $0x2c0] sm:$0xff] %v966
                  %v968 = vld [vmem:[%s788 + $0x4c8] sm:$0xff]
                  %969 = vst [vmem:[%s789 + $0x2c8] sm:$0xff] %v968
                  %v970 = vld [vmem:[%s788 + $0x4d0] sm:$0xff]
                  %971 = vst [vmem:[%s789 + $0x2d0] sm:$0xff] %v970
                  %v972 = vld [vmem:[%s788 + $0x4d8] sm:$0xff]
                  %973 = vst [vmem:[%s789 + $0x2d8] sm:$0xff] %v972
                  %v974 = vld [vmem:[%s788 + $0x4e0] sm:$0xff]
                  %975 = vst [vmem:[%s789 + $0x2e0] sm:$0xff] %v974
                  %v976 = vld [vmem:[%s788 + $0x4e8] sm:$0xff]
                  %977 = vst [vmem:[%s789 + $0x2e8] sm:$0xff] %v976
                  %v978 = vld [vmem:[%s788 + $0x4f0] sm:$0xff]
                  %979 = vst [vmem:[%s789 + $0x2f0] sm:$0xff] %v978
                  %v980 = vld [vmem:[%s788 + $0x4f8] sm:$0xff]
                  %981 = vst [vmem:[%s789 + $0x2f8] sm:$0xff] %v980
                  %v982 = vld [vmem:[%s788 + $0x600] sm:$0xff]
                  %983 = vst [vmem:[%s789 + $0x300] sm:$0xff] %v982
                  %v984 = vld [vmem:[%s788 + $0x608] sm:$0xff]
                  %985 = vst [vmem:[%s789 + $0x308] sm:$0xff] %v984
                  %v986 = vld [vmem:[%s788 + $0x610] sm:$0xff]
                  %987 = vst [vmem:[%s789 + $0x310] sm:$0xff] %v986
                  %v988 = vld [vmem:[%s788 + $0x618] sm:$0xff]
                  %989 = vst [vmem:[%s789 + $0x318] sm:$0xff] %v988
                  %v990 = vld [vmem:[%s788 + $0x620] sm:$0xff]
                  %991 = vst [vmem:[%s789 + $0x320] sm:$0xff] %v990
                  %v992 = vld [vmem:[%s788 + $0x628] sm:$0xff]
                  %993 = vst [vmem:[%s789 + $0x328] sm:$0xff] %v992
                  %v994 = vld [vmem:[%s788 + $0x630] sm:$0xff]
                  %995 = vst [vmem:[%s789 + $0x330] sm:$0xff] %v994
                  %v996 = vld [vmem:[%s788 + $0x638] sm:$0xff]
                  %997 = vst [vmem:[%s789 + $0x338] sm:$0xff] %v996
                  %v998 = vld [vmem:[%s788 + $0x640] sm:$0xff]
                  %999 = vst [vmem:[%s789 + $0x340] sm:$0xff] %v998
                  %v1000 = vld [vmem:[%s788 + $0x648] sm:$0xff]
                  %1001 = vst [vmem:[%s789 + $0x348] sm:$0xff] %v1000
                  %v1002 = vld [vmem:[%s788 + $0x650] sm:$0xff]
                  %1003 = vst [vmem:[%s789 + $0x350] sm:$0xff] %v1002
                  %v1004 = vld [vmem:[%s788 + $0x658] sm:$0xff]
                  %1005 = vst [vmem:[%s789 + $0x358] sm:$0xff] %v1004
                  %v1006 = vld [vmem:[%s788 + $0x660] sm:$0xff]
                  %1007 = vst [vmem:[%s789 + $0x360] sm:$0xff] %v1006
                  %v1008 = vld [vmem:[%s788 + $0x668] sm:$0xff]
                  %1009 = vst [vmem:[%s789 + $0x368] sm:$0xff] %v1008
                  %v1010 = vld [vmem:[%s788 + $0x670] sm:$0xff]
                  %1011 = vst [vmem:[%s789 + $0x370] sm:$0xff] %v1010
                  %v1012 = vld [vmem:[%s788 + $0x678] sm:$0xff]
                  %1013 = vst [vmem:[%s789 + $0x378] sm:$0xff] %v1012
                  %v1014 = vld [vmem:[%s788 + $0x680] sm:$0xff]
                  %1015 = vst [vmem:[%s789 + $0x380] sm:$0xff] %v1014
                  %v1016 = vld [vmem:[%s788 + $0x688] sm:$0xff]
                  %1017 = vst [vmem:[%s789 + $0x388] sm:$0xff] %v1016
                  %v1018 = vld [vmem:[%s788 + $0x690] sm:$0xff]
                  %1019 = vst [vmem:[%s789 + $0x390] sm:$0xff] %v1018
                  %v1020 = vld [vmem:[%s788 + $0x698] sm:$0xff]
                  %1021 = vst [vmem:[%s789 + $0x398] sm:$0xff] %v1020
                  %v1022 = vld [vmem:[%s788 + $0x6a0] sm:$0xff]
                  %1023 = vst [vmem:[%s789 + $0x3a0] sm:$0xff] %v1022
                  %v1024 = vld [vmem:[%s788 + $0x6a8] sm:$0xff]
                  %1025 = vst [vmem:[%s789 + $0x3a8] sm:$0xff] %v1024
                  %v1026 = vld [vmem:[%s788 + $0x6b0] sm:$0xff]
                  %1027 = vst [vmem:[%s789 + $0x3b0] sm:$0xff] %v1026
                  %v1028 = vld [vmem:[%s788 + $0x6b8] sm:$0xff]
                  %1029 = vst [vmem:[%s789 + $0x3b8] sm:$0xff] %v1028
                  %v1030 = vld [vmem:[%s788 + $0x6c0] sm:$0xff]
                  %1031 = vst [vmem:[%s789 + $0x3c0] sm:$0xff] %v1030
                  %v1032 = vld [vmem:[%s788 + $0x6c8] sm:$0xff]
                  %1033 = vst [vmem:[%s789 + $0x3c8] sm:$0xff] %v1032
                  %v1034 = vld [vmem:[%s788 + $0x6d0] sm:$0xff]
                  %1035 = vst [vmem:[%s789 + $0x3d0] sm:$0xff] %v1034
                  %v1036 = vld [vmem:[%s788 + $0x6d8] sm:$0xff]
                  %1037 = vst [vmem:[%s789 + $0x3d8] sm:$0xff] %v1036
                  %v1038 = vld [vmem:[%s788 + $0x6e0] sm:$0xff]
                  %1039 = vst [vmem:[%s789 + $0x3e0] sm:$0xff] %v1038
                  %v1040 = vld [vmem:[%s788 + $0x6e8] sm:$0xff]
                  %1041 = vst [vmem:[%s789 + $0x3e8] sm:$0xff] %v1040
                  %v1042 = vld [vmem:[%s788 + $0x6f0] sm:$0xff]
                  %1043 = vst [vmem:[%s789 + $0x3f0] sm:$0xff] %v1042
                  %v1044 = vld [vmem:[%s788 + $0x6f8] sm:$0xff]
                  %1045 = vst [vmem:[%s789 + $0x3f8] sm:$0xff] %v1044
                  %v1046 = vld [vmem:[%s788 + $0x800] sm:$0xff]
                  %1047 = vst [vmem:[%s789 + $0x400] sm:$0xff] %v1046
                  %v1048 = vld [vmem:[%s788 + $0x808] sm:$0xff]
                  %1049 = vst [vmem:[%s789 + $0x408] sm:$0xff] %v1048
                  %v1050 = vld [vmem:[%s788 + $0x810] sm:$0xff]
                  %1051 = vst [vmem:[%s789 + $0x410] sm:$0xff] %v1050
                  %v1052 = vld [vmem:[%s788 + $0x818] sm:$0xff]
                  %1053 = vst [vmem:[%s789 + $0x418] sm:$0xff] %v1052
                  %v1054 = vld [vmem:[%s788 + $0x820] sm:$0xff]
                  %1055 = vst [vmem:[%s789 + $0x420] sm:$0xff] %v1054
                  %v1056 = vld [vmem:[%s788 + $0x828] sm:$0xff]
                  %1057 = vst [vmem:[%s789 + $0x428] sm:$0xff] %v1056
                  %v1058 = vld [vmem:[%s788 + $0x830] sm:$0xff]
                  %1059 = vst [vmem:[%s789 + $0x430] sm:$0xff] %v1058
                  %v1060 = vld [vmem:[%s788 + $0x838] sm:$0xff]
                  %1061 = vst [vmem:[%s789 + $0x438] sm:$0xff] %v1060
                  %v1062 = vld [vmem:[%s788 + $0x840] sm:$0xff]
                  %1063 = vst [vmem:[%s789 + $0x440] sm:$0xff] %v1062
                  %v1064 = vld [vmem:[%s788 + $0x848] sm:$0xff]
                  %1065 = vst [vmem:[%s789 + $0x448] sm:$0xff] %v1064
                  %v1066 = vld [vmem:[%s788 + $0x850] sm:$0xff]
                  %1067 = vst [vmem:[%s789 + $0x450] sm:$0xff] %v1066
                  %v1068 = vld [vmem:[%s788 + $0x858] sm:$0xff]
                  %1069 = vst [vmem:[%s789 + $0x458] sm:$0xff] %v1068
                  %v1070 = vld [vmem:[%s788 + $0x860] sm:$0xff]
                  %1071 = vst [vmem:[%s789 + $0x460] sm:$0xff] %v1070
                  %v1072 = vld [vmem:[%s788 + $0x868] sm:$0xff]
                  %1073 = vst [vmem:[%s789 + $0x468] sm:$0xff] %v1072
                  %v1074 = vld [vmem:[%s788 + $0x870] sm:$0xff]
                  %1075 = vst [vmem:[%s789 + $0x470] sm:$0xff] %v1074
                  %v1076 = vld [vmem:[%s788 + $0x878] sm:$0xff]
                  %1077 = vst [vmem:[%s789 + $0x478] sm:$0xff] %v1076
                  %v1078 = vld [vmem:[%s788 + $0x880] sm:$0xff]
                  %1079 = vst [vmem:[%s789 + $0x480] sm:$0xff] %v1078
                  %v1080 = vld [vmem:[%s788 + $0x888] sm:$0xff]
                  %1081 = vst [vmem:[%s789 + $0x488] sm:$0xff] %v1080
                  %v1082 = vld [vmem:[%s788 + $0x890] sm:$0xff]
                  %1083 = vst [vmem:[%s789 + $0x490] sm:$0xff] %v1082
                  %v1084 = vld [vmem:[%s788 + $0x898] sm:$0xff]
                  %1085 = vst [vmem:[%s789 + $0x498] sm:$0xff] %v1084
                  %v1086 = vld [vmem:[%s788 + $0x8a0] sm:$0xff]
                  %1087 = vst [vmem:[%s789 + $0x4a0] sm:$0xff] %v1086
                  %v1088 = vld [vmem:[%s788 + $0x8a8] sm:$0xff]
                  %1089 = vst [vmem:[%s789 + $0x4a8] sm:$0xff] %v1088
                  %v1090 = vld [vmem:[%s788 + $0x8b0] sm:$0xff]
                  %1091 = vst [vmem:[%s789 + $0x4b0] sm:$0xff] %v1090
                  %v1092 = vld [vmem:[%s788 + $0x8b8] sm:$0xff]
                  %1093 = vst [vmem:[%s789 + $0x4b8] sm:$0xff] %v1092
                  %v1094 = vld [vmem:[%s788 + $0x8c0] sm:$0xff]
                  %1095 = vst [vmem:[%s789 + $0x4c0] sm:$0xff] %v1094
                  %v1096 = vld [vmem:[%s788 + $0x8c8] sm:$0xff]
                  %1097 = vst [vmem:[%s789 + $0x4c8] sm:$0xff] %v1096
                  %v1098 = vld [vmem:[%s788 + $0x8d0] sm:$0xff]
                  %1099 = vst [vmem:[%s789 + $0x4d0] sm:$0xff] %v1098
                  %v1100 = vld [vmem:[%s788 + $0x8d8] sm:$0xff]
                  %1101 = vst [vmem:[%s789 + $0x4d8] sm:$0xff] %v1100
                  %v1102 = vld [vmem:[%s788 + $0x8e0] sm:$0xff]
                  %1103 = vst [vmem:[%s789 + $0x4e0] sm:$0xff] %v1102
                  %v1104 = vld [vmem:[%s788 + $0x8e8] sm:$0xff]
                  %1105 = vst [vmem:[%s789 + $0x4e8] sm:$0xff] %v1104
                  %v1106 = vld [vmem:[%s788 + $0x8f0] sm:$0xff]
                  %1107 = vst [vmem:[%s789 + $0x4f0] sm:$0xff] %v1106
                  %v1108 = vld [vmem:[%s788 + $0x8f8] sm:$0xff]
                  %1109 = vst [vmem:[%s789 + $0x4f8] sm:$0xff] %v1108
                  %v1110 = vld [vmem:[%s788 + $0xa00] sm:$0xff]
                  %1111 = vst [vmem:[%s789 + $0x500] sm:$0xff] %v1110
                  %v1112 = vld [vmem:[%s788 + $0xa08] sm:$0xff]
                  %1113 = vst [vmem:[%s789 + $0x508] sm:$0xff] %v1112
                  %v1114 = vld [vmem:[%s788 + $0xa10] sm:$0xff]
                  %1115 = vst [vmem:[%s789 + $0x510] sm:$0xff] %v1114
                  %v1116 = vld [vmem:[%s788 + $0xa18] sm:$0xff]
                  %1117 = vst [vmem:[%s789 + $0x518] sm:$0xff] %v1116
                  %v1118 = vld [vmem:[%s788 + $0xa20] sm:$0xff]
                  %1119 = vst [vmem:[%s789 + $0x520] sm:$0xff] %v1118
                  %v1120 = vld [vmem:[%s788 + $0xa28] sm:$0xff]
                  %1121 = vst [vmem:[%s789 + $0x528] sm:$0xff] %v1120
                  %v1122 = vld [vmem:[%s788 + $0xa30] sm:$0xff]
                  %1123 = vst [vmem:[%s789 + $0x530] sm:$0xff] %v1122
                  %v1124 = vld [vmem:[%s788 + $0xa38] sm:$0xff]
                  %1125 = vst [vmem:[%s789 + $0x538] sm:$0xff] %v1124
                  %v1126 = vld [vmem:[%s788 + $0xa40] sm:$0xff]
                  %1127 = vst [vmem:[%s789 + $0x540] sm:$0xff] %v1126
                  %v1128 = vld [vmem:[%s788 + $0xa48] sm:$0xff]
                  %1129 = vst [vmem:[%s789 + $0x548] sm:$0xff] %v1128
                  %v1130 = vld [vmem:[%s788 + $0xa50] sm:$0xff]
                  %1131 = vst [vmem:[%s789 + $0x550] sm:$0xff] %v1130
                  %v1132 = vld [vmem:[%s788 + $0xa58] sm:$0xff]
                  %1133 = vst [vmem:[%s789 + $0x558] sm:$0xff] %v1132
                  %v1134 = vld [vmem:[%s788 + $0xa60] sm:$0xff]
                  %1135 = vst [vmem:[%s789 + $0x560] sm:$0xff] %v1134
                  %v1136 = vld [vmem:[%s788 + $0xa68] sm:$0xff]
                  %1137 = vst [vmem:[%s789 + $0x568] sm:$0xff] %v1136
                  %v1138 = vld [vmem:[%s788 + $0xa70] sm:$0xff]
                  %1139 = vst [vmem:[%s789 + $0x570] sm:$0xff] %v1138
                  %v1140 = vld [vmem:[%s788 + $0xa78] sm:$0xff]
                  %1141 = vst [vmem:[%s789 + $0x578] sm:$0xff] %v1140
                  %v1142 = vld [vmem:[%s788 + $0xa80] sm:$0xff]
                  %1143 = vst [vmem:[%s789 + $0x580] sm:$0xff] %v1142
                  %v1144 = vld [vmem:[%s788 + $0xa88] sm:$0xff]
                  %1145 = vst [vmem:[%s789 + $0x588] sm:$0xff] %v1144
                  %v1146 = vld [vmem:[%s788 + $0xa90] sm:$0xff]
                  %1147 = vst [vmem:[%s789 + $0x590] sm:$0xff] %v1146
                  %v1148 = vld [vmem:[%s788 + $0xa98] sm:$0xff]
                  %1149 = vst [vmem:[%s789 + $0x598] sm:$0xff] %v1148
                  %v1150 = vld [vmem:[%s788 + $0xaa0] sm:$0xff]
                  %1151 = vst [vmem:[%s789 + $0x5a0] sm:$0xff] %v1150
                  %v1152 = vld [vmem:[%s788 + $0xaa8] sm:$0xff]
                  %1153 = vst [vmem:[%s789 + $0x5a8] sm:$0xff] %v1152
                  %v1154 = vld [vmem:[%s788 + $0xab0] sm:$0xff]
                  %1155 = vst [vmem:[%s789 + $0x5b0] sm:$0xff] %v1154
                  %v1156 = vld [vmem:[%s788 + $0xab8] sm:$0xff]
                  %1157 = vst [vmem:[%s789 + $0x5b8] sm:$0xff] %v1156
                  %v1158 = vld [vmem:[%s788 + $0xac0] sm:$0xff]
                  %1159 = vst [vmem:[%s789 + $0x5c0] sm:$0xff] %v1158
                  %v1160 = vld [vmem:[%s788 + $0xac8] sm:$0xff]
                  %1161 = vst [vmem:[%s789 + $0x5c8] sm:$0xff] %v1160
                  %v1162 = vld [vmem:[%s788 + $0xad0] sm:$0xff]
                  %1163 = vst [vmem:[%s789 + $0x5d0] sm:$0xff] %v1162
                  %v1164 = vld [vmem:[%s788 + $0xad8] sm:$0xff]
                  %1165 = vst [vmem:[%s789 + $0x5d8] sm:$0xff] %v1164
                  %v1166 = vld [vmem:[%s788 + $0xae0] sm:$0xff]
                  %1167 = vst [vmem:[%s789 + $0x5e0] sm:$0xff] %v1166
                  %v1168 = vld [vmem:[%s788 + $0xae8] sm:$0xff]
                  %1169 = vst [vmem:[%s789 + $0x5e8] sm:$0xff] %v1168
                  %v1170 = vld [vmem:[%s788 + $0xaf0] sm:$0xff]
                  %1171 = vst [vmem:[%s789 + $0x5f0] sm:$0xff] %v1170
                  %v1172 = vld [vmem:[%s788 + $0xaf8] sm:$0xff]
                  %1173 = vst [vmem:[%s789 + $0x5f8] sm:$0xff] %v1172
                  %v1174 = vld [vmem:[%s788 + $0xc00] sm:$0xff]
                  %1175 = vst [vmem:[%s789 + $0x600] sm:$0xff] %v1174
                  %v1176 = vld [vmem:[%s788 + $0xc08] sm:$0xff]
                  %1177 = vst [vmem:[%s789 + $0x608] sm:$0xff] %v1176
                  %v1178 = vld [vmem:[%s788 + $0xc10] sm:$0xff]
                  %1179 = vst [vmem:[%s789 + $0x610] sm:$0xff] %v1178
                  %v1180 = vld [vmem:[%s788 + $0xc18] sm:$0xff]
                  %1181 = vst [vmem:[%s789 + $0x618] sm:$0xff] %v1180
                  %v1182 = vld [vmem:[%s788 + $0xc20] sm:$0xff]
                  %1183 = vst [vmem:[%s789 + $0x620] sm:$0xff] %v1182
                  %v1184 = vld [vmem:[%s788 + $0xc28] sm:$0xff]
                  %1185 = vst [vmem:[%s789 + $0x628] sm:$0xff] %v1184
                  %v1186 = vld [vmem:[%s788 + $0xc30] sm:$0xff]
                  %1187 = vst [vmem:[%s789 + $0x630] sm:$0xff] %v1186
                  %v1188 = vld [vmem:[%s788 + $0xc38] sm:$0xff]
                  %1189 = vst [vmem:[%s789 + $0x638] sm:$0xff] %v1188
                  %v1190 = vld [vmem:[%s788 + $0xc40] sm:$0xff]
                  %1191 = vst [vmem:[%s789 + $0x640] sm:$0xff] %v1190
                  %v1192 = vld [vmem:[%s788 + $0xc48] sm:$0xff]
                  %1193 = vst [vmem:[%s789 + $0x648] sm:$0xff] %v1192
                  %v1194 = vld [vmem:[%s788 + $0xc50] sm:$0xff]
                  %1195 = vst [vmem:[%s789 + $0x650] sm:$0xff] %v1194
                  %v1196 = vld [vmem:[%s788 + $0xc58] sm:$0xff]
                  %1197 = vst [vmem:[%s789 + $0x658] sm:$0xff] %v1196
                  %v1198 = vld [vmem:[%s788 + $0xc60] sm:$0xff]
                  %1199 = vst [vmem:[%s789 + $0x660] sm:$0xff] %v1198
                  %v1200 = vld [vmem:[%s788 + $0xc68] sm:$0xff]
                  %1201 = vst [vmem:[%s789 + $0x668] sm:$0xff] %v1200
                  %v1202 = vld [vmem:[%s788 + $0xc70] sm:$0xff]
                  %1203 = vst [vmem:[%s789 + $0x670] sm:$0xff] %v1202
                  %v1204 = vld [vmem:[%s788 + $0xc78] sm:$0xff]
                  %1205 = vst [vmem:[%s789 + $0x678] sm:$0xff] %v1204
                  %v1206 = vld [vmem:[%s788 + $0xc80] sm:$0xff]
                  %1207 = vst [vmem:[%s789 + $0x680] sm:$0xff] %v1206
                  %v1208 = vld [vmem:[%s788 + $0xc88] sm:$0xff]
                  %1209 = vst [vmem:[%s789 + $0x688] sm:$0xff] %v1208
                  %v1210 = vld [vmem:[%s788 + $0xc90] sm:$0xff]
                  %1211 = vst [vmem:[%s789 + $0x690] sm:$0xff] %v1210
                  %v1212 = vld [vmem:[%s788 + $0xc98] sm:$0xff]
                  %1213 = vst [vmem:[%s789 + $0x698] sm:$0xff] %v1212
                  %v1214 = vld [vmem:[%s788 + $0xca0] sm:$0xff]
                  %1215 = vst [vmem:[%s789 + $0x6a0] sm:$0xff] %v1214
                  %v1216 = vld [vmem:[%s788 + $0xca8] sm:$0xff]
                  %1217 = vst [vmem:[%s789 + $0x6a8] sm:$0xff] %v1216
                  %v1218 = vld [vmem:[%s788 + $0xcb0] sm:$0xff]
                  %1219 = vst [vmem:[%s789 + $0x6b0] sm:$0xff] %v1218
                  %v1220 = vld [vmem:[%s788 + $0xcb8] sm:$0xff]
                  %1221 = vst [vmem:[%s789 + $0x6b8] sm:$0xff] %v1220
                  %v1222 = vld [vmem:[%s788 + $0xcc0] sm:$0xff]
                  %1223 = vst [vmem:[%s789 + $0x6c0] sm:$0xff] %v1222
                  %v1224 = vld [vmem:[%s788 + $0xcc8] sm:$0xff]
                  %1225 = vst [vmem:[%s789 + $0x6c8] sm:$0xff] %v1224
                  %v1226 = vld [vmem:[%s788 + $0xcd0] sm:$0xff]
                  %1227 = vst [vmem:[%s789 + $0x6d0] sm:$0xff] %v1226
                  %v1228 = vld [vmem:[%s788 + $0xcd8] sm:$0xff]
                  %1229 = vst [vmem:[%s789 + $0x6d8] sm:$0xff] %v1228
                  %v1230 = vld [vmem:[%s788 + $0xce0] sm:$0xff]
                  %1231 = vst [vmem:[%s789 + $0x6e0] sm:$0xff] %v1230
                  %v1232 = vld [vmem:[%s788 + $0xce8] sm:$0xff]
                  %1233 = vst [vmem:[%s789 + $0x6e8] sm:$0xff] %v1232
                  %v1234 = vld [vmem:[%s788 + $0xcf0] sm:$0xff]
                  %1235 = vst [vmem:[%s789 + $0x6f0] sm:$0xff] %v1234
                  %v1236 = vld [vmem:[%s788 + $0xcf8] sm:$0xff]
                  %1237 = vst [vmem:[%s789 + $0x6f8] sm:$0xff] %v1236
                  %v1238 = vld [vmem:[%s788 + $0xe00] sm:$0xff]
                  %1239 = vst [vmem:[%s789 + $0x700] sm:$0xff] %v1238
                  %v1240 = vld [vmem:[%s788 + $0xe08] sm:$0xff]
                  %1241 = vst [vmem:[%s789 + $0x708] sm:$0xff] %v1240
                  %v1242 = vld [vmem:[%s788 + $0xe10] sm:$0xff]
                  %1243 = vst [vmem:[%s789 + $0x710] sm:$0xff] %v1242
                  %v1244 = vld [vmem:[%s788 + $0xe18] sm:$0xff]
                  %1245 = vst [vmem:[%s789 + $0x718] sm:$0xff] %v1244
                  %v1246 = vld [vmem:[%s788 + $0xe20] sm:$0xff]
                  %1247 = vst [vmem:[%s789 + $0x720] sm:$0xff] %v1246
                  %v1248 = vld [vmem:[%s788 + $0xe28] sm:$0xff]
                  %1249 = vst [vmem:[%s789 + $0x728] sm:$0xff] %v1248
                  %v1250 = vld [vmem:[%s788 + $0xe30] sm:$0xff]
                  %1251 = vst [vmem:[%s789 + $0x730] sm:$0xff] %v1250
                  %v1252 = vld [vmem:[%s788 + $0xe38] sm:$0xff]
                  %1253 = vst [vmem:[%s789 + $0x738] sm:$0xff] %v1252
                  %v1254 = vld [vmem:[%s788 + $0xe40] sm:$0xff]
                  %1255 = vst [vmem:[%s789 + $0x740] sm:$0xff] %v1254
                  %v1256 = vld [vmem:[%s788 + $0xe48] sm:$0xff]
                  %1257 = vst [vmem:[%s789 + $0x748] sm:$0xff] %v1256
                  %v1258 = vld [vmem:[%s788 + $0xe50] sm:$0xff]
                  %1259 = vst [vmem:[%s789 + $0x750] sm:$0xff] %v1258
                  %v1260 = vld [vmem:[%s788 + $0xe58] sm:$0xff]
                  %1261 = vst [vmem:[%s789 + $0x758] sm:$0xff] %v1260
                  %v1262 = vld [vmem:[%s788 + $0xe60] sm:$0xff]
                  %1263 = vst [vmem:[%s789 + $0x760] sm:$0xff] %v1262
                  %v1264 = vld [vmem:[%s788 + $0xe68] sm:$0xff]
                  %1265 = vst [vmem:[%s789 + $0x768] sm:$0xff] %v1264
                  %v1266 = vld [vmem:[%s788 + $0xe70] sm:$0xff]
                  %1267 = vst [vmem:[%s789 + $0x770] sm:$0xff] %v1266
                  %v1268 = vld [vmem:[%s788 + $0xe78] sm:$0xff]
                  %1269 = vst [vmem:[%s789 + $0x778] sm:$0xff] %v1268
                  %v1270 = vld [vmem:[%s788 + $0xe80] sm:$0xff]
                  %1271 = vst [vmem:[%s789 + $0x780] sm:$0xff] %v1270
                  %v1272 = vld [vmem:[%s788 + $0xe88] sm:$0xff]
                  %1273 = vst [vmem:[%s789 + $0x788] sm:$0xff] %v1272
                  %v1274 = vld [vmem:[%s788 + $0xe90] sm:$0xff]
                  %1275 = vst [vmem:[%s789 + $0x790] sm:$0xff] %v1274
                  %v1276 = vld [vmem:[%s788 + $0xe98] sm:$0xff]
                  %1277 = vst [vmem:[%s789 + $0x798] sm:$0xff] %v1276
                  %v1278 = vld [vmem:[%s788 + $0xea0] sm:$0xff]
                  %1279 = vst [vmem:[%s789 + $0x7a0] sm:$0xff] %v1278
                  %v1280 = vld [vmem:[%s788 + $0xea8] sm:$0xff]
                  %1281 = vst [vmem:[%s789 + $0x7a8] sm:$0xff] %v1280
                  %v1282 = vld [vmem:[%s788 + $0xeb0] sm:$0xff]
                  %1283 = vst [vmem:[%s789 + $0x7b0] sm:$0xff] %v1282
                  %v1284 = vld [vmem:[%s788 + $0xeb8] sm:$0xff]
                  %1285 = vst [vmem:[%s789 + $0x7b8] sm:$0xff] %v1284
                  %v1286 = vld [vmem:[%s788 + $0xec0] sm:$0xff]
                  %1287 = vst [vmem:[%s789 + $0x7c0] sm:$0xff] %v1286
                  %v1288 = vld [vmem:[%s788 + $0xec8] sm:$0xff]
                  %1289 = vst [vmem:[%s789 + $0x7c8] sm:$0xff] %v1288
                  %v1290 = vld [vmem:[%s788 + $0xed0] sm:$0xff]
                  %1291 = vst [vmem:[%s789 + $0x7d0] sm:$0xff] %v1290
                  %v1292 = vld [vmem:[%s788 + $0xed8] sm:$0xff]
                  %1293 = vst [vmem:[%s789 + $0x7d8] sm:$0xff] %v1292
                  %v1294 = vld [vmem:[%s788 + $0xee0] sm:$0xff]
                  %1295 = vst [vmem:[%s789 + $0x7e0] sm:$0xff] %v1294
                  %v1296 = vld [vmem:[%s788 + $0xee8] sm:$0xff]
                  %1297 = vst [vmem:[%s789 + $0x7e8] sm:$0xff] %v1296
                  %v1298 = vld [vmem:[%s788 + $0xef0] sm:$0xff]
                  %1299 = vst [vmem:[%s789 + $0x7f0] sm:$0xff] %v1298
                  %v1300 = vld [vmem:[%s788 + $0xef8] sm:$0xff]
                  %1301 = vst [vmem:[%s789 + $0x7f8] sm:$0xff] %v1300
                  %v1302 = vld [vmem:[%s788 + $0x1000] sm:$0xff]
                  %1303 = vst [vmem:[%s789 + $0x800] sm:$0xff] %v1302
                  %v1304 = vld [vmem:[%s788 + $0x1008] sm:$0xff]
                  %1305 = vst [vmem:[%s789 + $0x808] sm:$0xff] %v1304
                  %v1306 = vld [vmem:[%s788 + $0x1010] sm:$0xff]
                  %1307 = vst [vmem:[%s789 + $0x810] sm:$0xff] %v1306
                  %v1308 = vld [vmem:[%s788 + $0x1018] sm:$0xff]
                  %1309 = vst [vmem:[%s789 + $0x818] sm:$0xff] %v1308
                  %v1310 = vld [vmem:[%s788 + $0x1020] sm:$0xff]
                  %1311 = vst [vmem:[%s789 + $0x820] sm:$0xff] %v1310
                  %v1312 = vld [vmem:[%s788 + $0x1028] sm:$0xff]
                  %1313 = vst [vmem:[%s789 + $0x828] sm:$0xff] %v1312
                  %v1314 = vld [vmem:[%s788 + $0x1030] sm:$0xff]
                  %1315 = vst [vmem:[%s789 + $0x830] sm:$0xff] %v1314
                  %v1316 = vld [vmem:[%s788 + $0x1038] sm:$0xff]
                  %1317 = vst [vmem:[%s789 + $0x838] sm:$0xff] %v1316
                  %v1318 = vld [vmem:[%s788 + $0x1040] sm:$0xff]
                  %1319 = vst [vmem:[%s789 + $0x840] sm:$0xff] %v1318
                  %v1320 = vld [vmem:[%s788 + $0x1048] sm:$0xff]
                  %1321 = vst [vmem:[%s789 + $0x848] sm:$0xff] %v1320
                  %v1322 = vld [vmem:[%s788 + $0x1050] sm:$0xff]
                  %1323 = vst [vmem:[%s789 + $0x850] sm:$0xff] %v1322
                  %v1324 = vld [vmem:[%s788 + $0x1058] sm:$0xff]
                  %1325 = vst [vmem:[%s789 + $0x858] sm:$0xff] %v1324
                  %v1326 = vld [vmem:[%s788 + $0x1060] sm:$0xff]
                  %1327 = vst [vmem:[%s789 + $0x860] sm:$0xff] %v1326
                  %v1328 = vld [vmem:[%s788 + $0x1068] sm:$0xff]
                  %1329 = vst [vmem:[%s789 + $0x868] sm:$0xff] %v1328
                  %v1330 = vld [vmem:[%s788 + $0x1070] sm:$0xff]
                  %1331 = vst [vmem:[%s789 + $0x870] sm:$0xff] %v1330
                  %v1332 = vld [vmem:[%s788 + $0x1078] sm:$0xff]
                  %1333 = vst [vmem:[%s789 + $0x878] sm:$0xff] %v1332
                  %v1334 = vld [vmem:[%s788 + $0x1080] sm:$0xff]
                  %1335 = vst [vmem:[%s789 + $0x880] sm:$0xff] %v1334
                  %v1336 = vld [vmem:[%s788 + $0x1088] sm:$0xff]
                  %1337 = vst [vmem:[%s789 + $0x888] sm:$0xff] %v1336
                  %v1338 = vld [vmem:[%s788 + $0x1090] sm:$0xff]
                  %1339 = vst [vmem:[%s789 + $0x890] sm:$0xff] %v1338
                  %v1340 = vld [vmem:[%s788 + $0x1098] sm:$0xff]
                  %1341 = vst [vmem:[%s789 + $0x898] sm:$0xff] %v1340
                  %v1342 = vld [vmem:[%s788 + $0x10a0] sm:$0xff]
                  %1343 = vst [vmem:[%s789 + $0x8a0] sm:$0xff] %v1342
                  %v1344 = vld [vmem:[%s788 + $0x10a8] sm:$0xff]
                  %1345 = vst [vmem:[%s789 + $0x8a8] sm:$0xff] %v1344
                  %v1346 = vld [vmem:[%s788 + $0x10b0] sm:$0xff]
                  %1347 = vst [vmem:[%s789 + $0x8b0] sm:$0xff] %v1346
                  %v1348 = vld [vmem:[%s788 + $0x10b8] sm:$0xff]
                  %1349 = vst [vmem:[%s789 + $0x8b8] sm:$0xff] %v1348
                  %v1350 = vld [vmem:[%s788 + $0x10c0] sm:$0xff]
                  %1351 = vst [vmem:[%s789 + $0x8c0] sm:$0xff] %v1350
                  %v1352 = vld [vmem:[%s788 + $0x10c8] sm:$0xff]
                  %1353 = vst [vmem:[%s789 + $0x8c8] sm:$0xff] %v1352
                  %v1354 = vld [vmem:[%s788 + $0x10d0] sm:$0xff]
                  %1355 = vst [vmem:[%s789 + $0x8d0] sm:$0xff] %v1354
                  %v1356 = vld [vmem:[%s788 + $0x10d8] sm:$0xff]
                  %1357 = vst [vmem:[%s789 + $0x8d8] sm:$0xff] %v1356
                  %v1358 = vld [vmem:[%s788 + $0x10e0] sm:$0xff]
                  %1359 = vst [vmem:[%s789 + $0x8e0] sm:$0xff] %v1358
                  %v1360 = vld [vmem:[%s788 + $0x10e8] sm:$0xff]
                  %1361 = vst [vmem:[%s789 + $0x8e8] sm:$0xff] %v1360
                  %v1362 = vld [vmem:[%s788 + $0x10f0] sm:$0xff]
                  %1363 = vst [vmem:[%s789 + $0x8f0] sm:$0xff] %v1362
                  %v1364 = vld [vmem:[%s788 + $0x10f8] sm:$0xff]
                  %1365 = vst [vmem:[%s789 + $0x8f8] sm:$0xff] %v1364
                $region64: #{learning_to_downsample.4} parent=58 // loop_footer
                  %s787 = sadd.s32 1, %s783
                $region65: #{learning_to_downsample.4} parent=58 // loop_footer_branch
                  %782 = sbr.rel target = $region61
                $region66: #{learning_to_downsample.4} parent=58 // loop_exit
                  _
              $region59: #{learning_to_downsample.4} parent=43 // pred_fallthru
                _
              // Predicated region
              $region67: #{learning_to_downsample.4} parent=43 // pred_check
                _
              $region68: #{learning_to_downsample.4} parent=43 // pred_check_branch
                %1367 = sbr.rel target = $region70
              $region69: #{learning_to_downsample.4} parent=43 // pred_region
                _
              $region70: #{learning_to_downsample.4} parent=43 // pred_fallthru
                _
            $region44: #{learning_to_downsample.4} parent=39 // pred_fallthru
              _
            // Predicated region
            $region45: #{learning_to_downsample.4} parent=39 // pred_check
              _
            $region46: #{learning_to_downsample.4} parent=39 // pred_check_branch
              %193 = sbr.rel target = $region48
            $region47: #{learning_to_downsample.4} parent=39 // pred_region
              %s195 = ssub.s32 256, 1
              loop: start=0, step=1, limit=1
              $region49: #{learning_to_downsample.4} parent=47 // loop_pre_header
                _
              $region50: #{learning_to_downsample.4} parent=47 // loop_header
                %s197 = sphi 0, %s201
                %p198 = scmp.ge.s32.totalorder %s197, 1
                %s202 = sphi %s187, %s187
                %s203 = sphi %s184, %s184
              $region51: #{learning_to_downsample.4} parent=47 // loop_header_branch
                %200 = sbr.rel (%p198) target = $region55
              $region52: #{learning_to_downsample.4} parent=47 // loop_body
                %v204 = vld [vmem:[%s202] sm:%s195]
                %205 = vst [vmem:[%s203] sm:%s195] %v204
                %v206 = vld [vmem:[%s202 + $0x8] sm:%s195]
                %207 = vst [vmem:[%s203 + $0x8] sm:%s195] %v206
                %v208 = vld [vmem:[%s202 + $0x10] sm:%s195]
                %209 = vst [vmem:[%s203 + $0x10] sm:%s195] %v208
                %v210 = vld [vmem:[%s202 + $0x18] sm:%s195]
                %211 = vst [vmem:[%s203 + $0x18] sm:%s195] %v210
                %v212 = vld [vmem:[%s202 + $0x20] sm:%s195]
                %213 = vst [vmem:[%s203 + $0x20] sm:%s195] %v212
                %v214 = vld [vmem:[%s202 + $0x28] sm:%s195]
                %215 = vst [vmem:[%s203 + $0x28] sm:%s195] %v214
                %v216 = vld [vmem:[%s202 + $0x30] sm:%s195]
                %217 = vst [vmem:[%s203 + $0x30] sm:%s195] %v216
                %v218 = vld [vmem:[%s202 + $0x38] sm:%s195]
                %219 = vst [vmem:[%s203 + $0x38] sm:%s195] %v218
                %v220 = vld [vmem:[%s202 + $0x40] sm:%s195]
                %221 = vst [vmem:[%s203 + $0x40] sm:%s195] %v220
                %v222 = vld [vmem:[%s202 + $0x48] sm:%s195]
                %223 = vst [vmem:[%s203 + $0x48] sm:%s195] %v222
                %v224 = vld [vmem:[%s202 + $0x50] sm:%s195]
                %225 = vst [vmem:[%s203 + $0x50] sm:%s195] %v224
                %v226 = vld [vmem:[%s202 + $0x58] sm:%s195]
                %227 = vst [vmem:[%s203 + $0x58] sm:%s195] %v226
                %v228 = vld [vmem:[%s202 + $0x60] sm:%s195]
                %229 = vst [vmem:[%s203 + $0x60] sm:%s195] %v228
                %v230 = vld [vmem:[%s202 + $0x68] sm:%s195]
                %231 = vst [vmem:[%s203 + $0x68] sm:%s195] %v230
                %v232 = vld [vmem:[%s202 + $0x70] sm:%s195]
                %233 = vst [vmem:[%s203 + $0x70] sm:%s195] %v232
                %v234 = vld [vmem:[%s202 + $0x78] sm:%s195]
                %235 = vst [vmem:[%s203 + $0x78] sm:%s195] %v234
                %v236 = vld [vmem:[%s202 + $0x80] sm:%s195]
                %237 = vst [vmem:[%s203 + $0x80] sm:%s195] %v236
                %v238 = vld [vmem:[%s202 + $0x88] sm:%s195]
                %239 = vst [vmem:[%s203 + $0x88] sm:%s195] %v238
                %v240 = vld [vmem:[%s202 + $0x90] sm:%s195]
                %241 = vst [vmem:[%s203 + $0x90] sm:%s195] %v240
                %v242 = vld [vmem:[%s202 + $0x98] sm:%s195]
                %243 = vst [vmem:[%s203 + $0x98] sm:%s195] %v242
                %v244 = vld [vmem:[%s202 + $0xa0] sm:%s195]
                %245 = vst [vmem:[%s203 + $0xa0] sm:%s195] %v244
                %v246 = vld [vmem:[%s202 + $0xa8] sm:%s195]
                %247 = vst [vmem:[%s203 + $0xa8] sm:%s195] %v246
                %v248 = vld [vmem:[%s202 + $0xb0] sm:%s195]
                %249 = vst [vmem:[%s203 + $0xb0] sm:%s195] %v248
                %v250 = vld [vmem:[%s202 + $0xb8] sm:%s195]
                %251 = vst [vmem:[%s203 + $0xb8] sm:%s195] %v250
                %v252 = vld [vmem:[%s202 + $0xc0] sm:%s195]
                %253 = vst [vmem:[%s203 + $0xc0] sm:%s195] %v252
                %v254 = vld [vmem:[%s202 + $0xc8] sm:%s195]
                %255 = vst [vmem:[%s203 + $0xc8] sm:%s195] %v254
                %v256 = vld [vmem:[%s202 + $0xd0] sm:%s195]
                %257 = vst [vmem:[%s203 + $0xd0] sm:%s195] %v256
                %v258 = vld [vmem:[%s202 + $0xd8] sm:%s195]
                %259 = vst [vmem:[%s203 + $0xd8] sm:%s195] %v258
                %v260 = vld [vmem:[%s202 + $0xe0] sm:%s195]
                %261 = vst [vmem:[%s203 + $0xe0] sm:%s195] %v260
                %v262 = vld [vmem:[%s202 + $0xe8] sm:%s195]
                %263 = vst [vmem:[%s203 + $0xe8] sm:%s195] %v262
                %v264 = vld [vmem:[%s202 + $0xf0] sm:%s195]
                %265 = vst [vmem:[%s203 + $0xf0] sm:%s195] %v264
                %v266 = vld [vmem:[%s202 + $0xf8] sm:%s195]
                %267 = vst [vmem:[%s203 + $0xf8] sm:%s195] %v266
                %v268 = vld [vmem:[%s202 + $0x200] sm:%s195]
                %269 = vst [vmem:[%s203 + $0x100] sm:%s195] %v268
                %v270 = vld [vmem:[%s202 + $0x208] sm:%s195]
                %271 = vst [vmem:[%s203 + $0x108] sm:%s195] %v270
                %v272 = vld [vmem:[%s202 + $0x210] sm:%s195]
                %273 = vst [vmem:[%s203 + $0x110] sm:%s195] %v272
                %v274 = vld [vmem:[%s202 + $0x218] sm:%s195]
                %275 = vst [vmem:[%s203 + $0x118] sm:%s195] %v274
                %v276 = vld [vmem:[%s202 + $0x220] sm:%s195]
                %277 = vst [vmem:[%s203 + $0x120] sm:%s195] %v276
                %v278 = vld [vmem:[%s202 + $0x228] sm:%s195]
                %279 = vst [vmem:[%s203 + $0x128] sm:%s195] %v278
                %v280 = vld [vmem:[%s202 + $0x230] sm:%s195]
                %281 = vst [vmem:[%s203 + $0x130] sm:%s195] %v280
                %v282 = vld [vmem:[%s202 + $0x238] sm:%s195]
                %283 = vst [vmem:[%s203 + $0x138] sm:%s195] %v282
                %v284 = vld [vmem:[%s202 + $0x240] sm:%s195]
                %285 = vst [vmem:[%s203 + $0x140] sm:%s195] %v284
                %v286 = vld [vmem:[%s202 + $0x248] sm:%s195]
                %287 = vst [vmem:[%s203 + $0x148] sm:%s195] %v286
                %v288 = vld [vmem:[%s202 + $0x250] sm:%s195]
                %289 = vst [vmem:[%s203 + $0x150] sm:%s195] %v288
                %v290 = vld [vmem:[%s202 + $0x258] sm:%s195]
                %291 = vst [vmem:[%s203 + $0x158] sm:%s195] %v290
                %v292 = vld [vmem:[%s202 + $0x260] sm:%s195]
                %293 = vst [vmem:[%s203 + $0x160] sm:%s195] %v292
                %v294 = vld [vmem:[%s202 + $0x268] sm:%s195]
                %295 = vst [vmem:[%s203 + $0x168] sm:%s195] %v294
                %v296 = vld [vmem:[%s202 + $0x270] sm:%s195]
                %297 = vst [vmem:[%s203 + $0x170] sm:%s195] %v296
                %v298 = vld [vmem:[%s202 + $0x278] sm:%s195]
                %299 = vst [vmem:[%s203 + $0x178] sm:%s195] %v298
                %v300 = vld [vmem:[%s202 + $0x280] sm:%s195]
                %301 = vst [vmem:[%s203 + $0x180] sm:%s195] %v300
                %v302 = vld [vmem:[%s202 + $0x288] sm:%s195]
                %303 = vst [vmem:[%s203 + $0x188] sm:%s195] %v302
                %v304 = vld [vmem:[%s202 + $0x290] sm:%s195]
                %305 = vst [vmem:[%s203 + $0x190] sm:%s195] %v304
                %v306 = vld [vmem:[%s202 + $0x298] sm:%s195]
                %307 = vst [vmem:[%s203 + $0x198] sm:%s195] %v306
                %v308 = vld [vmem:[%s202 + $0x2a0] sm:%s195]
                %309 = vst [vmem:[%s203 + $0x1a0] sm:%s195] %v308
                %v310 = vld [vmem:[%s202 + $0x2a8] sm:%s195]
                %311 = vst [vmem:[%s203 + $0x1a8] sm:%s195] %v310
                %v312 = vld [vmem:[%s202 + $0x2b0] sm:%s195]
                %313 = vst [vmem:[%s203 + $0x1b0] sm:%s195] %v312
                %v314 = vld [vmem:[%s202 + $0x2b8] sm:%s195]
                %315 = vst [vmem:[%s203 + $0x1b8] sm:%s195] %v314
                %v316 = vld [vmem:[%s202 + $0x2c0] sm:%s195]
                %317 = vst [vmem:[%s203 + $0x1c0] sm:%s195] %v316
                %v318 = vld [vmem:[%s202 + $0x2c8] sm:%s195]
                %319 = vst [vmem:[%s203 + $0x1c8] sm:%s195] %v318
                %v320 = vld [vmem:[%s202 + $0x2d0] sm:%s195]
                %321 = vst [vmem:[%s203 + $0x1d0] sm:%s195] %v320
                %v322 = vld [vmem:[%s202 + $0x2d8] sm:%s195]
                %323 = vst [vmem:[%s203 + $0x1d8] sm:%s195] %v322
                %v324 = vld [vmem:[%s202 + $0x2e0] sm:%s195]
                %325 = vst [vmem:[%s203 + $0x1e0] sm:%s195] %v324
                %v326 = vld [vmem:[%s202 + $0x2e8] sm:%s195]
                %327 = vst [vmem:[%s203 + $0x1e8] sm:%s195] %v326
                %v328 = vld [vmem:[%s202 + $0x2f0] sm:%s195]
                %329 = vst [vmem:[%s203 + $0x1f0] sm:%s195] %v328
                %v330 = vld [vmem:[%s202 + $0x2f8] sm:%s195]
                %331 = vst [vmem:[%s203 + $0x1f8] sm:%s195] %v330
                %v332 = vld [vmem:[%s202 + $0x400] sm:%s195]
                %333 = vst [vmem:[%s203 + $0x200] sm:%s195] %v332
                %v334 = vld [vmem:[%s202 + $0x408] sm:%s195]
                %335 = vst [vmem:[%s203 + $0x208] sm:%s195] %v334
                %v336 = vld [vmem:[%s202 + $0x410] sm:%s195]
                %337 = vst [vmem:[%s203 + $0x210] sm:%s195] %v336
                %v338 = vld [vmem:[%s202 + $0x418] sm:%s195]
                %339 = vst [vmem:[%s203 + $0x218] sm:%s195] %v338
                %v340 = vld [vmem:[%s202 + $0x420] sm:%s195]
                %341 = vst [vmem:[%s203 + $0x220] sm:%s195] %v340
                %v342 = vld [vmem:[%s202 + $0x428] sm:%s195]
                %343 = vst [vmem:[%s203 + $0x228] sm:%s195] %v342
                %v344 = vld [vmem:[%s202 + $0x430] sm:%s195]
                %345 = vst [vmem:[%s203 + $0x230] sm:%s195] %v344
                %v346 = vld [vmem:[%s202 + $0x438] sm:%s195]
                %347 = vst [vmem:[%s203 + $0x238] sm:%s195] %v346
                %v348 = vld [vmem:[%s202 + $0x440] sm:%s195]
                %349 = vst [vmem:[%s203 + $0x240] sm:%s195] %v348
                %v350 = vld [vmem:[%s202 + $0x448] sm:%s195]
                %351 = vst [vmem:[%s203 + $0x248] sm:%s195] %v350
                %v352 = vld [vmem:[%s202 + $0x450] sm:%s195]
                %353 = vst [vmem:[%s203 + $0x250] sm:%s195] %v352
                %v354 = vld [vmem:[%s202 + $0x458] sm:%s195]
                %355 = vst [vmem:[%s203 + $0x258] sm:%s195] %v354
                %v356 = vld [vmem:[%s202 + $0x460] sm:%s195]
                %357 = vst [vmem:[%s203 + $0x260] sm:%s195] %v356
                %v358 = vld [vmem:[%s202 + $0x468] sm:%s195]
                %359 = vst [vmem:[%s203 + $0x268] sm:%s195] %v358
                %v360 = vld [vmem:[%s202 + $0x470] sm:%s195]
                %361 = vst [vmem:[%s203 + $0x270] sm:%s195] %v360
                %v362 = vld [vmem:[%s202 + $0x478] sm:%s195]
                %363 = vst [vmem:[%s203 + $0x278] sm:%s195] %v362
                %v364 = vld [vmem:[%s202 + $0x480] sm:%s195]
                %365 = vst [vmem:[%s203 + $0x280] sm:%s195] %v364
                %v366 = vld [vmem:[%s202 + $0x488] sm:%s195]
                %367 = vst [vmem:[%s203 + $0x288] sm:%s195] %v366
                %v368 = vld [vmem:[%s202 + $0x490] sm:%s195]
                %369 = vst [vmem:[%s203 + $0x290] sm:%s195] %v368
                %v370 = vld [vmem:[%s202 + $0x498] sm:%s195]
                %371 = vst [vmem:[%s203 + $0x298] sm:%s195] %v370
                %v372 = vld [vmem:[%s202 + $0x4a0] sm:%s195]
                %373 = vst [vmem:[%s203 + $0x2a0] sm:%s195] %v372
                %v374 = vld [vmem:[%s202 + $0x4a8] sm:%s195]
                %375 = vst [vmem:[%s203 + $0x2a8] sm:%s195] %v374
                %v376 = vld [vmem:[%s202 + $0x4b0] sm:%s195]
                %377 = vst [vmem:[%s203 + $0x2b0] sm:%s195] %v376
                %v378 = vld [vmem:[%s202 + $0x4b8] sm:%s195]
                %379 = vst [vmem:[%s203 + $0x2b8] sm:%s195] %v378
                %v380 = vld [vmem:[%s202 + $0x4c0] sm:%s195]
                %381 = vst [vmem:[%s203 + $0x2c0] sm:%s195] %v380
                %v382 = vld [vmem:[%s202 + $0x4c8] sm:%s195]
                %383 = vst [vmem:[%s203 + $0x2c8] sm:%s195] %v382
                %v384 = vld [vmem:[%s202 + $0x4d0] sm:%s195]
                %385 = vst [vmem:[%s203 + $0x2d0] sm:%s195] %v384
                %v386 = vld [vmem:[%s202 + $0x4d8] sm:%s195]
                %387 = vst [vmem:[%s203 + $0x2d8] sm:%s195] %v386
                %v388 = vld [vmem:[%s202 + $0x4e0] sm:%s195]
                %389 = vst [vmem:[%s203 + $0x2e0] sm:%s195] %v388
                %v390 = vld [vmem:[%s202 + $0x4e8] sm:%s195]
                %391 = vst [vmem:[%s203 + $0x2e8] sm:%s195] %v390
                %v392 = vld [vmem:[%s202 + $0x4f0] sm:%s195]
                %393 = vst [vmem:[%s203 + $0x2f0] sm:%s195] %v392
                %v394 = vld [vmem:[%s202 + $0x4f8] sm:%s195]
                %395 = vst [vmem:[%s203 + $0x2f8] sm:%s195] %v394
                %v396 = vld [vmem:[%s202 + $0x600] sm:%s195]
                %397 = vst [vmem:[%s203 + $0x300] sm:%s195] %v396
                %v398 = vld [vmem:[%s202 + $0x608] sm:%s195]
                %399 = vst [vmem:[%s203 + $0x308] sm:%s195] %v398
                %v400 = vld [vmem:[%s202 + $0x610] sm:%s195]
                %401 = vst [vmem:[%s203 + $0x310] sm:%s195] %v400
                %v402 = vld [vmem:[%s202 + $0x618] sm:%s195]
                %403 = vst [vmem:[%s203 + $0x318] sm:%s195] %v402
                %v404 = vld [vmem:[%s202 + $0x620] sm:%s195]
                %405 = vst [vmem:[%s203 + $0x320] sm:%s195] %v404
                %v406 = vld [vmem:[%s202 + $0x628] sm:%s195]
                %407 = vst [vmem:[%s203 + $0x328] sm:%s195] %v406
                %v408 = vld [vmem:[%s202 + $0x630] sm:%s195]
                %409 = vst [vmem:[%s203 + $0x330] sm:%s195] %v408
                %v410 = vld [vmem:[%s202 + $0x638] sm:%s195]
                %411 = vst [vmem:[%s203 + $0x338] sm:%s195] %v410
                %v412 = vld [vmem:[%s202 + $0x640] sm:%s195]
                %413 = vst [vmem:[%s203 + $0x340] sm:%s195] %v412
                %v414 = vld [vmem:[%s202 + $0x648] sm:%s195]
                %415 = vst [vmem:[%s203 + $0x348] sm:%s195] %v414
                %v416 = vld [vmem:[%s202 + $0x650] sm:%s195]
                %417 = vst [vmem:[%s203 + $0x350] sm:%s195] %v416
                %v418 = vld [vmem:[%s202 + $0x658] sm:%s195]
                %419 = vst [vmem:[%s203 + $0x358] sm:%s195] %v418
                %v420 = vld [vmem:[%s202 + $0x660] sm:%s195]
                %421 = vst [vmem:[%s203 + $0x360] sm:%s195] %v420
                %v422 = vld [vmem:[%s202 + $0x668] sm:%s195]
                %423 = vst [vmem:[%s203 + $0x368] sm:%s195] %v422
                %v424 = vld [vmem:[%s202 + $0x670] sm:%s195]
                %425 = vst [vmem:[%s203 + $0x370] sm:%s195] %v424
                %v426 = vld [vmem:[%s202 + $0x678] sm:%s195]
                %427 = vst [vmem:[%s203 + $0x378] sm:%s195] %v426
                %v428 = vld [vmem:[%s202 + $0x680] sm:%s195]
                %429 = vst [vmem:[%s203 + $0x380] sm:%s195] %v428
                %v430 = vld [vmem:[%s202 + $0x688] sm:%s195]
                %431 = vst [vmem:[%s203 + $0x388] sm:%s195] %v430
                %v432 = vld [vmem:[%s202 + $0x690] sm:%s195]
                %433 = vst [vmem:[%s203 + $0x390] sm:%s195] %v432
                %v434 = vld [vmem:[%s202 + $0x698] sm:%s195]
                %435 = vst [vmem:[%s203 + $0x398] sm:%s195] %v434
                %v436 = vld [vmem:[%s202 + $0x6a0] sm:%s195]
                %437 = vst [vmem:[%s203 + $0x3a0] sm:%s195] %v436
                %v438 = vld [vmem:[%s202 + $0x6a8] sm:%s195]
                %439 = vst [vmem:[%s203 + $0x3a8] sm:%s195] %v438
                %v440 = vld [vmem:[%s202 + $0x6b0] sm:%s195]
                %441 = vst [vmem:[%s203 + $0x3b0] sm:%s195] %v440
                %v442 = vld [vmem:[%s202 + $0x6b8] sm:%s195]
                %443 = vst [vmem:[%s203 + $0x3b8] sm:%s195] %v442
                %v444 = vld [vmem:[%s202 + $0x6c0] sm:%s195]
                %445 = vst [vmem:[%s203 + $0x3c0] sm:%s195] %v444
                %v446 = vld [vmem:[%s202 + $0x6c8] sm:%s195]
                %447 = vst [vmem:[%s203 + $0x3c8] sm:%s195] %v446
                %v448 = vld [vmem:[%s202 + $0x6d0] sm:%s195]
                %449 = vst [vmem:[%s203 + $0x3d0] sm:%s195] %v448
                %v450 = vld [vmem:[%s202 + $0x6d8] sm:%s195]
                %451 = vst [vmem:[%s203 + $0x3d8] sm:%s195] %v450
                %v452 = vld [vmem:[%s202 + $0x6e0] sm:%s195]
                %453 = vst [vmem:[%s203 + $0x3e0] sm:%s195] %v452
                %v454 = vld [vmem:[%s202 + $0x6e8] sm:%s195]
                %455 = vst [vmem:[%s203 + $0x3e8] sm:%s195] %v454
                %v456 = vld [vmem:[%s202 + $0x6f0] sm:%s195]
                %457 = vst [vmem:[%s203 + $0x3f0] sm:%s195] %v456
                %v458 = vld [vmem:[%s202 + $0x6f8] sm:%s195]
                %459 = vst [vmem:[%s203 + $0x3f8] sm:%s195] %v458
                %v460 = vld [vmem:[%s202 + $0x800] sm:%s195]
                %461 = vst [vmem:[%s203 + $0x400] sm:%s195] %v460
                %v462 = vld [vmem:[%s202 + $0x808] sm:%s195]
                %463 = vst [vmem:[%s203 + $0x408] sm:%s195] %v462
                %v464 = vld [vmem:[%s202 + $0x810] sm:%s195]
                %465 = vst [vmem:[%s203 + $0x410] sm:%s195] %v464
                %v466 = vld [vmem:[%s202 + $0x818] sm:%s195]
                %467 = vst [vmem:[%s203 + $0x418] sm:%s195] %v466
                %v468 = vld [vmem:[%s202 + $0x820] sm:%s195]
                %469 = vst [vmem:[%s203 + $0x420] sm:%s195] %v468
                %v470 = vld [vmem:[%s202 + $0x828] sm:%s195]
                %471 = vst [vmem:[%s203 + $0x428] sm:%s195] %v470
                %v472 = vld [vmem:[%s202 + $0x830] sm:%s195]
                %473 = vst [vmem:[%s203 + $0x430] sm:%s195] %v472
                %v474 = vld [vmem:[%s202 + $0x838] sm:%s195]
                %475 = vst [vmem:[%s203 + $0x438] sm:%s195] %v474
                %v476 = vld [vmem:[%s202 + $0x840] sm:%s195]
                %477 = vst [vmem:[%s203 + $0x440] sm:%s195] %v476
                %v478 = vld [vmem:[%s202 + $0x848] sm:%s195]
                %479 = vst [vmem:[%s203 + $0x448] sm:%s195] %v478
                %v480 = vld [vmem:[%s202 + $0x850] sm:%s195]
                %481 = vst [vmem:[%s203 + $0x450] sm:%s195] %v480
                %v482 = vld [vmem:[%s202 + $0x858] sm:%s195]
                %483 = vst [vmem:[%s203 + $0x458] sm:%s195] %v482
                %v484 = vld [vmem:[%s202 + $0x860] sm:%s195]
                %485 = vst [vmem:[%s203 + $0x460] sm:%s195] %v484
                %v486 = vld [vmem:[%s202 + $0x868] sm:%s195]
                %487 = vst [vmem:[%s203 + $0x468] sm:%s195] %v486
                %v488 = vld [vmem:[%s202 + $0x870] sm:%s195]
                %489 = vst [vmem:[%s203 + $0x470] sm:%s195] %v488
                %v490 = vld [vmem:[%s202 + $0x878] sm:%s195]
                %491 = vst [vmem:[%s203 + $0x478] sm:%s195] %v490
                %v492 = vld [vmem:[%s202 + $0x880] sm:%s195]
                %493 = vst [vmem:[%s203 + $0x480] sm:%s195] %v492
                %v494 = vld [vmem:[%s202 + $0x888] sm:%s195]
                %495 = vst [vmem:[%s203 + $0x488] sm:%s195] %v494
                %v496 = vld [vmem:[%s202 + $0x890] sm:%s195]
                %497 = vst [vmem:[%s203 + $0x490] sm:%s195] %v496
                %v498 = vld [vmem:[%s202 + $0x898] sm:%s195]
                %499 = vst [vmem:[%s203 + $0x498] sm:%s195] %v498
                %v500 = vld [vmem:[%s202 + $0x8a0] sm:%s195]
                %501 = vst [vmem:[%s203 + $0x4a0] sm:%s195] %v500
                %v502 = vld [vmem:[%s202 + $0x8a8] sm:%s195]
                %503 = vst [vmem:[%s203 + $0x4a8] sm:%s195] %v502
                %v504 = vld [vmem:[%s202 + $0x8b0] sm:%s195]
                %505 = vst [vmem:[%s203 + $0x4b0] sm:%s195] %v504
                %v506 = vld [vmem:[%s202 + $0x8b8] sm:%s195]
                %507 = vst [vmem:[%s203 + $0x4b8] sm:%s195] %v506
                %v508 = vld [vmem:[%s202 + $0x8c0] sm:%s195]
                %509 = vst [vmem:[%s203 + $0x4c0] sm:%s195] %v508
                %v510 = vld [vmem:[%s202 + $0x8c8] sm:%s195]
                %511 = vst [vmem:[%s203 + $0x4c8] sm:%s195] %v510
                %v512 = vld [vmem:[%s202 + $0x8d0] sm:%s195]
                %513 = vst [vmem:[%s203 + $0x4d0] sm:%s195] %v512
                %v514 = vld [vmem:[%s202 + $0x8d8] sm:%s195]
                %515 = vst [vmem:[%s203 + $0x4d8] sm:%s195] %v514
                %v516 = vld [vmem:[%s202 + $0x8e0] sm:%s195]
                %517 = vst [vmem:[%s203 + $0x4e0] sm:%s195] %v516
                %v518 = vld [vmem:[%s202 + $0x8e8] sm:%s195]
                %519 = vst [vmem:[%s203 + $0x4e8] sm:%s195] %v518
                %v520 = vld [vmem:[%s202 + $0x8f0] sm:%s195]
                %521 = vst [vmem:[%s203 + $0x4f0] sm:%s195] %v520
                %v522 = vld [vmem:[%s202 + $0x8f8] sm:%s195]
                %523 = vst [vmem:[%s203 + $0x4f8] sm:%s195] %v522
                %v524 = vld [vmem:[%s202 + $0xa00] sm:%s195]
                %525 = vst [vmem:[%s203 + $0x500] sm:%s195] %v524
                %v526 = vld [vmem:[%s202 + $0xa08] sm:%s195]
                %527 = vst [vmem:[%s203 + $0x508] sm:%s195] %v526
                %v528 = vld [vmem:[%s202 + $0xa10] sm:%s195]
                %529 = vst [vmem:[%s203 + $0x510] sm:%s195] %v528
                %v530 = vld [vmem:[%s202 + $0xa18] sm:%s195]
                %531 = vst [vmem:[%s203 + $0x518] sm:%s195] %v530
                %v532 = vld [vmem:[%s202 + $0xa20] sm:%s195]
                %533 = vst [vmem:[%s203 + $0x520] sm:%s195] %v532
                %v534 = vld [vmem:[%s202 + $0xa28] sm:%s195]
                %535 = vst [vmem:[%s203 + $0x528] sm:%s195] %v534
                %v536 = vld [vmem:[%s202 + $0xa30] sm:%s195]
                %537 = vst [vmem:[%s203 + $0x530] sm:%s195] %v536
                %v538 = vld [vmem:[%s202 + $0xa38] sm:%s195]
                %539 = vst [vmem:[%s203 + $0x538] sm:%s195] %v538
                %v540 = vld [vmem:[%s202 + $0xa40] sm:%s195]
                %541 = vst [vmem:[%s203 + $0x540] sm:%s195] %v540
                %v542 = vld [vmem:[%s202 + $0xa48] sm:%s195]
                %543 = vst [vmem:[%s203 + $0x548] sm:%s195] %v542
                %v544 = vld [vmem:[%s202 + $0xa50] sm:%s195]
                %545 = vst [vmem:[%s203 + $0x550] sm:%s195] %v544
                %v546 = vld [vmem:[%s202 + $0xa58] sm:%s195]
                %547 = vst [vmem:[%s203 + $0x558] sm:%s195] %v546
                %v548 = vld [vmem:[%s202 + $0xa60] sm:%s195]
                %549 = vst [vmem:[%s203 + $0x560] sm:%s195] %v548
                %v550 = vld [vmem:[%s202 + $0xa68] sm:%s195]
                %551 = vst [vmem:[%s203 + $0x568] sm:%s195] %v550
                %v552 = vld [vmem:[%s202 + $0xa70] sm:%s195]
                %553 = vst [vmem:[%s203 + $0x570] sm:%s195] %v552
                %v554 = vld [vmem:[%s202 + $0xa78] sm:%s195]
                %555 = vst [vmem:[%s203 + $0x578] sm:%s195] %v554
                %v556 = vld [vmem:[%s202 + $0xa80] sm:%s195]
                %557 = vst [vmem:[%s203 + $0x580] sm:%s195] %v556
                %v558 = vld [vmem:[%s202 + $0xa88] sm:%s195]
                %559 = vst [vmem:[%s203 + $0x588] sm:%s195] %v558
                %v560 = vld [vmem:[%s202 + $0xa90] sm:%s195]
                %561 = vst [vmem:[%s203 + $0x590] sm:%s195] %v560
                %v562 = vld [vmem:[%s202 + $0xa98] sm:%s195]
                %563 = vst [vmem:[%s203 + $0x598] sm:%s195] %v562
                %v564 = vld [vmem:[%s202 + $0xaa0] sm:%s195]
                %565 = vst [vmem:[%s203 + $0x5a0] sm:%s195] %v564
                %v566 = vld [vmem:[%s202 + $0xaa8] sm:%s195]
                %567 = vst [vmem:[%s203 + $0x5a8] sm:%s195] %v566
                %v568 = vld [vmem:[%s202 + $0xab0] sm:%s195]
                %569 = vst [vmem:[%s203 + $0x5b0] sm:%s195] %v568
                %v570 = vld [vmem:[%s202 + $0xab8] sm:%s195]
                %571 = vst [vmem:[%s203 + $0x5b8] sm:%s195] %v570
                %v572 = vld [vmem:[%s202 + $0xac0] sm:%s195]
                %573 = vst [vmem:[%s203 + $0x5c0] sm:%s195] %v572
                %v574 = vld [vmem:[%s202 + $0xac8] sm:%s195]
                %575 = vst [vmem:[%s203 + $0x5c8] sm:%s195] %v574
                %v576 = vld [vmem:[%s202 + $0xad0] sm:%s195]
                %577 = vst [vmem:[%s203 + $0x5d0] sm:%s195] %v576
                %v578 = vld [vmem:[%s202 + $0xad8] sm:%s195]
                %579 = vst [vmem:[%s203 + $0x5d8] sm:%s195] %v578
                %v580 = vld [vmem:[%s202 + $0xae0] sm:%s195]
                %581 = vst [vmem:[%s203 + $0x5e0] sm:%s195] %v580
                %v582 = vld [vmem:[%s202 + $0xae8] sm:%s195]
                %583 = vst [vmem:[%s203 + $0x5e8] sm:%s195] %v582
                %v584 = vld [vmem:[%s202 + $0xaf0] sm:%s195]
                %585 = vst [vmem:[%s203 + $0x5f0] sm:%s195] %v584
                %v586 = vld [vmem:[%s202 + $0xaf8] sm:%s195]
                %587 = vst [vmem:[%s203 + $0x5f8] sm:%s195] %v586
                %v588 = vld [vmem:[%s202 + $0xc00] sm:%s195]
                %589 = vst [vmem:[%s203 + $0x600] sm:%s195] %v588
                %v590 = vld [vmem:[%s202 + $0xc08] sm:%s195]
                %591 = vst [vmem:[%s203 + $0x608] sm:%s195] %v590
                %v592 = vld [vmem:[%s202 + $0xc10] sm:%s195]
                %593 = vst [vmem:[%s203 + $0x610] sm:%s195] %v592
                %v594 = vld [vmem:[%s202 + $0xc18] sm:%s195]
                %595 = vst [vmem:[%s203 + $0x618] sm:%s195] %v594
                %v596 = vld [vmem:[%s202 + $0xc20] sm:%s195]
                %597 = vst [vmem:[%s203 + $0x620] sm:%s195] %v596
                %v598 = vld [vmem:[%s202 + $0xc28] sm:%s195]
                %599 = vst [vmem:[%s203 + $0x628] sm:%s195] %v598
                %v600 = vld [vmem:[%s202 + $0xc30] sm:%s195]
                %601 = vst [vmem:[%s203 + $0x630] sm:%s195] %v600
                %v602 = vld [vmem:[%s202 + $0xc38] sm:%s195]
                %603 = vst [vmem:[%s203 + $0x638] sm:%s195] %v602
                %v604 = vld [vmem:[%s202 + $0xc40] sm:%s195]
                %605 = vst [vmem:[%s203 + $0x640] sm:%s195] %v604
                %v606 = vld [vmem:[%s202 + $0xc48] sm:%s195]
                %607 = vst [vmem:[%s203 + $0x648] sm:%s195] %v606
                %v608 = vld [vmem:[%s202 + $0xc50] sm:%s195]
                %609 = vst [vmem:[%s203 + $0x650] sm:%s195] %v608
                %v610 = vld [vmem:[%s202 + $0xc58] sm:%s195]
                %611 = vst [vmem:[%s203 + $0x658] sm:%s195] %v610
                %v612 = vld [vmem:[%s202 + $0xc60] sm:%s195]
                %613 = vst [vmem:[%s203 + $0x660] sm:%s195] %v612
                %v614 = vld [vmem:[%s202 + $0xc68] sm:%s195]
                %615 = vst [vmem:[%s203 + $0x668] sm:%s195] %v614
                %v616 = vld [vmem:[%s202 + $0xc70] sm:%s195]
                %617 = vst [vmem:[%s203 + $0x670] sm:%s195] %v616
                %v618 = vld [vmem:[%s202 + $0xc78] sm:%s195]
                %619 = vst [vmem:[%s203 + $0x678] sm:%s195] %v618
                %v620 = vld [vmem:[%s202 + $0xc80] sm:%s195]
                %621 = vst [vmem:[%s203 + $0x680] sm:%s195] %v620
                %v622 = vld [vmem:[%s202 + $0xc88] sm:%s195]
                %623 = vst [vmem:[%s203 + $0x688] sm:%s195] %v622
                %v624 = vld [vmem:[%s202 + $0xc90] sm:%s195]
                %625 = vst [vmem:[%s203 + $0x690] sm:%s195] %v624
                %v626 = vld [vmem:[%s202 + $0xc98] sm:%s195]
                %627 = vst [vmem:[%s203 + $0x698] sm:%s195] %v626
                %v628 = vld [vmem:[%s202 + $0xca0] sm:%s195]
                %629 = vst [vmem:[%s203 + $0x6a0] sm:%s195] %v628
                %v630 = vld [vmem:[%s202 + $0xca8] sm:%s195]
                %631 = vst [vmem:[%s203 + $0x6a8] sm:%s195] %v630
                %v632 = vld [vmem:[%s202 + $0xcb0] sm:%s195]
                %633 = vst [vmem:[%s203 + $0x6b0] sm:%s195] %v632
                %v634 = vld [vmem:[%s202 + $0xcb8] sm:%s195]
                %635 = vst [vmem:[%s203 + $0x6b8] sm:%s195] %v634
                %v636 = vld [vmem:[%s202 + $0xcc0] sm:%s195]
                %637 = vst [vmem:[%s203 + $0x6c0] sm:%s195] %v636
                %v638 = vld [vmem:[%s202 + $0xcc8] sm:%s195]
                %639 = vst [vmem:[%s203 + $0x6c8] sm:%s195] %v638
                %v640 = vld [vmem:[%s202 + $0xcd0] sm:%s195]
                %641 = vst [vmem:[%s203 + $0x6d0] sm:%s195] %v640
                %v642 = vld [vmem:[%s202 + $0xcd8] sm:%s195]
                %643 = vst [vmem:[%s203 + $0x6d8] sm:%s195] %v642
                %v644 = vld [vmem:[%s202 + $0xce0] sm:%s195]
                %645 = vst [vmem:[%s203 + $0x6e0] sm:%s195] %v644
                %v646 = vld [vmem:[%s202 + $0xce8] sm:%s195]
                %647 = vst [vmem:[%s203 + $0x6e8] sm:%s195] %v646
                %v648 = vld [vmem:[%s202 + $0xcf0] sm:%s195]
                %649 = vst [vmem:[%s203 + $0x6f0] sm:%s195] %v648
                %v650 = vld [vmem:[%s202 + $0xcf8] sm:%s195]
                %651 = vst [vmem:[%s203 + $0x6f8] sm:%s195] %v650
                %v652 = vld [vmem:[%s202 + $0xe00] sm:%s195]
                %653 = vst [vmem:[%s203 + $0x700] sm:%s195] %v652
                %v654 = vld [vmem:[%s202 + $0xe08] sm:%s195]
                %655 = vst [vmem:[%s203 + $0x708] sm:%s195] %v654
                %v656 = vld [vmem:[%s202 + $0xe10] sm:%s195]
                %657 = vst [vmem:[%s203 + $0x710] sm:%s195] %v656
                %v658 = vld [vmem:[%s202 + $0xe18] sm:%s195]
                %659 = vst [vmem:[%s203 + $0x718] sm:%s195] %v658
                %v660 = vld [vmem:[%s202 + $0xe20] sm:%s195]
                %661 = vst [vmem:[%s203 + $0x720] sm:%s195] %v660
                %v662 = vld [vmem:[%s202 + $0xe28] sm:%s195]
                %663 = vst [vmem:[%s203 + $0x728] sm:%s195] %v662
                %v664 = vld [vmem:[%s202 + $0xe30] sm:%s195]
                %665 = vst [vmem:[%s203 + $0x730] sm:%s195] %v664
                %v666 = vld [vmem:[%s202 + $0xe38] sm:%s195]
                %667 = vst [vmem:[%s203 + $0x738] sm:%s195] %v666
                %v668 = vld [vmem:[%s202 + $0xe40] sm:%s195]
                %669 = vst [vmem:[%s203 + $0x740] sm:%s195] %v668
                %v670 = vld [vmem:[%s202 + $0xe48] sm:%s195]
                %671 = vst [vmem:[%s203 + $0x748] sm:%s195] %v670
                %v672 = vld [vmem:[%s202 + $0xe50] sm:%s195]
                %673 = vst [vmem:[%s203 + $0x750] sm:%s195] %v672
                %v674 = vld [vmem:[%s202 + $0xe58] sm:%s195]
                %675 = vst [vmem:[%s203 + $0x758] sm:%s195] %v674
                %v676 = vld [vmem:[%s202 + $0xe60] sm:%s195]
                %677 = vst [vmem:[%s203 + $0x760] sm:%s195] %v676
                %v678 = vld [vmem:[%s202 + $0xe68] sm:%s195]
                %679 = vst [vmem:[%s203 + $0x768] sm:%s195] %v678
                %v680 = vld [vmem:[%s202 + $0xe70] sm:%s195]
                %681 = vst [vmem:[%s203 + $0x770] sm:%s195] %v680
                %v682 = vld [vmem:[%s202 + $0xe78] sm:%s195]
                %683 = vst [vmem:[%s203 + $0x778] sm:%s195] %v682
                %v684 = vld [vmem:[%s202 + $0xe80] sm:%s195]
                %685 = vst [vmem:[%s203 + $0x780] sm:%s195] %v684
                %v686 = vld [vmem:[%s202 + $0xe88] sm:%s195]
                %687 = vst [vmem:[%s203 + $0x788] sm:%s195] %v686
                %v688 = vld [vmem:[%s202 + $0xe90] sm:%s195]
                %689 = vst [vmem:[%s203 + $0x790] sm:%s195] %v688
                %v690 = vld [vmem:[%s202 + $0xe98] sm:%s195]
                %691 = vst [vmem:[%s203 + $0x798] sm:%s195] %v690
                %v692 = vld [vmem:[%s202 + $0xea0] sm:%s195]
                %693 = vst [vmem:[%s203 + $0x7a0] sm:%s195] %v692
                %v694 = vld [vmem:[%s202 + $0xea8] sm:%s195]
                %695 = vst [vmem:[%s203 + $0x7a8] sm:%s195] %v694
                %v696 = vld [vmem:[%s202 + $0xeb0] sm:%s195]
                %697 = vst [vmem:[%s203 + $0x7b0] sm:%s195] %v696
                %v698 = vld [vmem:[%s202 + $0xeb8] sm:%s195]
                %699 = vst [vmem:[%s203 + $0x7b8] sm:%s195] %v698
                %v700 = vld [vmem:[%s202 + $0xec0] sm:%s195]
                %701 = vst [vmem:[%s203 + $0x7c0] sm:%s195] %v700
                %v702 = vld [vmem:[%s202 + $0xec8] sm:%s195]
                %703 = vst [vmem:[%s203 + $0x7c8] sm:%s195] %v702
                %v704 = vld [vmem:[%s202 + $0xed0] sm:%s195]
                %705 = vst [vmem:[%s203 + $0x7d0] sm:%s195] %v704
                %v706 = vld [vmem:[%s202 + $0xed8] sm:%s195]
                %707 = vst [vmem:[%s203 + $0x7d8] sm:%s195] %v706
                %v708 = vld [vmem:[%s202 + $0xee0] sm:%s195]
                %709 = vst [vmem:[%s203 + $0x7e0] sm:%s195] %v708
                %v710 = vld [vmem:[%s202 + $0xee8] sm:%s195]
                %711 = vst [vmem:[%s203 + $0x7e8] sm:%s195] %v710
                %v712 = vld [vmem:[%s202 + $0xef0] sm:%s195]
                %713 = vst [vmem:[%s203 + $0x7f0] sm:%s195] %v712
                %v714 = vld [vmem:[%s202 + $0xef8] sm:%s195]
                %715 = vst [vmem:[%s203 + $0x7f8] sm:%s195] %v714
                %v716 = vld [vmem:[%s202 + $0x1000] sm:%s195]
                %717 = vst [vmem:[%s203 + $0x800] sm:%s195] %v716
                %v718 = vld [vmem:[%s202 + $0x1008] sm:%s195]
                %719 = vst [vmem:[%s203 + $0x808] sm:%s195] %v718
                %v720 = vld [vmem:[%s202 + $0x1010] sm:%s195]
                %721 = vst [vmem:[%s203 + $0x810] sm:%s195] %v720
                %v722 = vld [vmem:[%s202 + $0x1018] sm:%s195]
                %723 = vst [vmem:[%s203 + $0x818] sm:%s195] %v722
                %v724 = vld [vmem:[%s202 + $0x1020] sm:%s195]
                %725 = vst [vmem:[%s203 + $0x820] sm:%s195] %v724
                %v726 = vld [vmem:[%s202 + $0x1028] sm:%s195]
                %727 = vst [vmem:[%s203 + $0x828] sm:%s195] %v726
                %v728 = vld [vmem:[%s202 + $0x1030] sm:%s195]
                %729 = vst [vmem:[%s203 + $0x830] sm:%s195] %v728
                %v730 = vld [vmem:[%s202 + $0x1038] sm:%s195]
                %731 = vst [vmem:[%s203 + $0x838] sm:%s195] %v730
                %v732 = vld [vmem:[%s202 + $0x1040] sm:%s195]
                %733 = vst [vmem:[%s203 + $0x840] sm:%s195] %v732
                %v734 = vld [vmem:[%s202 + $0x1048] sm:%s195]
                %735 = vst [vmem:[%s203 + $0x848] sm:%s195] %v734
                %v736 = vld [vmem:[%s202 + $0x1050] sm:%s195]
                %737 = vst [vmem:[%s203 + $0x850] sm:%s195] %v736
                %v738 = vld [vmem:[%s202 + $0x1058] sm:%s195]
                %739 = vst [vmem:[%s203 + $0x858] sm:%s195] %v738
                %v740 = vld [vmem:[%s202 + $0x1060] sm:%s195]
                %741 = vst [vmem:[%s203 + $0x860] sm:%s195] %v740
                %v742 = vld [vmem:[%s202 + $0x1068] sm:%s195]
                %743 = vst [vmem:[%s203 + $0x868] sm:%s195] %v742
                %v744 = vld [vmem:[%s202 + $0x1070] sm:%s195]
                %745 = vst [vmem:[%s203 + $0x870] sm:%s195] %v744
                %v746 = vld [vmem:[%s202 + $0x1078] sm:%s195]
                %747 = vst [vmem:[%s203 + $0x878] sm:%s195] %v746
                %v748 = vld [vmem:[%s202 + $0x1080] sm:%s195]
                %749 = vst [vmem:[%s203 + $0x880] sm:%s195] %v748
                %v750 = vld [vmem:[%s202 + $0x1088] sm:%s195]
                %751 = vst [vmem:[%s203 + $0x888] sm:%s195] %v750
                %v752 = vld [vmem:[%s202 + $0x1090] sm:%s195]
                %753 = vst [vmem:[%s203 + $0x890] sm:%s195] %v752
                %v754 = vld [vmem:[%s202 + $0x1098] sm:%s195]
                %755 = vst [vmem:[%s203 + $0x898] sm:%s195] %v754
                %v756 = vld [vmem:[%s202 + $0x10a0] sm:%s195]
                %757 = vst [vmem:[%s203 + $0x8a0] sm:%s195] %v756
                %v758 = vld [vmem:[%s202 + $0x10a8] sm:%s195]
                %759 = vst [vmem:[%s203 + $0x8a8] sm:%s195] %v758
                %v760 = vld [vmem:[%s202 + $0x10b0] sm:%s195]
                %761 = vst [vmem:[%s203 + $0x8b0] sm:%s195] %v760
                %v762 = vld [vmem:[%s202 + $0x10b8] sm:%s195]
                %763 = vst [vmem:[%s203 + $0x8b8] sm:%s195] %v762
                %v764 = vld [vmem:[%s202 + $0x10c0] sm:%s195]
                %765 = vst [vmem:[%s203 + $0x8c0] sm:%s195] %v764
                %v766 = vld [vmem:[%s202 + $0x10c8] sm:%s195]
                %767 = vst [vmem:[%s203 + $0x8c8] sm:%s195] %v766
                %v768 = vld [vmem:[%s202 + $0x10d0] sm:%s195]
                %769 = vst [vmem:[%s203 + $0x8d0] sm:%s195] %v768
                %v770 = vld [vmem:[%s202 + $0x10d8] sm:%s195]
                %771 = vst [vmem:[%s203 + $0x8d8] sm:%s195] %v770
                %v772 = vld [vmem:[%s202 + $0x10e0] sm:%s195]
                %773 = vst [vmem:[%s203 + $0x8e0] sm:%s195] %v772
                %v774 = vld [vmem:[%s202 + $0x10e8] sm:%s195]
                %775 = vst [vmem:[%s203 + $0x8e8] sm:%s195] %v774
                %v776 = vld [vmem:[%s202 + $0x10f0] sm:%s195]
                %777 = vst [vmem:[%s203 + $0x8f0] sm:%s195] %v776
                %v778 = vld [vmem:[%s202 + $0x10f8] sm:%s195]
                %779 = vst [vmem:[%s203 + $0x8f8] sm:%s195] %v778
              $region53: #{learning_to_downsample.4} parent=47 // loop_footer
                %s201 = sadd.s32 1, %s197
              $region54: #{learning_to_downsample.4} parent=47 // loop_footer_branch
                %196 = sbr.rel target = $region50
              $region55: #{learning_to_downsample.4} parent=47 // loop_exit
                _
            $region48: #{learning_to_downsample.4} parent=39 // pred_fallthru
              _
          $region40: #{learning_to_downsample.4} parent=35 // pred_fallthru
            _
          %1368 = vnop
        $region36: #{learning_to_downsample.4} parent=31 // pred_fallthru
          _
      $region32: #{learning_to_downsample.4} parent=5 // pred_fallthru
        _
      %p1369 = scmp.le.s32.totalorder 1, %s11
      %p1370 = scmp.lt.s32.totalorder %s11, 3
      %p1371 = pnand %p1369, %p1370
      %p1372 = pneg %p1371
      // Predicated region
      $region71: #{learning_to_downsample.4} parent=5 // pred_check
        _
      $region72: #{learning_to_downsample.4} parent=5 // pred_check_branch
        %1374 = sbr.rel (%p1371) target = $region74
      $region73: #{learning_to_downsample.4} parent=5 // pred_region
        %s1375 = ssub.s32 %s11, 1
        %s1376 = sand.u32 %s24, 1
        %s1377 = sand.u32 %s24, 1
        %s1378 = smul.addr %s1377, 2304
        %s1379 = scalar_lea.vmem [#allocation2], %s1378
        // Predicated region
        $region75: #{learning_to_downsample.4} parent=73 // pred_check
          %p1380 = pneg %p37
        $region76: #{learning_to_downsample.4} parent=73 // pred_check_branch
          %1382 = sbr.rel (%p1380) target = $region78
        $region77: #{learning_to_downsample.4} parent=73 // pred_region
          _
        $region78: #{learning_to_downsample.4} parent=73 // pred_fallthru
          _
        %s1383 = sand.u32 %s24, 1
        %s1384 = sand.u32 %s24, 1
        %s1385 = smul.addr %s1384, 2304
        %s1386 = scalar_lea.vmem [#allocation2], %s1385
        %p1387 = pneg %p37
        %p1388 = pneg %p34
        %p1389 = pneg %p58
        %p1390 = pneg %p55
        %p1391 = pneg %p79
        %p1392 = pneg %p76
        %p1393 = pneg %p100
        %p1394 = pneg %p97
        %p1395 = pneg %p121
        %p1396 = pneg %p118
        %p1397 = pneg %p147
        %p1398 = pneg %p144
        %s1399 = smul.u32 32, %s16
        %p1400 = scmp.lt.s32.totalorder %s1399, 63
        %s1401 = scalar_select %p1400, %s1399, 63
        %s1402 = smul.addr %s1401, 8
        %s1403 = scalar_lea.vmem %s5, %s1402
        %s1404 = smul.u32 32, %s16
        %s1405 = smul.u32 32, %s16
        %p1406 = scmp.lt.s32.totalorder %s1405, 63
        %s1407 = scalar_select %p1406, %s1405, 63
        %s1408 = smul.addr %s1407, 8
        %s1409 = scalar_lea.vmem %s5, %s1408
        %s1410 = smul.u32 32, %s16
        %v1412 = vld [vmem:[%s1379] sm:$0xff]
        %v1413 = vld [vmem:[%s1379 + $0x8] sm:$0xff]
        %v1414 = vld [vmem:[%s1379 + $0x10] sm:$0xff]
        %v1415 = vld [vmem:[%s1379 + $0x18] sm:$0xff]
        %v1416 = vld [vmem:[%s1379 + $0x20] sm:$0xff]
        %v1417 = vld [vmem:[%s1379 + $0x28] sm:$0xff]
        %v1418 = vld [vmem:[%s1379 + $0x30] sm:$0xff]
        %v1419 = vld [vmem:[%s1379 + $0x38] sm:$0xff]
        %v1420 = vld [vmem:[%s1379 + $0x40] sm:$0xff]
        %v1421 = vld [vmem:[%s1379 + $0x48] sm:$0xff]
        %v1422 = vld [vmem:[%s1379 + $0x50] sm:$0xff]
        %v1423 = vld [vmem:[%s1379 + $0x58] sm:$0xff]
        %v1424 = vld [vmem:[%s1379 + $0x60] sm:$0xff]
        %v1425 = vld [vmem:[%s1379 + $0x68] sm:$0xff]
        %v1426 = vld [vmem:[%s1379 + $0x70] sm:$0xff]
        %v1427 = vld [vmem:[%s1379 + $0x78] sm:$0xff]
        %v1428 = vld [vmem:[%s1379 + $0x80] sm:$0xff]
        %v1429 = vld [vmem:[%s1379 + $0x88] sm:$0xff]
        %v1430 = vld [vmem:[%s1379 + $0x90] sm:$0xff]
        %v1431 = vld [vmem:[%s1379 + $0x98] sm:$0xff]
        %v1432 = vld [vmem:[%s1379 + $0xa0] sm:$0xff]
        %v1433 = vld [vmem:[%s1379 + $0xa8] sm:$0xff]
        %v1434 = vld [vmem:[%s1379 + $0xb0] sm:$0xff]
        %v1435 = vld [vmem:[%s1379 + $0xb8] sm:$0xff]
        %v1436 = vld [vmem:[%s1379 + $0xc0] sm:$0xff]
        %v1437 = vld [vmem:[%s1379 + $0xc8] sm:$0xff]
        %v1438 = vld [vmem:[%s1379 + $0xd0] sm:$0xff]
        %v1439 = vld [vmem:[%s1379 + $0xd8] sm:$0xff]
        %v1440 = vld [vmem:[%s1379 + $0xe0] sm:$0xff]
        %v1441 = vld [vmem:[%s1379 + $0xe8] sm:$0xff]
        %v1442 = vld [vmem:[%s1379 + $0xf0] sm:$0xff]
        %v1443 = vld [vmem:[%s1379 + $0xf8] sm:$0xff]
        %v1444 = vld [vmem:[%s1] sm:$0x1]
        %v1446 = vlaneseq
        %v1447 = vshrl.u32 %v1446, 7
        %v1448 = vsub.s32 0, %v1447
        %v1449 = vrot.slane %v1444, %v1448
        %v1451 = vmul.f32 %v1412, %v1449
        %v1452 = vmul.f32 %v1413, %v1449
        %v1453 = vmul.f32 %v1414, %v1449
        %v1454 = vmul.f32 %v1415, %v1449
        %v1455 = vmul.f32 %v1416, %v1449
        %v1456 = vmul.f32 %v1417, %v1449
        %v1457 = vmul.f32 %v1418, %v1449
        %v1458 = vmul.f32 %v1419, %v1449
        %v1459 = vmul.f32 %v1420, %v1449
        %v1460 = vmul.f32 %v1421, %v1449
        %v1461 = vmul.f32 %v1422, %v1449
        %v1462 = vmul.f32 %v1423, %v1449
        %v1463 = vmul.f32 %v1424, %v1449
        %v1464 = vmul.f32 %v1425, %v1449
        %v1465 = vmul.f32 %v1426, %v1449
        %v1466 = vmul.f32 %v1427, %v1449
        %v1467 = vmul.f32 %v1428, %v1449
        %v1468 = vmul.f32 %v1429, %v1449
        %v1469 = vmul.f32 %v1430, %v1449
        %v1470 = vmul.f32 %v1431, %v1449
        %v1471 = vmul.f32 %v1432, %v1449
        %v1472 = vmul.f32 %v1433, %v1449
        %v1473 = vmul.f32 %v1434, %v1449
        %v1474 = vmul.f32 %v1435, %v1449
        %v1475 = vmul.f32 %v1436, %v1449
        %v1476 = vmul.f32 %v1437, %v1449
        %v1477 = vmul.f32 %v1438, %v1449
        %v1478 = vmul.f32 %v1439, %v1449
        %v1479 = vmul.f32 %v1440, %v1449
        %v1480 = vmul.f32 %v1441, %v1449
        %v1481 = vmul.f32 %v1442, %v1449
        %v1482 = vmul.f32 %v1443, %v1449
        %s1483 = scalar_lea.vmem %s1379, 256 [#allocation2]
        %v1484 = vld [vmem:[%s1483] sm:$0xff]
        %v1485 = vld [vmem:[%s1483 + $0x8] sm:$0xff]
        %v1486 = vld [vmem:[%s1483 + $0x10] sm:$0xff]
        %v1487 = vld [vmem:[%s1483 + $0x18] sm:$0xff]
        %v1488 = vld [vmem:[%s1483 + $0x20] sm:$0xff]
        %v1489 = vld [vmem:[%s1483 + $0x28] sm:$0xff]
        %v1490 = vld [vmem:[%s1483 + $0x30] sm:$0xff]
        %v1491 = vld [vmem:[%s1483 + $0x38] sm:$0xff]
        %v1492 = vld [vmem:[%s1483 + $0x40] sm:$0xff]
        %v1493 = vld [vmem:[%s1483 + $0x48] sm:$0xff]
        %v1494 = vld [vmem:[%s1483 + $0x50] sm:$0xff]
        %v1495 = vld [vmem:[%s1483 + $0x58] sm:$0xff]
        %v1496 = vld [vmem:[%s1483 + $0x60] sm:$0xff]
        %v1497 = vld [vmem:[%s1483 + $0x68] sm:$0xff]
        %v1498 = vld [vmem:[%s1483 + $0x70] sm:$0xff]
        %v1499 = vld [vmem:[%s1483 + $0x78] sm:$0xff]
        %v1500 = vld [vmem:[%s1483 + $0x80] sm:$0xff]
        %v1501 = vld [vmem:[%s1483 + $0x88] sm:$0xff]
        %v1502 = vld [vmem:[%s1483 + $0x90] sm:$0xff]
        %v1503 = vld [vmem:[%s1483 + $0x98] sm:$0xff]
        %v1504 = vld [vmem:[%s1483 + $0xa0] sm:$0xff]
        %v1505 = vld [vmem:[%s1483 + $0xa8] sm:$0xff]
        %v1506 = vld [vmem:[%s1483 + $0xb0] sm:$0xff]
        %v1507 = vld [vmem:[%s1483 + $0xb8] sm:$0xff]
        %v1508 = vld [vmem:[%s1483 + $0xc0] sm:$0xff]
        %v1509 = vld [vmem:[%s1483 + $0xc8] sm:$0xff]
        %v1510 = vld [vmem:[%s1483 + $0xd0] sm:$0xff]
        %v1511 = vld [vmem:[%s1483 + $0xd8] sm:$0xff]
        %v1512 = vld [vmem:[%s1483 + $0xe0] sm:$0xff]
        %v1513 = vld [vmem:[%s1483 + $0xe8] sm:$0xff]
        %v1514 = vld [vmem:[%s1483 + $0xf0] sm:$0xff]
        %v1515 = vld [vmem:[%s1483 + $0xf8] sm:$0xff]
        %s1516 = scalar_lea.vmem %s1, 1
        %v1517 = vld [vmem:[%s1516] sm:$0x1]
        %v1519 = vlaneseq
        %v1520 = vshrl.u32 %v1519, 7
        %v1521 = vsub.s32 0, %v1520
        %v1522 = vrot.slane %v1517, %v1521
        %v1524 = vmul.f32 %v1484, %v1522
        %v1525 = vmul.f32 %v1485, %v1522
        %v1526 = vmul.f32 %v1486, %v1522
        %v1527 = vmul.f32 %v1487, %v1522
        %v1528 = vmul.f32 %v1488, %v1522
        %v1529 = vmul.f32 %v1489, %v1522
        %v1530 = vmul.f32 %v1490, %v1522
        %v1531 = vmul.f32 %v1491, %v1522
        %v1532 = vmul.f32 %v1492, %v1522
        %v1533 = vmul.f32 %v1493, %v1522
        %v1534 = vmul.f32 %v1494, %v1522
        %v1535 = vmul.f32 %v1495, %v1522
        %v1536 = vmul.f32 %v1496, %v1522
        %v1537 = vmul.f32 %v1497, %v1522
        %v1538 = vmul.f32 %v1498, %v1522
        %v1539 = vmul.f32 %v1499, %v1522
        %v1540 = vmul.f32 %v1500, %v1522
        %v1541 = vmul.f32 %v1501, %v1522
        %v1542 = vmul.f32 %v1502, %v1522
        %v1543 = vmul.f32 %v1503, %v1522
        %v1544 = vmul.f32 %v1504, %v1522
        %v1545 = vmul.f32 %v1505, %v1522
        %v1546 = vmul.f32 %v1506, %v1522
        %v1547 = vmul.f32 %v1507, %v1522
        %v1548 = vmul.f32 %v1508, %v1522
        %v1549 = vmul.f32 %v1509, %v1522
        %v1550 = vmul.f32 %v1510, %v1522
        %v1551 = vmul.f32 %v1511, %v1522
        %v1552 = vmul.f32 %v1512, %v1522
        %v1553 = vmul.f32 %v1513, %v1522
        %v1554 = vmul.f32 %v1514, %v1522
        %v1555 = vmul.f32 %v1515, %v1522
        %v1556 = vadd.f32 %v1451, %v1524
        %v1557 = vadd.f32 %v1452, %v1525
        %v1558 = vadd.f32 %v1453, %v1526
        %v1559 = vadd.f32 %v1454, %v1527
        %v1560 = vadd.f32 %v1455, %v1528
        %v1561 = vadd.f32 %v1456, %v1529
        %v1562 = vadd.f32 %v1457, %v1530
        %v1563 = vadd.f32 %v1458, %v1531
        %v1564 = vadd.f32 %v1459, %v1532
        %v1565 = vadd.f32 %v1460, %v1533
        %v1566 = vadd.f32 %v1461, %v1534
        %v1567 = vadd.f32 %v1462, %v1535
        %v1568 = vadd.f32 %v1463, %v1536
        %v1569 = vadd.f32 %v1464, %v1537
        %v1570 = vadd.f32 %v1465, %v1538
        %v1571 = vadd.f32 %v1466, %v1539
        %v1572 = vadd.f32 %v1467, %v1540
        %v1573 = vadd.f32 %v1468, %v1541
        %v1574 = vadd.f32 %v1469, %v1542
        %v1575 = vadd.f32 %v1470, %v1543
        %v1576 = vadd.f32 %v1471, %v1544
        %v1577 = vadd.f32 %v1472, %v1545
        %v1578 = vadd.f32 %v1473, %v1546
        %v1579 = vadd.f32 %v1474, %v1547
        %v1580 = vadd.f32 %v1475, %v1548
        %v1581 = vadd.f32 %v1476, %v1549
        %v1582 = vadd.f32 %v1477, %v1550
        %v1583 = vadd.f32 %v1478, %v1551
        %v1584 = vadd.f32 %v1479, %v1552
        %v1585 = vadd.f32 %v1480, %v1553
        %v1586 = vadd.f32 %v1481, %v1554
        %v1587 = vadd.f32 %v1482, %v1555
        %s1588 = scalar_lea.vmem %s1379, 512 [#allocation2]
        %v1589 = vld [vmem:[%s1588] sm:$0xff]
        %v1590 = vld [vmem:[%s1588 + $0x8] sm:$0xff]
        %v1591 = vld [vmem:[%s1588 + $0x10] sm:$0xff]
        %v1592 = vld [vmem:[%s1588 + $0x18] sm:$0xff]
        %v1593 = vld [vmem:[%s1588 + $0x20] sm:$0xff]
        %v1594 = vld [vmem:[%s1588 + $0x28] sm:$0xff]
        %v1595 = vld [vmem:[%s1588 + $0x30] sm:$0xff]
        %v1596 = vld [vmem:[%s1588 + $0x38] sm:$0xff]
        %v1597 = vld [vmem:[%s1588 + $0x40] sm:$0xff]
        %v1598 = vld [vmem:[%s1588 + $0x48] sm:$0xff]
        %v1599 = vld [vmem:[%s1588 + $0x50] sm:$0xff]
        %v1600 = vld [vmem:[%s1588 + $0x58] sm:$0xff]
        %v1601 = vld [vmem:[%s1588 + $0x60] sm:$0xff]
        %v1602 = vld [vmem:[%s1588 + $0x68] sm:$0xff]
        %v1603 = vld [vmem:[%s1588 + $0x70] sm:$0xff]
        %v1604 = vld [vmem:[%s1588 + $0x78] sm:$0xff]
        %v1605 = vld [vmem:[%s1588 + $0x80] sm:$0xff]
        %v1606 = vld [vmem:[%s1588 + $0x88] sm:$0xff]
        %v1607 = vld [vmem:[%s1588 + $0x90] sm:$0xff]
        %v1608 = vld [vmem:[%s1588 + $0x98] sm:$0xff]
        %v1609 = vld [vmem:[%s1588 + $0xa0] sm:$0xff]
        %v1610 = vld [vmem:[%s1588 + $0xa8] sm:$0xff]
        %v1611 = vld [vmem:[%s1588 + $0xb0] sm:$0xff]
        %v1612 = vld [vmem:[%s1588 + $0xb8] sm:$0xff]
        %v1613 = vld [vmem:[%s1588 + $0xc0] sm:$0xff]
        %v1614 = vld [vmem:[%s1588 + $0xc8] sm:$0xff]
        %v1615 = vld [vmem:[%s1588 + $0xd0] sm:$0xff]
        %v1616 = vld [vmem:[%s1588 + $0xd8] sm:$0xff]
        %v1617 = vld [vmem:[%s1588 + $0xe0] sm:$0xff]
        %v1618 = vld [vmem:[%s1588 + $0xe8] sm:$0xff]
        %v1619 = vld [vmem:[%s1588 + $0xf0] sm:$0xff]
        %v1620 = vld [vmem:[%s1588 + $0xf8] sm:$0xff]
        %s1621 = scalar_lea.vmem %s1, 2
        %v1622 = vld [vmem:[%s1621] sm:$0x1]
        %v1624 = vlaneseq
        %v1625 = vshrl.u32 %v1624, 7
        %v1626 = vsub.s32 0, %v1625
        %v1627 = vrot.slane %v1622, %v1626
        %v1629 = vmul.f32 %v1589, %v1627
        %v1630 = vmul.f32 %v1590, %v1627
        %v1631 = vmul.f32 %v1591, %v1627
        %v1632 = vmul.f32 %v1592, %v1627
        %v1633 = vmul.f32 %v1593, %v1627
        %v1634 = vmul.f32 %v1594, %v1627
        %v1635 = vmul.f32 %v1595, %v1627
        %v1636 = vmul.f32 %v1596, %v1627
        %v1637 = vmul.f32 %v1597, %v1627
        %v1638 = vmul.f32 %v1598, %v1627
        %v1639 = vmul.f32 %v1599, %v1627
        %v1640 = vmul.f32 %v1600, %v1627
        %v1641 = vmul.f32 %v1601, %v1627
        %v1642 = vmul.f32 %v1602, %v1627
        %v1643 = vmul.f32 %v1603, %v1627
        %v1644 = vmul.f32 %v1604, %v1627
        %v1645 = vmul.f32 %v1605, %v1627
        %v1646 = vmul.f32 %v1606, %v1627
        %v1647 = vmul.f32 %v1607, %v1627
        %v1648 = vmul.f32 %v1608, %v1627
        %v1649 = vmul.f32 %v1609, %v1627
        %v1650 = vmul.f32 %v1610, %v1627
        %v1651 = vmul.f32 %v1611, %v1627
        %v1652 = vmul.f32 %v1612, %v1627
        %v1653 = vmul.f32 %v1613, %v1627
        %v1654 = vmul.f32 %v1614, %v1627
        %v1655 = vmul.f32 %v1615, %v1627
        %v1656 = vmul.f32 %v1616, %v1627
        %v1657 = vmul.f32 %v1617, %v1627
        %v1658 = vmul.f32 %v1618, %v1627
        %v1659 = vmul.f32 %v1619, %v1627
        %v1660 = vmul.f32 %v1620, %v1627
        %v1661 = vadd.f32 %v1556, %v1629
        %v1662 = vadd.f32 %v1557, %v1630
        %v1663 = vadd.f32 %v1558, %v1631
        %v1664 = vadd.f32 %v1559, %v1632
        %v1665 = vadd.f32 %v1560, %v1633
        %v1666 = vadd.f32 %v1561, %v1634
        %v1667 = vadd.f32 %v1562, %v1635
        %v1668 = vadd.f32 %v1563, %v1636
        %v1669 = vadd.f32 %v1564, %v1637
        %v1670 = vadd.f32 %v1565, %v1638
        %v1671 = vadd.f32 %v1566, %v1639
        %v1672 = vadd.f32 %v1567, %v1640
        %v1673 = vadd.f32 %v1568, %v1641
        %v1674 = vadd.f32 %v1569, %v1642
        %v1675 = vadd.f32 %v1570, %v1643
        %v1676 = vadd.f32 %v1571, %v1644
        %v1677 = vadd.f32 %v1572, %v1645
        %v1678 = vadd.f32 %v1573, %v1646
        %v1679 = vadd.f32 %v1574, %v1647
        %v1680 = vadd.f32 %v1575, %v1648
        %v1681 = vadd.f32 %v1576, %v1649
        %v1682 = vadd.f32 %v1577, %v1650
        %v1683 = vadd.f32 %v1578, %v1651
        %v1684 = vadd.f32 %v1579, %v1652
        %v1685 = vadd.f32 %v1580, %v1653
        %v1686 = vadd.f32 %v1581, %v1654
        %v1687 = vadd.f32 %v1582, %v1655
        %v1688 = vadd.f32 %v1583, %v1656
        %v1689 = vadd.f32 %v1584, %v1657
        %v1690 = vadd.f32 %v1585, %v1658
        %v1691 = vadd.f32 %v1586, %v1659
        %v1692 = vadd.f32 %v1587, %v1660
        %s1693 = scalar_lea.vmem %s1379, 768 [#allocation2]
        %v1694 = vld [vmem:[%s1693] sm:$0xff]
        %v1695 = vld [vmem:[%s1693 + $0x8] sm:$0xff]
        %v1696 = vld [vmem:[%s1693 + $0x10] sm:$0xff]
        %v1697 = vld [vmem:[%s1693 + $0x18] sm:$0xff]
        %v1698 = vld [vmem:[%s1693 + $0x20] sm:$0xff]
        %v1699 = vld [vmem:[%s1693 + $0x28] sm:$0xff]
        %v1700 = vld [vmem:[%s1693 + $0x30] sm:$0xff]
        %v1701 = vld [vmem:[%s1693 + $0x38] sm:$0xff]
        %v1702 = vld [vmem:[%s1693 + $0x40] sm:$0xff]
        %v1703 = vld [vmem:[%s1693 + $0x48] sm:$0xff]
        %v1704 = vld [vmem:[%s1693 + $0x50] sm:$0xff]
        %v1705 = vld [vmem:[%s1693 + $0x58] sm:$0xff]
        %v1706 = vld [vmem:[%s1693 + $0x60] sm:$0xff]
        %v1707 = vld [vmem:[%s1693 + $0x68] sm:$0xff]
        %v1708 = vld [vmem:[%s1693 + $0x70] sm:$0xff]
        %v1709 = vld [vmem:[%s1693 + $0x78] sm:$0xff]
        %v1710 = vld [vmem:[%s1693 + $0x80] sm:$0xff]
        %v1711 = vld [vmem:[%s1693 + $0x88] sm:$0xff]
        %v1712 = vld [vmem:[%s1693 + $0x90] sm:$0xff]
        %v1713 = vld [vmem:[%s1693 + $0x98] sm:$0xff]
        %v1714 = vld [vmem:[%s1693 + $0xa0] sm:$0xff]
        %v1715 = vld [vmem:[%s1693 + $0xa8] sm:$0xff]
        %v1716 = vld [vmem:[%s1693 + $0xb0] sm:$0xff]
        %v1717 = vld [vmem:[%s1693 + $0xb8] sm:$0xff]
        %v1718 = vld [vmem:[%s1693 + $0xc0] sm:$0xff]
        %v1719 = vld [vmem:[%s1693 + $0xc8] sm:$0xff]
        %v1720 = vld [vmem:[%s1693 + $0xd0] sm:$0xff]
        %v1721 = vld [vmem:[%s1693 + $0xd8] sm:$0xff]
        %v1722 = vld [vmem:[%s1693 + $0xe0] sm:$0xff]
        %v1723 = vld [vmem:[%s1693 + $0xe8] sm:$0xff]
        %v1724 = vld [vmem:[%s1693 + $0xf0] sm:$0xff]
        %v1725 = vld [vmem:[%s1693 + $0xf8] sm:$0xff]
        %s1726 = scalar_lea.vmem %s1, 3
        %v1727 = vld [vmem:[%s1726] sm:$0x1]
        %v1729 = vlaneseq
        %v1730 = vshrl.u32 %v1729, 7
        %v1731 = vsub.s32 0, %v1730
        %v1732 = vrot.slane %v1727, %v1731
        %v1734 = vmul.f32 %v1694, %v1732
        %v1735 = vmul.f32 %v1695, %v1732
        %v1736 = vmul.f32 %v1696, %v1732
        %v1737 = vmul.f32 %v1697, %v1732
        %v1738 = vmul.f32 %v1698, %v1732
        %v1739 = vmul.f32 %v1699, %v1732
        %v1740 = vmul.f32 %v1700, %v1732
        %v1741 = vmul.f32 %v1701, %v1732
        %v1742 = vmul.f32 %v1702, %v1732
        %v1743 = vmul.f32 %v1703, %v1732
        %v1744 = vmul.f32 %v1704, %v1732
        %v1745 = vmul.f32 %v1705, %v1732
        %v1746 = vmul.f32 %v1706, %v1732
        %v1747 = vmul.f32 %v1707, %v1732
        %v1748 = vmul.f32 %v1708, %v1732
        %v1749 = vmul.f32 %v1709, %v1732
        %v1750 = vmul.f32 %v1710, %v1732
        %v1751 = vmul.f32 %v1711, %v1732
        %v1752 = vmul.f32 %v1712, %v1732
        %v1753 = vmul.f32 %v1713, %v1732
        %v1754 = vmul.f32 %v1714, %v1732
        %v1755 = vmul.f32 %v1715, %v1732
        %v1756 = vmul.f32 %v1716, %v1732
        %v1757 = vmul.f32 %v1717, %v1732
        %v1758 = vmul.f32 %v1718, %v1732
        %v1759 = vmul.f32 %v1719, %v1732
        %v1760 = vmul.f32 %v1720, %v1732
        %v1761 = vmul.f32 %v1721, %v1732
        %v1762 = vmul.f32 %v1722, %v1732
        %v1763 = vmul.f32 %v1723, %v1732
        %v1764 = vmul.f32 %v1724, %v1732
        %v1765 = vmul.f32 %v1725, %v1732
        %v1766 = vadd.f32 %v1661, %v1734
        %v1767 = vadd.f32 %v1662, %v1735
        %v1768 = vadd.f32 %v1663, %v1736
        %v1769 = vadd.f32 %v1664, %v1737
        %v1770 = vadd.f32 %v1665, %v1738
        %v1771 = vadd.f32 %v1666, %v1739
        %v1772 = vadd.f32 %v1667, %v1740
        %v1773 = vadd.f32 %v1668, %v1741
        %v1774 = vadd.f32 %v1669, %v1742
        %v1775 = vadd.f32 %v1670, %v1743
        %v1776 = vadd.f32 %v1671, %v1744
        %v1777 = vadd.f32 %v1672, %v1745
        %v1778 = vadd.f32 %v1673, %v1746
        %v1779 = vadd.f32 %v1674, %v1747
        %v1780 = vadd.f32 %v1675, %v1748
        %v1781 = vadd.f32 %v1676, %v1749
        %v1782 = vadd.f32 %v1677, %v1750
        %v1783 = vadd.f32 %v1678, %v1751
        %v1784 = vadd.f32 %v1679, %v1752
        %v1785 = vadd.f32 %v1680, %v1753
        %v1786 = vadd.f32 %v1681, %v1754
        %v1787 = vadd.f32 %v1682, %v1755
        %v1788 = vadd.f32 %v1683, %v1756
        %v1789 = vadd.f32 %v1684, %v1757
        %v1790 = vadd.f32 %v1685, %v1758
        %v1791 = vadd.f32 %v1686, %v1759
        %v1792 = vadd.f32 %v1687, %v1760
        %v1793 = vadd.f32 %v1688, %v1761
        %v1794 = vadd.f32 %v1689, %v1762
        %v1795 = vadd.f32 %v1690, %v1763
        %v1796 = vadd.f32 %v1691, %v1764
        %v1797 = vadd.f32 %v1692, %v1765
        %s1798 = scalar_lea.vmem %s1379, 1024 [#allocation2]
        %v1799 = vld [vmem:[%s1798] sm:$0xff]
        %v1800 = vld [vmem:[%s1798 + $0x8] sm:$0xff]
        %v1801 = vld [vmem:[%s1798 + $0x10] sm:$0xff]
        %v1802 = vld [vmem:[%s1798 + $0x18] sm:$0xff]
        %v1803 = vld [vmem:[%s1798 + $0x20] sm:$0xff]
        %v1804 = vld [vmem:[%s1798 + $0x28] sm:$0xff]
        %v1805 = vld [vmem:[%s1798 + $0x30] sm:$0xff]
        %v1806 = vld [vmem:[%s1798 + $0x38] sm:$0xff]
        %v1807 = vld [vmem:[%s1798 + $0x40] sm:$0xff]
        %v1808 = vld [vmem:[%s1798 + $0x48] sm:$0xff]
        %v1809 = vld [vmem:[%s1798 + $0x50] sm:$0xff]
        %v1810 = vld [vmem:[%s1798 + $0x58] sm:$0xff]
        %v1811 = vld [vmem:[%s1798 + $0x60] sm:$0xff]
        %v1812 = vld [vmem:[%s1798 + $0x68] sm:$0xff]
        %v1813 = vld [vmem:[%s1798 + $0x70] sm:$0xff]
        %v1814 = vld [vmem:[%s1798 + $0x78] sm:$0xff]
        %v1815 = vld [vmem:[%s1798 + $0x80] sm:$0xff]
        %v1816 = vld [vmem:[%s1798 + $0x88] sm:$0xff]
        %v1817 = vld [vmem:[%s1798 + $0x90] sm:$0xff]
        %v1818 = vld [vmem:[%s1798 + $0x98] sm:$0xff]
        %v1819 = vld [vmem:[%s1798 + $0xa0] sm:$0xff]
        %v1820 = vld [vmem:[%s1798 + $0xa8] sm:$0xff]
        %v1821 = vld [vmem:[%s1798 + $0xb0] sm:$0xff]
        %v1822 = vld [vmem:[%s1798 + $0xb8] sm:$0xff]
        %v1823 = vld [vmem:[%s1798 + $0xc0] sm:$0xff]
        %v1824 = vld [vmem:[%s1798 + $0xc8] sm:$0xff]
        %v1825 = vld [vmem:[%s1798 + $0xd0] sm:$0xff]
        %v1826 = vld [vmem:[%s1798 + $0xd8] sm:$0xff]
        %v1827 = vld [vmem:[%s1798 + $0xe0] sm:$0xff]
        %v1828 = vld [vmem:[%s1798 + $0xe8] sm:$0xff]
        %v1829 = vld [vmem:[%s1798 + $0xf0] sm:$0xff]
        %v1830 = vld [vmem:[%s1798 + $0xf8] sm:$0xff]
        %s1831 = scalar_lea.vmem %s1, 4
        %v1832 = vld [vmem:[%s1831] sm:$0x1]
        %v1834 = vlaneseq
        %v1835 = vshrl.u32 %v1834, 7
        %v1836 = vsub.s32 0, %v1835
        %v1837 = vrot.slane %v1832, %v1836
        %v1839 = vmul.f32 %v1799, %v1837
        %v1840 = vmul.f32 %v1800, %v1837
        %v1841 = vmul.f32 %v1801, %v1837
        %v1842 = vmul.f32 %v1802, %v1837
        %v1843 = vmul.f32 %v1803, %v1837
        %v1844 = vmul.f32 %v1804, %v1837
        %v1845 = vmul.f32 %v1805, %v1837
        %v1846 = vmul.f32 %v1806, %v1837
        %v1847 = vmul.f32 %v1807, %v1837
        %v1848 = vmul.f32 %v1808, %v1837
        %v1849 = vmul.f32 %v1809, %v1837
        %v1850 = vmul.f32 %v1810, %v1837
        %v1851 = vmul.f32 %v1811, %v1837
        %v1852 = vmul.f32 %v1812, %v1837
        %v1853 = vmul.f32 %v1813, %v1837
        %v1854 = vmul.f32 %v1814, %v1837
        %v1855 = vmul.f32 %v1815, %v1837
        %v1856 = vmul.f32 %v1816, %v1837
        %v1857 = vmul.f32 %v1817, %v1837
        %v1858 = vmul.f32 %v1818, %v1837
        %v1859 = vmul.f32 %v1819, %v1837
        %v1860 = vmul.f32 %v1820, %v1837
        %v1861 = vmul.f32 %v1821, %v1837
        %v1862 = vmul.f32 %v1822, %v1837
        %v1863 = vmul.f32 %v1823, %v1837
        %v1864 = vmul.f32 %v1824, %v1837
        %v1865 = vmul.f32 %v1825, %v1837
        %v1866 = vmul.f32 %v1826, %v1837
        %v1867 = vmul.f32 %v1827, %v1837
        %v1868 = vmul.f32 %v1828, %v1837
        %v1869 = vmul.f32 %v1829, %v1837
        %v1870 = vmul.f32 %v1830, %v1837
        %v1871 = vadd.f32 %v1766, %v1839
        %v1872 = vadd.f32 %v1767, %v1840
        %v1873 = vadd.f32 %v1768, %v1841
        %v1874 = vadd.f32 %v1769, %v1842
        %v1875 = vadd.f32 %v1770, %v1843
        %v1876 = vadd.f32 %v1771, %v1844
        %v1877 = vadd.f32 %v1772, %v1845
        %v1878 = vadd.f32 %v1773, %v1846
        %v1879 = vadd.f32 %v1774, %v1847
        %v1880 = vadd.f32 %v1775, %v1848
        %v1881 = vadd.f32 %v1776, %v1849
        %v1882 = vadd.f32 %v1777, %v1850
        %v1883 = vadd.f32 %v1778, %v1851
        %v1884 = vadd.f32 %v1779, %v1852
        %v1885 = vadd.f32 %v1780, %v1853
        %v1886 = vadd.f32 %v1781, %v1854
        %v1887 = vadd.f32 %v1782, %v1855
        %v1888 = vadd.f32 %v1783, %v1856
        %v1889 = vadd.f32 %v1784, %v1857
        %v1890 = vadd.f32 %v1785, %v1858
        %v1891 = vadd.f32 %v1786, %v1859
        %v1892 = vadd.f32 %v1787, %v1860
        %v1893 = vadd.f32 %v1788, %v1861
        %v1894 = vadd.f32 %v1789, %v1862
        %v1895 = vadd.f32 %v1790, %v1863
        %v1896 = vadd.f32 %v1791, %v1864
        %v1897 = vadd.f32 %v1792, %v1865
        %v1898 = vadd.f32 %v1793, %v1866
        %v1899 = vadd.f32 %v1794, %v1867
        %v1900 = vadd.f32 %v1795, %v1868
        %v1901 = vadd.f32 %v1796, %v1869
        %v1902 = vadd.f32 %v1797, %v1870
        %s1903 = scalar_lea.vmem %s1379, 1280 [#allocation2]
        %v1904 = vld [vmem:[%s1903] sm:$0xff]
        %v1905 = vld [vmem:[%s1903 + $0x8] sm:$0xff]
        %v1906 = vld [vmem:[%s1903 + $0x10] sm:$0xff]
        %v1907 = vld [vmem:[%s1903 + $0x18] sm:$0xff]
        %v1908 = vld [vmem:[%s1903 + $0x20] sm:$0xff]
        %v1909 = vld [vmem:[%s1903 + $0x28] sm:$0xff]
        %v1910 = vld [vmem:[%s1903 + $0x30] sm:$0xff]
        %v1911 = vld [vmem:[%s1903 + $0x38] sm:$0xff]
        %v1912 = vld [vmem:[%s1903 + $0x40] sm:$0xff]
        %v1913 = vld [vmem:[%s1903 + $0x48] sm:$0xff]
        %v1914 = vld [vmem:[%s1903 + $0x50] sm:$0xff]
        %v1915 = vld [vmem:[%s1903 + $0x58] sm:$0xff]
        %v1916 = vld [vmem:[%s1903 + $0x60] sm:$0xff]
        %v1917 = vld [vmem:[%s1903 + $0x68] sm:$0xff]
        %v1918 = vld [vmem:[%s1903 + $0x70] sm:$0xff]
        %v1919 = vld [vmem:[%s1903 + $0x78] sm:$0xff]
        %v1920 = vld [vmem:[%s1903 + $0x80] sm:$0xff]
        %v1921 = vld [vmem:[%s1903 + $0x88] sm:$0xff]
        %v1922 = vld [vmem:[%s1903 + $0x90] sm:$0xff]
        %v1923 = vld [vmem:[%s1903 + $0x98] sm:$0xff]
        %v1924 = vld [vmem:[%s1903 + $0xa0] sm:$0xff]
        %v1925 = vld [vmem:[%s1903 + $0xa8] sm:$0xff]
        %v1926 = vld [vmem:[%s1903 + $0xb0] sm:$0xff]
        %v1927 = vld [vmem:[%s1903 + $0xb8] sm:$0xff]
        %v1928 = vld [vmem:[%s1903 + $0xc0] sm:$0xff]
        %v1929 = vld [vmem:[%s1903 + $0xc8] sm:$0xff]
        %v1930 = vld [vmem:[%s1903 + $0xd0] sm:$0xff]
        %v1931 = vld [vmem:[%s1903 + $0xd8] sm:$0xff]
        %v1932 = vld [vmem:[%s1903 + $0xe0] sm:$0xff]
        %v1933 = vld [vmem:[%s1903 + $0xe8] sm:$0xff]
        %v1934 = vld [vmem:[%s1903 + $0xf0] sm:$0xff]
        %v1935 = vld [vmem:[%s1903 + $0xf8] sm:$0xff]
        %s1936 = scalar_lea.vmem %s1, 5
        %v1937 = vld [vmem:[%s1936] sm:$0x1]
        %v1939 = vlaneseq
        %v1940 = vshrl.u32 %v1939, 7
        %v1941 = vsub.s32 0, %v1940
        %v1942 = vrot.slane %v1937, %v1941
        %v1944 = vmul.f32 %v1904, %v1942
        %v1945 = vmul.f32 %v1905, %v1942
        %v1946 = vmul.f32 %v1906, %v1942
        %v1947 = vmul.f32 %v1907, %v1942
        %v1948 = vmul.f32 %v1908, %v1942
        %v1949 = vmul.f32 %v1909, %v1942
        %v1950 = vmul.f32 %v1910, %v1942
        %v1951 = vmul.f32 %v1911, %v1942
        %v1952 = vmul.f32 %v1912, %v1942
        %v1953 = vmul.f32 %v1913, %v1942
        %v1954 = vmul.f32 %v1914, %v1942
        %v1955 = vmul.f32 %v1915, %v1942
        %v1956 = vmul.f32 %v1916, %v1942
        %v1957 = vmul.f32 %v1917, %v1942
        %v1958 = vmul.f32 %v1918, %v1942
        %v1959 = vmul.f32 %v1919, %v1942
        %v1960 = vmul.f32 %v1920, %v1942
        %v1961 = vmul.f32 %v1921, %v1942
        %v1962 = vmul.f32 %v1922, %v1942
        %v1963 = vmul.f32 %v1923, %v1942
        %v1964 = vmul.f32 %v1924, %v1942
        %v1965 = vmul.f32 %v1925, %v1942
        %v1966 = vmul.f32 %v1926, %v1942
        %v1967 = vmul.f32 %v1927, %v1942
        %v1968 = vmul.f32 %v1928, %v1942
        %v1969 = vmul.f32 %v1929, %v1942
        %v1970 = vmul.f32 %v1930, %v1942
        %v1971 = vmul.f32 %v1931, %v1942
        %v1972 = vmul.f32 %v1932, %v1942
        %v1973 = vmul.f32 %v1933, %v1942
        %v1974 = vmul.f32 %v1934, %v1942
        %v1975 = vmul.f32 %v1935, %v1942
        %v1976 = vadd.f32 %v1871, %v1944
        %v1977 = vadd.f32 %v1872, %v1945
        %v1978 = vadd.f32 %v1873, %v1946
        %v1979 = vadd.f32 %v1874, %v1947
        %v1980 = vadd.f32 %v1875, %v1948
        %v1981 = vadd.f32 %v1876, %v1949
        %v1982 = vadd.f32 %v1877, %v1950
        %v1983 = vadd.f32 %v1878, %v1951
        %v1984 = vadd.f32 %v1879, %v1952
        %v1985 = vadd.f32 %v1880, %v1953
        %v1986 = vadd.f32 %v1881, %v1954
        %v1987 = vadd.f32 %v1882, %v1955
        %v1988 = vadd.f32 %v1883, %v1956
        %v1989 = vadd.f32 %v1884, %v1957
        %v1990 = vadd.f32 %v1885, %v1958
        %v1991 = vadd.f32 %v1886, %v1959
        %v1992 = vadd.f32 %v1887, %v1960
        %v1993 = vadd.f32 %v1888, %v1961
        %v1994 = vadd.f32 %v1889, %v1962
        %v1995 = vadd.f32 %v1890, %v1963
        %v1996 = vadd.f32 %v1891, %v1964
        %v1997 = vadd.f32 %v1892, %v1965
        %v1998 = vadd.f32 %v1893, %v1966
        %v1999 = vadd.f32 %v1894, %v1967
        %v2000 = vadd.f32 %v1895, %v1968
        %v2001 = vadd.f32 %v1896, %v1969
        %v2002 = vadd.f32 %v1897, %v1970
        %v2003 = vadd.f32 %v1898, %v1971
        %v2004 = vadd.f32 %v1899, %v1972
        %v2005 = vadd.f32 %v1900, %v1973
        %v2006 = vadd.f32 %v1901, %v1974
        %v2007 = vadd.f32 %v1902, %v1975
        %s2008 = scalar_lea.vmem %s1379, 1536 [#allocation2]
        %v2009 = vld [vmem:[%s2008] sm:$0xff]
        %v2010 = vld [vmem:[%s2008 + $0x8] sm:$0xff]
        %v2011 = vld [vmem:[%s2008 + $0x10] sm:$0xff]
        %v2012 = vld [vmem:[%s2008 + $0x18] sm:$0xff]
        %v2013 = vld [vmem:[%s2008 + $0x20] sm:$0xff]
        %v2014 = vld [vmem:[%s2008 + $0x28] sm:$0xff]
        %v2015 = vld [vmem:[%s2008 + $0x30] sm:$0xff]
        %v2016 = vld [vmem:[%s2008 + $0x38] sm:$0xff]
        %v2017 = vld [vmem:[%s2008 + $0x40] sm:$0xff]
        %v2018 = vld [vmem:[%s2008 + $0x48] sm:$0xff]
        %v2019 = vld [vmem:[%s2008 + $0x50] sm:$0xff]
        %v2020 = vld [vmem:[%s2008 + $0x58] sm:$0xff]
        %v2021 = vld [vmem:[%s2008 + $0x60] sm:$0xff]
        %v2022 = vld [vmem:[%s2008 + $0x68] sm:$0xff]
        %v2023 = vld [vmem:[%s2008 + $0x70] sm:$0xff]
        %v2024 = vld [vmem:[%s2008 + $0x78] sm:$0xff]
        %v2025 = vld [vmem:[%s2008 + $0x80] sm:$0xff]
        %v2026 = vld [vmem:[%s2008 + $0x88] sm:$0xff]
        %v2027 = vld [vmem:[%s2008 + $0x90] sm:$0xff]
        %v2028 = vld [vmem:[%s2008 + $0x98] sm:$0xff]
        %v2029 = vld [vmem:[%s2008 + $0xa0] sm:$0xff]
        %v2030 = vld [vmem:[%s2008 + $0xa8] sm:$0xff]
        %v2031 = vld [vmem:[%s2008 + $0xb0] sm:$0xff]
        %v2032 = vld [vmem:[%s2008 + $0xb8] sm:$0xff]
        %v2033 = vld [vmem:[%s2008 + $0xc0] sm:$0xff]
        %v2034 = vld [vmem:[%s2008 + $0xc8] sm:$0xff]
        %v2035 = vld [vmem:[%s2008 + $0xd0] sm:$0xff]
        %v2036 = vld [vmem:[%s2008 + $0xd8] sm:$0xff]
        %v2037 = vld [vmem:[%s2008 + $0xe0] sm:$0xff]
        %v2038 = vld [vmem:[%s2008 + $0xe8] sm:$0xff]
        %v2039 = vld [vmem:[%s2008 + $0xf0] sm:$0xff]
        %v2040 = vld [vmem:[%s2008 + $0xf8] sm:$0xff]
        %s2041 = scalar_lea.vmem %s1, 6
        %v2042 = vld [vmem:[%s2041] sm:$0x1]
        %v2044 = vlaneseq
        %v2045 = vshrl.u32 %v2044, 7
        %v2046 = vsub.s32 0, %v2045
        %v2047 = vrot.slane %v2042, %v2046
        %v2049 = vmul.f32 %v2009, %v2047
        %v2050 = vmul.f32 %v2010, %v2047
        %v2051 = vmul.f32 %v2011, %v2047
        %v2052 = vmul.f32 %v2012, %v2047
        %v2053 = vmul.f32 %v2013, %v2047
        %v2054 = vmul.f32 %v2014, %v2047
        %v2055 = vmul.f32 %v2015, %v2047
        %v2056 = vmul.f32 %v2016, %v2047
        %v2057 = vmul.f32 %v2017, %v2047
        %v2058 = vmul.f32 %v2018, %v2047
        %v2059 = vmul.f32 %v2019, %v2047
        %v2060 = vmul.f32 %v2020, %v2047
        %v2061 = vmul.f32 %v2021, %v2047
        %v2062 = vmul.f32 %v2022, %v2047
        %v2063 = vmul.f32 %v2023, %v2047
        %v2064 = vmul.f32 %v2024, %v2047
        %v2065 = vmul.f32 %v2025, %v2047
        %v2066 = vmul.f32 %v2026, %v2047
        %v2067 = vmul.f32 %v2027, %v2047
        %v2068 = vmul.f32 %v2028, %v2047
        %v2069 = vmul.f32 %v2029, %v2047
        %v2070 = vmul.f32 %v2030, %v2047
        %v2071 = vmul.f32 %v2031, %v2047
        %v2072 = vmul.f32 %v2032, %v2047
        %v2073 = vmul.f32 %v2033, %v2047
        %v2074 = vmul.f32 %v2034, %v2047
        %v2075 = vmul.f32 %v2035, %v2047
        %v2076 = vmul.f32 %v2036, %v2047
        %v2077 = vmul.f32 %v2037, %v2047
        %v2078 = vmul.f32 %v2038, %v2047
        %v2079 = vmul.f32 %v2039, %v2047
        %v2080 = vmul.f32 %v2040, %v2047
        %v2081 = vadd.f32 %v1976, %v2049
        %v2082 = vadd.f32 %v1977, %v2050
        %v2083 = vadd.f32 %v1978, %v2051
        %v2084 = vadd.f32 %v1979, %v2052
        %v2085 = vadd.f32 %v1980, %v2053
        %v2086 = vadd.f32 %v1981, %v2054
        %v2087 = vadd.f32 %v1982, %v2055
        %v2088 = vadd.f32 %v1983, %v2056
        %v2089 = vadd.f32 %v1984, %v2057
        %v2090 = vadd.f32 %v1985, %v2058
        %v2091 = vadd.f32 %v1986, %v2059
        %v2092 = vadd.f32 %v1987, %v2060
        %v2093 = vadd.f32 %v1988, %v2061
        %v2094 = vadd.f32 %v1989, %v2062
        %v2095 = vadd.f32 %v1990, %v2063
        %v2096 = vadd.f32 %v1991, %v2064
        %v2097 = vadd.f32 %v1992, %v2065
        %v2098 = vadd.f32 %v1993, %v2066
        %v2099 = vadd.f32 %v1994, %v2067
        %v2100 = vadd.f32 %v1995, %v2068
        %v2101 = vadd.f32 %v1996, %v2069
        %v2102 = vadd.f32 %v1997, %v2070
        %v2103 = vadd.f32 %v1998, %v2071
        %v2104 = vadd.f32 %v1999, %v2072
        %v2105 = vadd.f32 %v2000, %v2073
        %v2106 = vadd.f32 %v2001, %v2074
        %v2107 = vadd.f32 %v2002, %v2075
        %v2108 = vadd.f32 %v2003, %v2076
        %v2109 = vadd.f32 %v2004, %v2077
        %v2110 = vadd.f32 %v2005, %v2078
        %v2111 = vadd.f32 %v2006, %v2079
        %v2112 = vadd.f32 %v2007, %v2080
        %s2113 = scalar_lea.vmem %s1379, 1792 [#allocation2]
        %v2114 = vld [vmem:[%s2113] sm:$0xff]
        %v2115 = vld [vmem:[%s2113 + $0x8] sm:$0xff]
        %v2116 = vld [vmem:[%s2113 + $0x10] sm:$0xff]
        %v2117 = vld [vmem:[%s2113 + $0x18] sm:$0xff]
        %v2118 = vld [vmem:[%s2113 + $0x20] sm:$0xff]
        %v2119 = vld [vmem:[%s2113 + $0x28] sm:$0xff]
        %v2120 = vld [vmem:[%s2113 + $0x30] sm:$0xff]
        %v2121 = vld [vmem:[%s2113 + $0x38] sm:$0xff]
        %v2122 = vld [vmem:[%s2113 + $0x40] sm:$0xff]
        %v2123 = vld [vmem:[%s2113 + $0x48] sm:$0xff]
        %v2124 = vld [vmem:[%s2113 + $0x50] sm:$0xff]
        %v2125 = vld [vmem:[%s2113 + $0x58] sm:$0xff]
        %v2126 = vld [vmem:[%s2113 + $0x60] sm:$0xff]
        %v2127 = vld [vmem:[%s2113 + $0x68] sm:$0xff]
        %v2128 = vld [vmem:[%s2113 + $0x70] sm:$0xff]
        %v2129 = vld [vmem:[%s2113 + $0x78] sm:$0xff]
        %v2130 = vld [vmem:[%s2113 + $0x80] sm:$0xff]
        %v2131 = vld [vmem:[%s2113 + $0x88] sm:$0xff]
        %v2132 = vld [vmem:[%s2113 + $0x90] sm:$0xff]
        %v2133 = vld [vmem:[%s2113 + $0x98] sm:$0xff]
        %v2134 = vld [vmem:[%s2113 + $0xa0] sm:$0xff]
        %v2135 = vld [vmem:[%s2113 + $0xa8] sm:$0xff]
        %v2136 = vld [vmem:[%s2113 + $0xb0] sm:$0xff]
        %v2137 = vld [vmem:[%s2113 + $0xb8] sm:$0xff]
        %v2138 = vld [vmem:[%s2113 + $0xc0] sm:$0xff]
        %v2139 = vld [vmem:[%s2113 + $0xc8] sm:$0xff]
        %v2140 = vld [vmem:[%s2113 + $0xd0] sm:$0xff]
        %v2141 = vld [vmem:[%s2113 + $0xd8] sm:$0xff]
        %v2142 = vld [vmem:[%s2113 + $0xe0] sm:$0xff]
        %v2143 = vld [vmem:[%s2113 + $0xe8] sm:$0xff]
        %v2144 = vld [vmem:[%s2113 + $0xf0] sm:$0xff]
        %v2145 = vld [vmem:[%s2113 + $0xf8] sm:$0xff]
        %s2146 = scalar_lea.vmem %s1, 7
        %v2147 = vld [vmem:[%s2146] sm:$0x1]
        %v2149 = vlaneseq
        %v2150 = vshrl.u32 %v2149, 7
        %v2151 = vsub.s32 0, %v2150
        %v2152 = vrot.slane %v2147, %v2151
        %v2154 = vmul.f32 %v2114, %v2152
        %v2155 = vmul.f32 %v2115, %v2152
        %v2156 = vmul.f32 %v2116, %v2152
        %v2157 = vmul.f32 %v2117, %v2152
        %v2158 = vmul.f32 %v2118, %v2152
        %v2159 = vmul.f32 %v2119, %v2152
        %v2160 = vmul.f32 %v2120, %v2152
        %v2161 = vmul.f32 %v2121, %v2152
        %v2162 = vmul.f32 %v2122, %v2152
        %v2163 = vmul.f32 %v2123, %v2152
        %v2164 = vmul.f32 %v2124, %v2152
        %v2165 = vmul.f32 %v2125, %v2152
        %v2166 = vmul.f32 %v2126, %v2152
        %v2167 = vmul.f32 %v2127, %v2152
        %v2168 = vmul.f32 %v2128, %v2152
        %v2169 = vmul.f32 %v2129, %v2152
        %v2170 = vmul.f32 %v2130, %v2152
        %v2171 = vmul.f32 %v2131, %v2152
        %v2172 = vmul.f32 %v2132, %v2152
        %v2173 = vmul.f32 %v2133, %v2152
        %v2174 = vmul.f32 %v2134, %v2152
        %v2175 = vmul.f32 %v2135, %v2152
        %v2176 = vmul.f32 %v2136, %v2152
        %v2177 = vmul.f32 %v2137, %v2152
        %v2178 = vmul.f32 %v2138, %v2152
        %v2179 = vmul.f32 %v2139, %v2152
        %v2180 = vmul.f32 %v2140, %v2152
        %v2181 = vmul.f32 %v2141, %v2152
        %v2182 = vmul.f32 %v2142, %v2152
        %v2183 = vmul.f32 %v2143, %v2152
        %v2184 = vmul.f32 %v2144, %v2152
        %v2185 = vmul.f32 %v2145, %v2152
        %v2186 = vadd.f32 %v2081, %v2154
        %v2187 = vadd.f32 %v2082, %v2155
        %v2188 = vadd.f32 %v2083, %v2156
        %v2189 = vadd.f32 %v2084, %v2157
        %v2190 = vadd.f32 %v2085, %v2158
        %v2191 = vadd.f32 %v2086, %v2159
        %v2192 = vadd.f32 %v2087, %v2160
        %v2193 = vadd.f32 %v2088, %v2161
        %v2194 = vadd.f32 %v2089, %v2162
        %v2195 = vadd.f32 %v2090, %v2163
        %v2196 = vadd.f32 %v2091, %v2164
        %v2197 = vadd.f32 %v2092, %v2165
        %v2198 = vadd.f32 %v2093, %v2166
        %v2199 = vadd.f32 %v2094, %v2167
        %v2200 = vadd.f32 %v2095, %v2168
        %v2201 = vadd.f32 %v2096, %v2169
        %v2202 = vadd.f32 %v2097, %v2170
        %v2203 = vadd.f32 %v2098, %v2171
        %v2204 = vadd.f32 %v2099, %v2172
        %v2205 = vadd.f32 %v2100, %v2173
        %v2206 = vadd.f32 %v2101, %v2174
        %v2207 = vadd.f32 %v2102, %v2175
        %v2208 = vadd.f32 %v2103, %v2176
        %v2209 = vadd.f32 %v2104, %v2177
        %v2210 = vadd.f32 %v2105, %v2178
        %v2211 = vadd.f32 %v2106, %v2179
        %v2212 = vadd.f32 %v2107, %v2180
        %v2213 = vadd.f32 %v2108, %v2181
        %v2214 = vadd.f32 %v2109, %v2182
        %v2215 = vadd.f32 %v2110, %v2183
        %v2216 = vadd.f32 %v2111, %v2184
        %v2217 = vadd.f32 %v2112, %v2185
        %s2218 = scalar_lea.vmem %s1379, 2048 [#allocation2]
        %v2219 = vld [vmem:[%s2218] sm:$0xff]
        %v2220 = vld [vmem:[%s2218 + $0x8] sm:$0xff]
        %v2221 = vld [vmem:[%s2218 + $0x10] sm:$0xff]
        %v2222 = vld [vmem:[%s2218 + $0x18] sm:$0xff]
        %v2223 = vld [vmem:[%s2218 + $0x20] sm:$0xff]
        %v2224 = vld [vmem:[%s2218 + $0x28] sm:$0xff]
        %v2225 = vld [vmem:[%s2218 + $0x30] sm:$0xff]
        %v2226 = vld [vmem:[%s2218 + $0x38] sm:$0xff]
        %v2227 = vld [vmem:[%s2218 + $0x40] sm:$0xff]
        %v2228 = vld [vmem:[%s2218 + $0x48] sm:$0xff]
        %v2229 = vld [vmem:[%s2218 + $0x50] sm:$0xff]
        %v2230 = vld [vmem:[%s2218 + $0x58] sm:$0xff]
        %v2231 = vld [vmem:[%s2218 + $0x60] sm:$0xff]
        %v2232 = vld [vmem:[%s2218 + $0x68] sm:$0xff]
        %v2233 = vld [vmem:[%s2218 + $0x70] sm:$0xff]
        %v2234 = vld [vmem:[%s2218 + $0x78] sm:$0xff]
        %v2235 = vld [vmem:[%s2218 + $0x80] sm:$0xff]
        %v2236 = vld [vmem:[%s2218 + $0x88] sm:$0xff]
        %v2237 = vld [vmem:[%s2218 + $0x90] sm:$0xff]
        %v2238 = vld [vmem:[%s2218 + $0x98] sm:$0xff]
        %v2239 = vld [vmem:[%s2218 + $0xa0] sm:$0xff]
        %v2240 = vld [vmem:[%s2218 + $0xa8] sm:$0xff]
        %v2241 = vld [vmem:[%s2218 + $0xb0] sm:$0xff]
        %v2242 = vld [vmem:[%s2218 + $0xb8] sm:$0xff]
        %v2243 = vld [vmem:[%s2218 + $0xc0] sm:$0xff]
        %v2244 = vld [vmem:[%s2218 + $0xc8] sm:$0xff]
        %v2245 = vld [vmem:[%s2218 + $0xd0] sm:$0xff]
        %v2246 = vld [vmem:[%s2218 + $0xd8] sm:$0xff]
        %v2247 = vld [vmem:[%s2218 + $0xe0] sm:$0xff]
        %v2248 = vld [vmem:[%s2218 + $0xe8] sm:$0xff]
        %v2249 = vld [vmem:[%s2218 + $0xf0] sm:$0xff]
        %v2250 = vld [vmem:[%s2218 + $0xf8] sm:$0xff]
        %s2251 = scalar_lea.vmem %s1, 8
        %v2252 = vld [vmem:[%s2251] sm:$0x1]
        %v2254 = vlaneseq
        %v2255 = vshrl.u32 %v2254, 7
        %v2256 = vsub.s32 0, %v2255
        %v2257 = vrot.slane %v2252, %v2256
        %v2259 = vmul.f32 %v2219, %v2257
        %v2260 = vmul.f32 %v2220, %v2257
        %v2261 = vmul.f32 %v2221, %v2257
        %v2262 = vmul.f32 %v2222, %v2257
        %v2263 = vmul.f32 %v2223, %v2257
        %v2264 = vmul.f32 %v2224, %v2257
        %v2265 = vmul.f32 %v2225, %v2257
        %v2266 = vmul.f32 %v2226, %v2257
        %v2267 = vmul.f32 %v2227, %v2257
        %v2268 = vmul.f32 %v2228, %v2257
        %v2269 = vmul.f32 %v2229, %v2257
        %v2270 = vmul.f32 %v2230, %v2257
        %v2271 = vmul.f32 %v2231, %v2257
        %v2272 = vmul.f32 %v2232, %v2257
        %v2273 = vmul.f32 %v2233, %v2257
        %v2274 = vmul.f32 %v2234, %v2257
        %v2275 = vmul.f32 %v2235, %v2257
        %v2276 = vmul.f32 %v2236, %v2257
        %v2277 = vmul.f32 %v2237, %v2257
        %v2278 = vmul.f32 %v2238, %v2257
        %v2279 = vmul.f32 %v2239, %v2257
        %v2280 = vmul.f32 %v2240, %v2257
        %v2281 = vmul.f32 %v2241, %v2257
        %v2282 = vmul.f32 %v2242, %v2257
        %v2283 = vmul.f32 %v2243, %v2257
        %v2284 = vmul.f32 %v2244, %v2257
        %v2285 = vmul.f32 %v2245, %v2257
        %v2286 = vmul.f32 %v2246, %v2257
        %v2287 = vmul.f32 %v2247, %v2257
        %v2288 = vmul.f32 %v2248, %v2257
        %v2289 = vmul.f32 %v2249, %v2257
        %v2290 = vmul.f32 %v2250, %v2257
        %v2291 = vadd.f32 %v2186, %v2259
        %v2292 = vadd.f32 %v2187, %v2260
        %v2293 = vadd.f32 %v2188, %v2261
        %v2294 = vadd.f32 %v2189, %v2262
        %v2295 = vadd.f32 %v2190, %v2263
        %v2296 = vadd.f32 %v2191, %v2264
        %v2297 = vadd.f32 %v2192, %v2265
        %v2298 = vadd.f32 %v2193, %v2266
        %v2299 = vadd.f32 %v2194, %v2267
        %v2300 = vadd.f32 %v2195, %v2268
        %v2301 = vadd.f32 %v2196, %v2269
        %v2302 = vadd.f32 %v2197, %v2270
        %v2303 = vadd.f32 %v2198, %v2271
        %v2304 = vadd.f32 %v2199, %v2272
        %v2305 = vadd.f32 %v2200, %v2273
        %v2306 = vadd.f32 %v2201, %v2274
        %v2307 = vadd.f32 %v2202, %v2275
        %v2308 = vadd.f32 %v2203, %v2276
        %v2309 = vadd.f32 %v2204, %v2277
        %v2310 = vadd.f32 %v2205, %v2278
        %v2311 = vadd.f32 %v2206, %v2279
        %v2312 = vadd.f32 %v2207, %v2280
        %v2313 = vadd.f32 %v2208, %v2281
        %v2314 = vadd.f32 %v2209, %v2282
        %v2315 = vadd.f32 %v2210, %v2283
        %v2316 = vadd.f32 %v2211, %v2284
        %v2317 = vadd.f32 %v2212, %v2285
        %v2318 = vadd.f32 %v2213, %v2286
        %v2319 = vadd.f32 %v2214, %v2287
        %v2320 = vadd.f32 %v2215, %v2288
        %v2321 = vadd.f32 %v2216, %v2289
        %v2322 = vadd.f32 %v2217, %v2290
        %v2323 = vld [vmem:[%s2] sm:$0x1]
        %v2325 = vlaneseq
        %v2326 = vshrl.u32 %v2325, 7
        %v2327 = vsub.s32 0, %v2326
        %v2328 = vrot.slane %v2323, %v2327
        %v2330 = vadd.f32 %v2291, %v2328
        %v2331 = vadd.f32 %v2292, %v2328
        %v2332 = vadd.f32 %v2293, %v2328
        %v2333 = vadd.f32 %v2294, %v2328
        %v2334 = vadd.f32 %v2295, %v2328
        %v2335 = vadd.f32 %v2296, %v2328
        %v2336 = vadd.f32 %v2297, %v2328
        %v2337 = vadd.f32 %v2298, %v2328
        %v2338 = vadd.f32 %v2299, %v2328
        %v2339 = vadd.f32 %v2300, %v2328
        %v2340 = vadd.f32 %v2301, %v2328
        %v2341 = vadd.f32 %v2302, %v2328
        %v2342 = vadd.f32 %v2303, %v2328
        %v2343 = vadd.f32 %v2304, %v2328
        %v2344 = vadd.f32 %v2305, %v2328
        %v2345 = vadd.f32 %v2306, %v2328
        %v2346 = vadd.f32 %v2307, %v2328
        %v2347 = vadd.f32 %v2308, %v2328
        %v2348 = vadd.f32 %v2309, %v2328
        %v2349 = vadd.f32 %v2310, %v2328
        %v2350 = vadd.f32 %v2311, %v2328
        %v2351 = vadd.f32 %v2312, %v2328
        %v2352 = vadd.f32 %v2313, %v2328
        %v2353 = vadd.f32 %v2314, %v2328
        %v2354 = vadd.f32 %v2315, %v2328
        %v2355 = vadd.f32 %v2316, %v2328
        %v2356 = vadd.f32 %v2317, %v2328
        %v2357 = vadd.f32 %v2318, %v2328
        %v2358 = vadd.f32 %v2319, %v2328
        %v2359 = vadd.f32 %v2320, %v2328
        %v2360 = vadd.f32 %v2321, %v2328
        %v2361 = vadd.f32 %v2322, %v2328
        %v2362 = vmax.f32 %v2330, 0.0
        %v2363 = vmax.f32 %v2331, 0.0
        %v2364 = vmax.f32 %v2332, 0.0
        %v2365 = vmax.f32 %v2333, 0.0
        %v2366 = vmax.f32 %v2334, 0.0
        %v2367 = vmax.f32 %v2335, 0.0
        %v2368 = vmax.f32 %v2336, 0.0
        %v2369 = vmax.f32 %v2337, 0.0
        %v2370 = vmax.f32 %v2338, 0.0
        %v2371 = vmax.f32 %v2339, 0.0
        %v2372 = vmax.f32 %v2340, 0.0
        %v2373 = vmax.f32 %v2341, 0.0
        %v2374 = vmax.f32 %v2342, 0.0
        %v2375 = vmax.f32 %v2343, 0.0
        %v2376 = vmax.f32 %v2344, 0.0
        %v2377 = vmax.f32 %v2345, 0.0
        %v2378 = vmax.f32 %v2346, 0.0
        %v2379 = vmax.f32 %v2347, 0.0
        %v2380 = vmax.f32 %v2348, 0.0
        %v2381 = vmax.f32 %v2349, 0.0
        %v2382 = vmax.f32 %v2350, 0.0
        %v2383 = vmax.f32 %v2351, 0.0
        %v2384 = vmax.f32 %v2352, 0.0
        %v2385 = vmax.f32 %v2353, 0.0
        %v2386 = vmax.f32 %v2354, 0.0
        %v2387 = vmax.f32 %v2355, 0.0
        %v2388 = vmax.f32 %v2356, 0.0
        %v2389 = vmax.f32 %v2357, 0.0
        %v2390 = vmax.f32 %v2358, 0.0
        %v2391 = vmax.f32 %v2359, 0.0
        %v2392 = vmax.f32 %v2360, 0.0
        %v2393 = vmax.f32 %v2361, 0.0
        %v2394 = vpack.c.bf16 %v2363, %v2362
        %v2395 = vpack.c.bf16 %v2365, %v2364
        %v2396 = vpack.c.bf16 %v2367, %v2366
        %v2397 = vpack.c.bf16 %v2369, %v2368
        %v2398 = vpack.c.bf16 %v2371, %v2370
        %v2399 = vpack.c.bf16 %v2373, %v2372
        %v2400 = vpack.c.bf16 %v2375, %v2374
        %v2401 = vpack.c.bf16 %v2377, %v2376
        %v2402 = vpack.c.bf16 %v2379, %v2378
        %v2403 = vpack.c.bf16 %v2381, %v2380
        %v2404 = vpack.c.bf16 %v2383, %v2382
        %v2405 = vpack.c.bf16 %v2385, %v2384
        %v2406 = vpack.c.bf16 %v2387, %v2386
        %v2407 = vpack.c.bf16 %v2389, %v2388
        %v2408 = vpack.c.bf16 %v2391, %v2390
        %v2409 = vpack.c.bf16 %v2393, %v2392
        %v2410 = vld [vmem:[%s3] sm:$0xf]
        %v2411 = vld [vmem:[%s3 + $0x4] sm:$0xf]
        %v2412 = vld [vmem:[%s3 + $0x8] sm:$0xf]
        %v2413 = vld [vmem:[%s3 + $0xc] sm:$0xf]
        %v2414 = vld [vmem:[%s4] sm:$0x1]
        %v2416 = vlaneseq
        %v2417 = vshrl.u32 %v2416, 7
        %v2418 = vsub.s32 0, %v2417
        %v2419 = vrot.slane %v2414, %v2418
        %v2425 = vunpack.c.l.b16 %v2410
        %v2426 = vunpack.c.l.b16 %v2411
        %v2427 = vunpack.c.l.b16 %v2412
        %v2428 = vunpack.c.l.b16 %v2413
        %v2429 = vpack.c.b16 %v2426, %v2425
        %v2430 = vpack.c.b16 %v2428, %v2427
        %vm2433 = vcmask 261120
        %v2435 = vsel %vm2433, %v2394, 0
        %v2438 = vsel %vm2433, %v2395, 0
        %v2441 = vsel %vm2433, %v2396, 0
        %v2444 = vsel %vm2433, %v2397, 0
        %v2447 = vsel %vm2433, %v2398, 0
        %v2450 = vsel %vm2433, %v2399, 0
        %v2453 = vsel %vm2433, %v2400, 0
        %v2456 = vsel %vm2433, %v2401, 0
        %v2459 = vsel %vm2433, %v2402, 0
        %v2462 = vsel %vm2433, %v2403, 0
        %v2465 = vsel %vm2433, %v2404, 0
        %v2468 = vsel %vm2433, %v2405, 0
        %v2471 = vsel %vm2433, %v2406, 0
        %v2474 = vsel %vm2433, %v2407, 0
        %v2477 = vsel %vm2433, %v2408, 0
        %v2480 = vsel %vm2433, %v2409, 0
        %2482 = vmatprep.subr.bf16.mxu0 0
        %2483 = vmatpush1.bf16.msra.mxu0 0
        %2484 = vmatprep.subr.bf16.mxu0 0
        %2485 = vmatpush1.bf16.msra.mxu0 0
        %2486 = vmatprep.subr.bf16.mxu0 0
        %2487 = vmatpush1.bf16.msra.mxu0 0
        %2488 = vmatprep.subr.bf16.mxu0 0
        %2489 = vmatpush1.bf16.msra.mxu0 0
        %2490 = vmatprep.subr.bf16.mxu0 0
        %2491 = vmatpush1.bf16.msra.mxu0 0
        %2492 = vmatprep.subr.bf16.mxu0 0
        %2493 = vmatpush1.bf16.msra.mxu0 0
        %2494 = vmatprep.subr.bf16.mxu0 0
        %2495 = vmatpush1.bf16.msra.mxu0 %v2430
        %2496 = vmatprep.subr.bf16.mxu0 0
        %2497 = vmatpush1.bf16.msra.mxu0 %v2429
        %2498 = vmatprep.subr.bf16.mxu0 0
        %2499 = vmatpush2.bf16.msra.mxu0 0
        %2500 = vmatprep.subr.bf16.mxu0 0
        %2501 = vmatpush2.bf16.msra.mxu0 0
        %2502 = vmatprep.subr.bf16.mxu0 0
        %2503 = vmatpush2.bf16.msra.mxu0 0
        %2504 = vmatprep.subr.bf16.mxu0 0
        %2505 = vmatpush2.bf16.msra.mxu0 0
        %2506 = vmatprep.subr.bf16.mxu0 0
        %2507 = vmatpush2.bf16.msra.mxu0 0
        %2508 = vmatprep.subr.bf16.mxu0 0
        %2509 = vmatpush2.bf16.msra.mxu0 0
        %2510 = vmatprep.subr.bf16.mxu0 0
        %2511 = vmatpush2.bf16.msra.mxu0 0
        %2512 = vmatprep.subr.bf16.mxu0 0
        %2513 = vmatpush2.bf16.msra.mxu0 0
        %2514 = vmatprep.mubr.bf16.mxu0 0
        %2515 = vmatmul.mubr.bf16.gmra.mxu0 %v2435
        %v2516 = vpop.f32.mrf.mxu0
        %v2517 = vadd.f32 %v2419, %v2516
        %v2518 = vpop.f32.mrf.mxu0
        %v2519 = vpop.f32.mrf.mxu0
        %v2520 = vadd.f32 %v2419, %v2519
        %v2521 = vpop.f32.mrf.mxu0
        %2522 = vmatprep.mubr.bf16.mxu0 0
        %2523 = vmatmul.mubr.bf16.gmra.mxu0 %v2438
        %v2524 = vpop.f32.mrf.mxu0
        %v2525 = vadd.f32 %v2419, %v2524
        %v2526 = vpop.f32.mrf.mxu0
        %v2527 = vpop.f32.mrf.mxu0
        %v2528 = vadd.f32 %v2419, %v2527
        %v2529 = vpop.f32.mrf.mxu0
        %2530 = vmatprep.mubr.bf16.mxu0 0
        %2531 = vmatmul.mubr.bf16.gmra.mxu0 %v2441
        %v2532 = vpop.f32.mrf.mxu0
        %v2533 = vadd.f32 %v2419, %v2532
        %v2534 = vpop.f32.mrf.mxu0
        %v2535 = vpop.f32.mrf.mxu0
        %v2536 = vadd.f32 %v2419, %v2535
        %v2537 = vpop.f32.mrf.mxu0
        %2538 = vmatprep.mubr.bf16.mxu0 0
        %2539 = vmatmul.mubr.bf16.gmra.mxu0 %v2444
        %v2540 = vpop.f32.mrf.mxu0
        %v2541 = vadd.f32 %v2419, %v2540
        %v2542 = vpop.f32.mrf.mxu0
        %v2543 = vpop.f32.mrf.mxu0
        %v2544 = vadd.f32 %v2419, %v2543
        %v2545 = vpop.f32.mrf.mxu0
        %2546 = vmatprep.mubr.bf16.mxu0 0
        %2547 = vmatmul.mubr.bf16.gmra.mxu0 %v2447
        %v2548 = vpop.f32.mrf.mxu0
        %v2549 = vadd.f32 %v2419, %v2548
        %v2550 = vpop.f32.mrf.mxu0
        %v2551 = vpop.f32.mrf.mxu0
        %v2552 = vadd.f32 %v2419, %v2551
        %v2553 = vpop.f32.mrf.mxu0
        %2554 = vmatprep.mubr.bf16.mxu0 0
        %2555 = vmatmul.mubr.bf16.gmra.mxu0 %v2450
        %v2556 = vpop.f32.mrf.mxu0
        %v2557 = vadd.f32 %v2419, %v2556
        %v2558 = vpop.f32.mrf.mxu0
        %v2559 = vpop.f32.mrf.mxu0
        %v2560 = vadd.f32 %v2419, %v2559
        %v2561 = vpop.f32.mrf.mxu0
        %2562 = vmatprep.mubr.bf16.mxu0 0
        %2563 = vmatmul.mubr.bf16.gmra.mxu0 %v2453
        %v2564 = vpop.f32.mrf.mxu0
        %v2565 = vadd.f32 %v2419, %v2564
        %v2566 = vpop.f32.mrf.mxu0
        %v2567 = vpop.f32.mrf.mxu0
        %v2568 = vadd.f32 %v2419, %v2567
        %v2569 = vpop.f32.mrf.mxu0
        %2570 = vmatprep.mubr.bf16.mxu0 0
        %2571 = vmatmul.mubr.bf16.gmra.mxu0 %v2456
        %v2572 = vpop.f32.mrf.mxu0
        %v2573 = vadd.f32 %v2419, %v2572
        %v2574 = vpop.f32.mrf.mxu0
        %v2575 = vpop.f32.mrf.mxu0
        %v2576 = vadd.f32 %v2419, %v2575
        %v2577 = vpop.f32.mrf.mxu0
        %2578 = vmatprep.mubr.bf16.mxu0 0
        %2579 = vmatmul.mubr.bf16.gmra.mxu0 %v2459
        %v2580 = vpop.f32.mrf.mxu0
        %v2581 = vadd.f32 %v2419, %v2580
        %v2582 = vpop.f32.mrf.mxu0
        %v2583 = vpop.f32.mrf.mxu0
        %v2584 = vadd.f32 %v2419, %v2583
        %v2585 = vpop.f32.mrf.mxu0
        %2586 = vmatprep.mubr.bf16.mxu0 0
        %2587 = vmatmul.mubr.bf16.gmra.mxu0 %v2462
        %v2588 = vpop.f32.mrf.mxu0
        %v2589 = vadd.f32 %v2419, %v2588
        %v2590 = vpop.f32.mrf.mxu0
        %v2591 = vpop.f32.mrf.mxu0
        %v2592 = vadd.f32 %v2419, %v2591
        %v2593 = vpop.f32.mrf.mxu0
        %2594 = vmatprep.mubr.bf16.mxu0 0
        %2595 = vmatmul.mubr.bf16.gmra.mxu0 %v2465
        %v2596 = vpop.f32.mrf.mxu0
        %v2597 = vadd.f32 %v2419, %v2596
        %v2598 = vpop.f32.mrf.mxu0
        %v2599 = vpop.f32.mrf.mxu0
        %v2600 = vadd.f32 %v2419, %v2599
        %v2601 = vpop.f32.mrf.mxu0
        %2602 = vmatprep.mubr.bf16.mxu0 0
        %2603 = vmatmul.mubr.bf16.gmra.mxu0 %v2468
        %v2604 = vpop.f32.mrf.mxu0
        %v2605 = vadd.f32 %v2419, %v2604
        %v2606 = vpop.f32.mrf.mxu0
        %v2607 = vpop.f32.mrf.mxu0
        %v2608 = vadd.f32 %v2419, %v2607
        %v2609 = vpop.f32.mrf.mxu0
        %2610 = vmatprep.mubr.bf16.mxu0 0
        %2611 = vmatmul.mubr.bf16.gmra.mxu0 %v2471
        %v2612 = vpop.f32.mrf.mxu0
        %v2613 = vadd.f32 %v2419, %v2612
        %v2614 = vpop.f32.mrf.mxu0
        %v2615 = vpop.f32.mrf.mxu0
        %v2616 = vadd.f32 %v2419, %v2615
        %v2617 = vpop.f32.mrf.mxu0
        %2618 = vmatprep.mubr.bf16.mxu0 0
        %2619 = vmatmul.mubr.bf16.gmra.mxu0 %v2474
        %v2620 = vpop.f32.mrf.mxu0
        %v2621 = vadd.f32 %v2419, %v2620
        %v2622 = vpop.f32.mrf.mxu0
        %v2623 = vpop.f32.mrf.mxu0
        %v2624 = vadd.f32 %v2419, %v2623
        %v2625 = vpop.f32.mrf.mxu0
        %2626 = vmatprep.mubr.bf16.mxu0 0
        %2627 = vmatmul.mubr.bf16.gmra.mxu0 %v2477
        %v2628 = vpop.f32.mrf.mxu0
        %v2629 = vadd.f32 %v2419, %v2628
        %v2630 = vpop.f32.mrf.mxu0
        %v2631 = vpop.f32.mrf.mxu0
        %v2632 = vadd.f32 %v2419, %v2631
        %v2633 = vpop.f32.mrf.mxu0
        %2634 = vmatprep.mubr.bf16.mxu0 0
        %2635 = vmatmul.mubr.bf16.gmra.mxu0 %v2480
        %v2636 = vpop.f32.mrf.mxu0
        %v2637 = vadd.f32 %v2419, %v2636
        %v2638 = vpop.f32.mrf.mxu0
        %v2639 = vpop.f32.mrf.mxu0
        %v2640 = vadd.f32 %v2419, %v2639
        %v2641 = vpop.f32.mrf.mxu0
        %2642 = vdwg.mxu0
        %v2643 = vmax.f32 %v2517, 0.0
        %v2644 = vmax.f32 %v2520, 0.0
        %v2645 = vmax.f32 %v2525, 0.0
        %v2646 = vmax.f32 %v2528, 0.0
        %v2647 = vmax.f32 %v2533, 0.0
        %v2648 = vmax.f32 %v2536, 0.0
        %v2649 = vmax.f32 %v2541, 0.0
        %v2650 = vmax.f32 %v2544, 0.0
        %v2651 = vmax.f32 %v2549, 0.0
        %v2652 = vmax.f32 %v2552, 0.0
        %v2653 = vmax.f32 %v2557, 0.0
        %v2654 = vmax.f32 %v2560, 0.0
        %v2655 = vmax.f32 %v2565, 0.0
        %v2656 = vmax.f32 %v2568, 0.0
        %v2657 = vmax.f32 %v2573, 0.0
        %v2658 = vmax.f32 %v2576, 0.0
        %v2659 = vmax.f32 %v2581, 0.0
        %v2660 = vmax.f32 %v2584, 0.0
        %v2661 = vmax.f32 %v2589, 0.0
        %v2662 = vmax.f32 %v2592, 0.0
        %v2663 = vmax.f32 %v2597, 0.0
        %v2664 = vmax.f32 %v2600, 0.0
        %v2665 = vmax.f32 %v2605, 0.0
        %v2666 = vmax.f32 %v2608, 0.0
        %v2667 = vmax.f32 %v2613, 0.0
        %v2668 = vmax.f32 %v2616, 0.0
        %v2669 = vmax.f32 %v2621, 0.0
        %v2670 = vmax.f32 %v2624, 0.0
        %v2671 = vmax.f32 %v2629, 0.0
        %v2672 = vmax.f32 %v2632, 0.0
        %v2673 = vmax.f32 %v2637, 0.0
        %v2674 = vmax.f32 %v2640, 0.0
        %vm2675 = vcmask 392192
        %2676 = vst.msk [vmem:[%s1409] sm:$0xff] %vm2675, %v2643
        %2677 = vst.msk [vmem:[%s1409 + $0x8] sm:$0xff] %vm2675, %v2644
        %2678 = vst.msk [vmem:[%s1409 + $0x10] sm:$0xff] %vm2675, %v2645
        %2679 = vst.msk [vmem:[%s1409 + $0x18] sm:$0xff] %vm2675, %v2646
        %2680 = vst.msk [vmem:[%s1409 + $0x20] sm:$0xff] %vm2675, %v2647
        %2681 = vst.msk [vmem:[%s1409 + $0x28] sm:$0xff] %vm2675, %v2648
        %2682 = vst.msk [vmem:[%s1409 + $0x30] sm:$0xff] %vm2675, %v2649
        %2683 = vst.msk [vmem:[%s1409 + $0x38] sm:$0xff] %vm2675, %v2650
        %2684 = vst.msk [vmem:[%s1409 + $0x40] sm:$0xff] %vm2675, %v2651
        %2685 = vst.msk [vmem:[%s1409 + $0x48] sm:$0xff] %vm2675, %v2652
        %2686 = vst.msk [vmem:[%s1409 + $0x50] sm:$0xff] %vm2675, %v2653
        %2687 = vst.msk [vmem:[%s1409 + $0x58] sm:$0xff] %vm2675, %v2654
        %2688 = vst.msk [vmem:[%s1409 + $0x60] sm:$0xff] %vm2675, %v2655
        %2689 = vst.msk [vmem:[%s1409 + $0x68] sm:$0xff] %vm2675, %v2656
        %2690 = vst.msk [vmem:[%s1409 + $0x70] sm:$0xff] %vm2675, %v2657
        %2691 = vst.msk [vmem:[%s1409 + $0x78] sm:$0xff] %vm2675, %v2658
        %2692 = vst.msk [vmem:[%s1409 + $0x80] sm:$0xff] %vm2675, %v2659
        %2693 = vst.msk [vmem:[%s1409 + $0x88] sm:$0xff] %vm2675, %v2660
        %2694 = vst.msk [vmem:[%s1409 + $0x90] sm:$0xff] %vm2675, %v2661
        %2695 = vst.msk [vmem:[%s1409 + $0x98] sm:$0xff] %vm2675, %v2662
        %2696 = vst.msk [vmem:[%s1409 + $0xa0] sm:$0xff] %vm2675, %v2663
        %2697 = vst.msk [vmem:[%s1409 + $0xa8] sm:$0xff] %vm2675, %v2664
        %2698 = vst.msk [vmem:[%s1409 + $0xb0] sm:$0xff] %vm2675, %v2665
        %2699 = vst.msk [vmem:[%s1409 + $0xb8] sm:$0xff] %vm2675, %v2666
        %2700 = vst.msk [vmem:[%s1409 + $0xc0] sm:$0xff] %vm2675, %v2667
        %2701 = vst.msk [vmem:[%s1409 + $0xc8] sm:$0xff] %vm2675, %v2668
        %2702 = vst.msk [vmem:[%s1409 + $0xd0] sm:$0xff] %vm2675, %v2669
        %2703 = vst.msk [vmem:[%s1409 + $0xd8] sm:$0xff] %vm2675, %v2670
        %2704 = vst.msk [vmem:[%s1409 + $0xe0] sm:$0xff] %vm2675, %v2671
        %2705 = vst.msk [vmem:[%s1409 + $0xe8] sm:$0xff] %vm2675, %v2672
        %2706 = vst.msk [vmem:[%s1409 + $0xf0] sm:$0xff] %vm2675, %v2673
        %2707 = vst.msk [vmem:[%s1409 + $0xf8] sm:$0xff] %vm2675, %v2674
        %s2708 = smul.u32 32, %s16
        %p2709 = scmp.lt.s32.totalorder %s2708, 63
        %s2710 = scalar_select %p2709, %s2708, 63
        %s2711 = smul.addr %s2710, 8
        %s2712 = scalar_lea.vmem %s5, %s2711
        // Predicated region
        $region79: #{learning_to_downsample.4} parent=73 // pred_check
          %p2713 = pneg %p144
        $region80: #{learning_to_downsample.4} parent=73 // pred_check_branch
          %2715 = sbr.rel (%p2713) target = $region82
        $region81: #{learning_to_downsample.4} parent=73 // pred_region
          %s2716 = smul.u32 32, %s16
        $region82: #{learning_to_downsample.4} parent=73 // pred_fallthru
          _
      $region74: #{learning_to_downsample.4} parent=5 // pred_fallthru
        _
      %p2717 = scmp.le.s32.totalorder 2, %s11
      // Predicated region
      $region83: #{learning_to_downsample.4} parent=5 // pred_check
        %p2718 = pneg %p2717
      $region84: #{learning_to_downsample.4} parent=5 // pred_check_branch
        %2720 = sbr.rel (%p2718) target = $region86
      $region85: #{learning_to_downsample.4} parent=5 // pred_region
        %s2721 = ssub.s32 %s11, 2
        // Predicated region
        $region87: #{learning_to_downsample.4} parent=85 // pred_check
          %p2722 = pneg %p150
        $region88: #{learning_to_downsample.4} parent=85 // pred_check_branch
          %2724 = sbr.rel (%p2722) target = $region90
        $region89: #{learning_to_downsample.4} parent=85 // pred_region
          %s2725 = smul.u32 32, %s17
          %p2726 = scmp.lt.s32.totalorder %s2725, 63
          %s2727 = scalar_select %p2726, %s2725, 63
          %s2728 = smul.addr %s2727, 8
          %s2729 = scalar_lea.vmem %s5, %s2728
        $region90: #{learning_to_downsample.4} parent=85 // pred_fallthru
          _
      $region86: #{learning_to_downsample.4} parent=5 // pred_fallthru
        _
    $region6: #{learning_to_downsample.4} parent=1 // loop_footer
      %s15 = sadd.s32 1, %s11
    $region7: #{learning_to_downsample.4} parent=1 // loop_footer_branch
      %10 = sbr.rel target = $region3
    $region8: #{learning_to_downsample.4} parent=1 // loop_exit
      _

// kernel: learning_to_downsample.5
$region0: #{learning_to_downsample.5}
  #allocation0 [shape = 'u32[]', space=smem, size = 0x4, offset = 0x4, fixed_abs, tag = 'smem constant byte address 0x4 - core index']
  #allocation1 [shape = 'u32[144,128]{1,0:T(1,128)}', space=vmem, size = 0x12000, scoped, tag = 'internal scratch']
  %s0 = inlined_call_operand.vmem [shape: f32[9,128,48], index: 0, kind: input, shape index: {}]
  %s1 = inlined_call_operand.vmem [shape: f32[9,1,48], index: 1, kind: input, shape index: {}]
  %s2 = inlined_call_operand.vmem [shape: f32[1,48], index: 2, kind: input, shape index: {}]
  %s3 = inlined_call_operand.vmem [shape: bf16[48,64], index: 3, kind: input, shape index: {}]
  %s4 = inlined_call_operand.vmem [shape: f32[1,64], index: 4, kind: input, shape index: {}]
  %s5 = inlined_call_operand.hbm [shape: f32[128,64], index: 5, kind: output, shape index: {}]
  %s6 = sld [smem:[#allocation0]]
  $region30: #{learning_to_downsample.5} parent=0
    _
  %s8 = ssub.s32 1, %s6
  %s9 = scalar_select 0, %s8, %s6
  $region1: #{learning_to_downsample.5} parent=0
    #allocation2 [shape = 'u8[65536]{0}', space=vmem, size = 0x10000, scoped, tag = 'output window, operand 0, single buffered']
    #allocation3 [shape = 's32[1]{0}', space=sflag, size = 0x4, scoped, tag = 'scoped memory for learning_to_downsample.5']
    %10 = vsyncpa [#allocation3], 0
    // Predicated region
    $region2: #{learning_to_downsample.5} parent=1 // pred_check
      _
    $region3: #{learning_to_downsample.5} parent=1 // pred_check_branch
      %12 = sbr.rel (0) target = $region5
    $region4: #{learning_to_downsample.5} parent=1 // pred_region
      _
    $region5: #{learning_to_downsample.5} parent=1 // pred_fallthru
      _
    // Predicated region
    $region6: #{learning_to_downsample.5} parent=1 // pred_check
      _
    $region7: #{learning_to_downsample.5} parent=1 // pred_check_branch
      %14 = sbr.rel (0) target = $region9
    $region8: #{learning_to_downsample.5} parent=1 // pred_region
      _
    $region9: #{learning_to_downsample.5} parent=1 // pred_fallthru
      _
    // Predicated region
    $region10: #{learning_to_downsample.5} parent=1 // pred_check
      _
    $region11: #{learning_to_downsample.5} parent=1 // pred_check_branch
      %16 = sbr.rel (0) target = $region13
    $region12: #{learning_to_downsample.5} parent=1 // pred_region
      _
    $region13: #{learning_to_downsample.5} parent=1 // pred_fallthru
      _
    // Predicated region
    $region14: #{learning_to_downsample.5} parent=1 // pred_check
      _
    $region15: #{learning_to_downsample.5} parent=1 // pred_check_branch
      %18 = sbr.rel (0) target = $region17
    $region16: #{learning_to_downsample.5} parent=1 // pred_region
      _
    $region17: #{learning_to_downsample.5} parent=1 // pred_fallthru
      _
    // Predicated region
    $region18: #{learning_to_downsample.5} parent=1 // pred_check
      _
    $region19: #{learning_to_downsample.5} parent=1 // pred_check_branch
      %20 = sbr.rel (0) target = $region21
    $region20: #{learning_to_downsample.5} parent=1 // pred_region
      _
    $region21: #{learning_to_downsample.5} parent=1 // pred_fallthru
      _
    %v22 = vld [vmem:[%s0] sm:$0xff]
    %v23 = vld [vmem:[%s0 + $0x8] sm:$0xff]
    %v24 = vld [vmem:[%s0 + $0x10] sm:$0xff]
    %v25 = vld [vmem:[%s0 + $0x18] sm:$0xff]
    %v26 = vld [vmem:[%s0 + $0x20] sm:$0xff]
    %v27 = vld [vmem:[%s0 + $0x28] sm:$0xff]
    %v28 = vld [vmem:[%s0 + $0x30] sm:$0xff]
    %v29 = vld [vmem:[%s0 + $0x38] sm:$0xff]
    %v30 = vld [vmem:[%s0 + $0x40] sm:$0xff]
    %v31 = vld [vmem:[%s0 + $0x48] sm:$0xff]
    %v32 = vld [vmem:[%s0 + $0x50] sm:$0xff]
    %v33 = vld [vmem:[%s0 + $0x58] sm:$0xff]
    %v34 = vld [vmem:[%s0 + $0x60] sm:$0xff]
    %v35 = vld [vmem:[%s0 + $0x68] sm:$0xff]
    %v36 = vld [vmem:[%s0 + $0x70] sm:$0xff]
    %v37 = vld [vmem:[%s0 + $0x78] sm:$0xff]
    %v38 = vld [vmem:[%s1] sm:$0x1]
    %v40 = vlaneseq
    %v41 = vshrl.u32 %v40, 7
    %v42 = vsub.s32 0, %v41
    %v43 = vrot.slane %v38, %v42
    %v45 = vmul.f32 %v22, %v43
    %v46 = vmul.f32 %v23, %v43
    %v47 = vmul.f32 %v24, %v43
    %v48 = vmul.f32 %v25, %v43
    %v49 = vmul.f32 %v26, %v43
    %v50 = vmul.f32 %v27, %v43
    %v51 = vmul.f32 %v28, %v43
    %v52 = vmul.f32 %v29, %v43
    %v53 = vmul.f32 %v30, %v43
    %v54 = vmul.f32 %v31, %v43
    %v55 = vmul.f32 %v32, %v43
    %v56 = vmul.f32 %v33, %v43
    %v57 = vmul.f32 %v34, %v43
    %v58 = vmul.f32 %v35, %v43
    %v59 = vmul.f32 %v36, %v43
    %v60 = vmul.f32 %v37, %v43
    %s61 = scalar_lea.vmem %s0, 128
    %v62 = vld [vmem:[%s61] sm:$0xff]
    %v63 = vld [vmem:[%s61 + $0x8] sm:$0xff]
    %v64 = vld [vmem:[%s61 + $0x10] sm:$0xff]
    %v65 = vld [vmem:[%s61 + $0x18] sm:$0xff]
    %v66 = vld [vmem:[%s61 + $0x20] sm:$0xff]
    %v67 = vld [vmem:[%s61 + $0x28] sm:$0xff]
    %v68 = vld [vmem:[%s61 + $0x30] sm:$0xff]
    %v69 = vld [vmem:[%s61 + $0x38] sm:$0xff]
    %v70 = vld [vmem:[%s61 + $0x40] sm:$0xff]
    %v71 = vld [vmem:[%s61 + $0x48] sm:$0xff]
    %v72 = vld [vmem:[%s61 + $0x50] sm:$0xff]
    %v73 = vld [vmem:[%s61 + $0x58] sm:$0xff]
    %v74 = vld [vmem:[%s61 + $0x60] sm:$0xff]
    %v75 = vld [vmem:[%s61 + $0x68] sm:$0xff]
    %v76 = vld [vmem:[%s61 + $0x70] sm:$0xff]
    %v77 = vld [vmem:[%s61 + $0x78] sm:$0xff]
    %s78 = scalar_lea.vmem %s1, 1
    %v79 = vld [vmem:[%s78] sm:$0x1]
    %v81 = vlaneseq
    %v82 = vshrl.u32 %v81, 7
    %v83 = vsub.s32 0, %v82
    %v84 = vrot.slane %v79, %v83
    %v86 = vmul.f32 %v62, %v84
    %v87 = vmul.f32 %v63, %v84
    %v88 = vmul.f32 %v64, %v84
    %v89 = vmul.f32 %v65, %v84
    %v90 = vmul.f32 %v66, %v84
    %v91 = vmul.f32 %v67, %v84
    %v92 = vmul.f32 %v68, %v84
    %v93 = vmul.f32 %v69, %v84
    %v94 = vmul.f32 %v70, %v84
    %v95 = vmul.f32 %v71, %v84
    %v96 = vmul.f32 %v72, %v84
    %v97 = vmul.f32 %v73, %v84
    %v98 = vmul.f32 %v74, %v84
    %v99 = vmul.f32 %v75, %v84
    %v100 = vmul.f32 %v76, %v84
    %v101 = vmul.f32 %v77, %v84
    %v102 = vadd.f32 %v45, %v86
    %v103 = vadd.f32 %v46, %v87
    %v104 = vadd.f32 %v47, %v88
    %v105 = vadd.f32 %v48, %v89
    %v106 = vadd.f32 %v49, %v90
    %v107 = vadd.f32 %v50, %v91
    %v108 = vadd.f32 %v51, %v92
    %v109 = vadd.f32 %v52, %v93
    %v110 = vadd.f32 %v53, %v94
    %v111 = vadd.f32 %v54, %v95
    %v112 = vadd.f32 %v55, %v96
    %v113 = vadd.f32 %v56, %v97
    %v114 = vadd.f32 %v57, %v98
    %v115 = vadd.f32 %v58, %v99
    %v116 = vadd.f32 %v59, %v100
    %v117 = vadd.f32 %v60, %v101
    %s118 = scalar_lea.vmem %s0, 256
    %v119 = vld [vmem:[%s118] sm:$0xff]
    %v120 = vld [vmem:[%s118 + $0x8] sm:$0xff]
    %v121 = vld [vmem:[%s118 + $0x10] sm:$0xff]
    %v122 = vld [vmem:[%s118 + $0x18] sm:$0xff]
    %v123 = vld [vmem:[%s118 + $0x20] sm:$0xff]
    %v124 = vld [vmem:[%s118 + $0x28] sm:$0xff]
    %v125 = vld [vmem:[%s118 + $0x30] sm:$0xff]
    %v126 = vld [vmem:[%s118 + $0x38] sm:$0xff]
    %v127 = vld [vmem:[%s118 + $0x40] sm:$0xff]
    %v128 = vld [vmem:[%s118 + $0x48] sm:$0xff]
    %v129 = vld [vmem:[%s118 + $0x50] sm:$0xff]
    %v130 = vld [vmem:[%s118 + $0x58] sm:$0xff]
    %v131 = vld [vmem:[%s118 + $0x60] sm:$0xff]
    %v132 = vld [vmem:[%s118 + $0x68] sm:$0xff]
    %v133 = vld [vmem:[%s118 + $0x70] sm:$0xff]
    %v134 = vld [vmem:[%s118 + $0x78] sm:$0xff]
    %s135 = scalar_lea.vmem %s1, 2
    %v136 = vld [vmem:[%s135] sm:$0x1]
    %v138 = vlaneseq
    %v139 = vshrl.u32 %v138, 7
    %v140 = vsub.s32 0, %v139
    %v141 = vrot.slane %v136, %v140
    %v143 = vmul.f32 %v119, %v141
    %v144 = vmul.f32 %v120, %v141
    %v145 = vmul.f32 %v121, %v141
    %v146 = vmul.f32 %v122, %v141
    %v147 = vmul.f32 %v123, %v141
    %v148 = vmul.f32 %v124, %v141
    %v149 = vmul.f32 %v125, %v141
    %v150 = vmul.f32 %v126, %v141
    %v151 = vmul.f32 %v127, %v141
    %v152 = vmul.f32 %v128, %v141
    %v153 = vmul.f32 %v129, %v141
    %v154 = vmul.f32 %v130, %v141
    %v155 = vmul.f32 %v131, %v141
    %v156 = vmul.f32 %v132, %v141
    %v157 = vmul.f32 %v133, %v141
    %v158 = vmul.f32 %v134, %v141
    %v159 = vadd.f32 %v102, %v143
    %v160 = vadd.f32 %v103, %v144
    %v161 = vadd.f32 %v104, %v145
    %v162 = vadd.f32 %v105, %v146
    %v163 = vadd.f32 %v106, %v147
    %v164 = vadd.f32 %v107, %v148
    %v165 = vadd.f32 %v108, %v149
    %v166 = vadd.f32 %v109, %v150
    %v167 = vadd.f32 %v110, %v151
    %v168 = vadd.f32 %v111, %v152
    %v169 = vadd.f32 %v112, %v153
    %v170 = vadd.f32 %v113, %v154
    %v171 = vadd.f32 %v114, %v155
    %v172 = vadd.f32 %v115, %v156
    %v173 = vadd.f32 %v116, %v157
    %v174 = vadd.f32 %v117, %v158
    %s175 = scalar_lea.vmem %s0, 384
    %v176 = vld [vmem:[%s175] sm:$0xff]
    %v177 = vld [vmem:[%s175 + $0x8] sm:$0xff]
    %v178 = vld [vmem:[%s175 + $0x10] sm:$0xff]
    %v179 = vld [vmem:[%s175 + $0x18] sm:$0xff]
    %v180 = vld [vmem:[%s175 + $0x20] sm:$0xff]
    %v181 = vld [vmem:[%s175 + $0x28] sm:$0xff]
    %v182 = vld [vmem:[%s175 + $0x30] sm:$0xff]
    %v183 = vld [vmem:[%s175 + $0x38] sm:$0xff]
    %v184 = vld [vmem:[%s175 + $0x40] sm:$0xff]
    %v185 = vld [vmem:[%s175 + $0x48] sm:$0xff]
    %v186 = vld [vmem:[%s175 + $0x50] sm:$0xff]
    %v187 = vld [vmem:[%s175 + $0x58] sm:$0xff]
    %v188 = vld [vmem:[%s175 + $0x60] sm:$0xff]
    %v189 = vld [vmem:[%s175 + $0x68] sm:$0xff]
    %v190 = vld [vmem:[%s175 + $0x70] sm:$0xff]
    %v191 = vld [vmem:[%s175 + $0x78] sm:$0xff]
    %s192 = scalar_lea.vmem %s1, 3
    %v193 = vld [vmem:[%s192] sm:$0x1]
    %v195 = vlaneseq
    %v196 = vshrl.u32 %v195, 7
    %v197 = vsub.s32 0, %v196
    %v198 = vrot.slane %v193, %v197
    %v200 = vmul.f32 %v176, %v198
    %v201 = vmul.f32 %v177, %v198
    %v202 = vmul.f32 %v178, %v198
    %v203 = vmul.f32 %v179, %v198
    %v204 = vmul.f32 %v180, %v198
    %v205 = vmul.f32 %v181, %v198
    %v206 = vmul.f32 %v182, %v198
    %v207 = vmul.f32 %v183, %v198
    %v208 = vmul.f32 %v184, %v198
    %v209 = vmul.f32 %v185, %v198
    %v210 = vmul.f32 %v186, %v198
    %v211 = vmul.f32 %v187, %v198
    %v212 = vmul.f32 %v188, %v198
    %v213 = vmul.f32 %v189, %v198
    %v214 = vmul.f32 %v190, %v198
    %v215 = vmul.f32 %v191, %v198
    %v216 = vadd.f32 %v159, %v200
    %v217 = vadd.f32 %v160, %v201
    %v218 = vadd.f32 %v161, %v202
    %v219 = vadd.f32 %v162, %v203
    %v220 = vadd.f32 %v163, %v204
    %v221 = vadd.f32 %v164, %v205
    %v222 = vadd.f32 %v165, %v206
    %v223 = vadd.f32 %v166, %v207
    %v224 = vadd.f32 %v167, %v208
    %v225 = vadd.f32 %v168, %v209
    %v226 = vadd.f32 %v169, %v210
    %v227 = vadd.f32 %v170, %v211
    %v228 = vadd.f32 %v171, %v212
    %v229 = vadd.f32 %v172, %v213
    %v230 = vadd.f32 %v173, %v214
    %v231 = vadd.f32 %v174, %v215
    %s232 = scalar_lea.vmem %s0, 512
    %v233 = vld [vmem:[%s232] sm:$0xff]
    %v234 = vld [vmem:[%s232 + $0x8] sm:$0xff]
    %v235 = vld [vmem:[%s232 + $0x10] sm:$0xff]
    %v236 = vld [vmem:[%s232 + $0x18] sm:$0xff]
    %v237 = vld [vmem:[%s232 + $0x20] sm:$0xff]
    %v238 = vld [vmem:[%s232 + $0x28] sm:$0xff]
    %v239 = vld [vmem:[%s232 + $0x30] sm:$0xff]
    %v240 = vld [vmem:[%s232 + $0x38] sm:$0xff]
    %v241 = vld [vmem:[%s232 + $0x40] sm:$0xff]
    %v242 = vld [vmem:[%s232 + $0x48] sm:$0xff]
    %v243 = vld [vmem:[%s232 + $0x50] sm:$0xff]
    %v244 = vld [vmem:[%s232 + $0x58] sm:$0xff]
    %v245 = vld [vmem:[%s232 + $0x60] sm:$0xff]
    %v246 = vld [vmem:[%s232 + $0x68] sm:$0xff]
    %v247 = vld [vmem:[%s232 + $0x70] sm:$0xff]
    %v248 = vld [vmem:[%s232 + $0x78] sm:$0xff]
    %s249 = scalar_lea.vmem %s1, 4
    %v250 = vld [vmem:[%s249] sm:$0x1]
    %v252 = vlaneseq
    %v253 = vshrl.u32 %v252, 7
    %v254 = vsub.s32 0, %v253
    %v255 = vrot.slane %v250, %v254
    %v257 = vmul.f32 %v233, %v255
    %v258 = vmul.f32 %v234, %v255
    %v259 = vmul.f32 %v235, %v255
    %v260 = vmul.f32 %v236, %v255
    %v261 = vmul.f32 %v237, %v255
    %v262 = vmul.f32 %v238, %v255
    %v263 = vmul.f32 %v239, %v255
    %v264 = vmul.f32 %v240, %v255
    %v265 = vmul.f32 %v241, %v255
    %v266 = vmul.f32 %v242, %v255
    %v267 = vmul.f32 %v243, %v255
    %v268 = vmul.f32 %v244, %v255
    %v269 = vmul.f32 %v245, %v255
    %v270 = vmul.f32 %v246, %v255
    %v271 = vmul.f32 %v247, %v255
    %v272 = vmul.f32 %v248, %v255
    %v273 = vadd.f32 %v216, %v257
    %v274 = vadd.f32 %v217, %v258
    %v275 = vadd.f32 %v218, %v259
    %v276 = vadd.f32 %v219, %v260
    %v277 = vadd.f32 %v220, %v261
    %v278 = vadd.f32 %v221, %v262
    %v279 = vadd.f32 %v222, %v263
    %v280 = vadd.f32 %v223, %v264
    %v281 = vadd.f32 %v224, %v265
    %v282 = vadd.f32 %v225, %v266
    %v283 = vadd.f32 %v226, %v267
    %v284 = vadd.f32 %v227, %v268
    %v285 = vadd.f32 %v228, %v269
    %v286 = vadd.f32 %v229, %v270
    %v287 = vadd.f32 %v230, %v271
    %v288 = vadd.f32 %v231, %v272
    %s289 = scalar_lea.vmem %s0, 640
    %v290 = vld [vmem:[%s289] sm:$0xff]
    %v291 = vld [vmem:[%s289 + $0x8] sm:$0xff]
    %v292 = vld [vmem:[%s289 + $0x10] sm:$0xff]
    %v293 = vld [vmem:[%s289 + $0x18] sm:$0xff]
    %v294 = vld [vmem:[%s289 + $0x20] sm:$0xff]
    %v295 = vld [vmem:[%s289 + $0x28] sm:$0xff]
    %v296 = vld [vmem:[%s289 + $0x30] sm:$0xff]
    %v297 = vld [vmem:[%s289 + $0x38] sm:$0xff]
    %v298 = vld [vmem:[%s289 + $0x40] sm:$0xff]
    %v299 = vld [vmem:[%s289 + $0x48] sm:$0xff]
    %v300 = vld [vmem:[%s289 + $0x50] sm:$0xff]
    %v301 = vld [vmem:[%s289 + $0x58] sm:$0xff]
    %v302 = vld [vmem:[%s289 + $0x60] sm:$0xff]
    %v303 = vld [vmem:[%s289 + $0x68] sm:$0xff]
    %v304 = vld [vmem:[%s289 + $0x70] sm:$0xff]
    %v305 = vld [vmem:[%s289 + $0x78] sm:$0xff]
    %s306 = scalar_lea.vmem %s1, 5
    %v307 = vld [vmem:[%s306] sm:$0x1]
    %v309 = vlaneseq
    %v310 = vshrl.u32 %v309, 7
    %v311 = vsub.s32 0, %v310
    %v312 = vrot.slane %v307, %v311
    %v314 = vmul.f32 %v290, %v312
    %v315 = vmul.f32 %v291, %v312
    %v316 = vmul.f32 %v292, %v312
    %v317 = vmul.f32 %v293, %v312
    %v318 = vmul.f32 %v294, %v312
    %v319 = vmul.f32 %v295, %v312
    %v320 = vmul.f32 %v296, %v312
    %v321 = vmul.f32 %v297, %v312
    %v322 = vmul.f32 %v298, %v312
    %v323 = vmul.f32 %v299, %v312
    %v324 = vmul.f32 %v300, %v312
    %v325 = vmul.f32 %v301, %v312
    %v326 = vmul.f32 %v302, %v312
    %v327 = vmul.f32 %v303, %v312
    %v328 = vmul.f32 %v304, %v312
    %v329 = vmul.f32 %v305, %v312
    %v330 = vadd.f32 %v273, %v314
    %v331 = vadd.f32 %v274, %v315
    %v332 = vadd.f32 %v275, %v316
    %v333 = vadd.f32 %v276, %v317
    %v334 = vadd.f32 %v277, %v318
    %v335 = vadd.f32 %v278, %v319
    %v336 = vadd.f32 %v279, %v320
    %v337 = vadd.f32 %v280, %v321
    %v338 = vadd.f32 %v281, %v322
    %v339 = vadd.f32 %v282, %v323
    %v340 = vadd.f32 %v283, %v324
    %v341 = vadd.f32 %v284, %v325
    %v342 = vadd.f32 %v285, %v326
    %v343 = vadd.f32 %v286, %v327
    %v344 = vadd.f32 %v287, %v328
    %v345 = vadd.f32 %v288, %v329
    %s346 = scalar_lea.vmem %s0, 768
    %v347 = vld [vmem:[%s346] sm:$0xff]
    %v348 = vld [vmem:[%s346 + $0x8] sm:$0xff]
    %v349 = vld [vmem:[%s346 + $0x10] sm:$0xff]
    %v350 = vld [vmem:[%s346 + $0x18] sm:$0xff]
    %v351 = vld [vmem:[%s346 + $0x20] sm:$0xff]
    %v352 = vld [vmem:[%s346 + $0x28] sm:$0xff]
    %v353 = vld [vmem:[%s346 + $0x30] sm:$0xff]
    %v354 = vld [vmem:[%s346 + $0x38] sm:$0xff]
    %v355 = vld [vmem:[%s346 + $0x40] sm:$0xff]
    %v356 = vld [vmem:[%s346 + $0x48] sm:$0xff]
    %v357 = vld [vmem:[%s346 + $0x50] sm:$0xff]
    %v358 = vld [vmem:[%s346 + $0x58] sm:$0xff]
    %v359 = vld [vmem:[%s346 + $0x60] sm:$0xff]
    %v360 = vld [vmem:[%s346 + $0x68] sm:$0xff]
    %v361 = vld [vmem:[%s346 + $0x70] sm:$0xff]
    %v362 = vld [vmem:[%s346 + $0x78] sm:$0xff]
    %s363 = scalar_lea.vmem %s1, 6
    %v364 = vld [vmem:[%s363] sm:$0x1]
    %v366 = vlaneseq
    %v367 = vshrl.u32 %v366, 7
    %v368 = vsub.s32 0, %v367
    %v369 = vrot.slane %v364, %v368
    %v371 = vmul.f32 %v347, %v369
    %v372 = vmul.f32 %v348, %v369
    %v373 = vmul.f32 %v349, %v369
    %v374 = vmul.f32 %v350, %v369
    %v375 = vmul.f32 %v351, %v369
    %v376 = vmul.f32 %v352, %v369
    %v377 = vmul.f32 %v353, %v369
    %v378 = vmul.f32 %v354, %v369
    %v379 = vmul.f32 %v355, %v369
    %v380 = vmul.f32 %v356, %v369
    %v381 = vmul.f32 %v357, %v369
    %v382 = vmul.f32 %v358, %v369
    %v383 = vmul.f32 %v359, %v369
    %v384 = vmul.f32 %v360, %v369
    %v385 = vmul.f32 %v361, %v369
    %v386 = vmul.f32 %v362, %v369
    %v387 = vadd.f32 %v330, %v371
    %v388 = vadd.f32 %v331, %v372
    %v389 = vadd.f32 %v332, %v373
    %v390 = vadd.f32 %v333, %v374
    %v391 = vadd.f32 %v334, %v375
    %v392 = vadd.f32 %v335, %v376
    %v393 = vadd.f32 %v336, %v377
    %v394 = vadd.f32 %v337, %v378
    %v395 = vadd.f32 %v338, %v379
    %v396 = vadd.f32 %v339, %v380
    %v397 = vadd.f32 %v340, %v381
    %v398 = vadd.f32 %v341, %v382
    %v399 = vadd.f32 %v342, %v383
    %v400 = vadd.f32 %v343, %v384
    %v401 = vadd.f32 %v344, %v385
    %v402 = vadd.f32 %v345, %v386
    %s403 = scalar_lea.vmem %s0, 896
    %v404 = vld [vmem:[%s403] sm:$0xff]
    %v405 = vld [vmem:[%s403 + $0x8] sm:$0xff]
    %v406 = vld [vmem:[%s403 + $0x10] sm:$0xff]
    %v407 = vld [vmem:[%s403 + $0x18] sm:$0xff]
    %v408 = vld [vmem:[%s403 + $0x20] sm:$0xff]
    %v409 = vld [vmem:[%s403 + $0x28] sm:$0xff]
    %v410 = vld [vmem:[%s403 + $0x30] sm:$0xff]
    %v411 = vld [vmem:[%s403 + $0x38] sm:$0xff]
    %v412 = vld [vmem:[%s403 + $0x40] sm:$0xff]
    %v413 = vld [vmem:[%s403 + $0x48] sm:$0xff]
    %v414 = vld [vmem:[%s403 + $0x50] sm:$0xff]
    %v415 = vld [vmem:[%s403 + $0x58] sm:$0xff]
    %v416 = vld [vmem:[%s403 + $0x60] sm:$0xff]
    %v417 = vld [vmem:[%s403 + $0x68] sm:$0xff]
    %v418 = vld [vmem:[%s403 + $0x70] sm:$0xff]
    %v419 = vld [vmem:[%s403 + $0x78] sm:$0xff]
    %s420 = scalar_lea.vmem %s1, 7
    %v421 = vld [vmem:[%s420] sm:$0x1]
    %v423 = vlaneseq
    %v424 = vshrl.u32 %v423, 7
    %v425 = vsub.s32 0, %v424
    %v426 = vrot.slane %v421, %v425
    %v428 = vmul.f32 %v404, %v426
    %v429 = vmul.f32 %v405, %v426
    %v430 = vmul.f32 %v406, %v426
    %v431 = vmul.f32 %v407, %v426
    %v432 = vmul.f32 %v408, %v426
    %v433 = vmul.f32 %v409, %v426
    %v434 = vmul.f32 %v410, %v426
    %v435 = vmul.f32 %v411, %v426
    %v436 = vmul.f32 %v412, %v426
    %v437 = vmul.f32 %v413, %v426
    %v438 = vmul.f32 %v414, %v426
    %v439 = vmul.f32 %v415, %v426
    %v440 = vmul.f32 %v416, %v426
    %v441 = vmul.f32 %v417, %v426
    %v442 = vmul.f32 %v418, %v426
    %v443 = vmul.f32 %v419, %v426
    %v444 = vadd.f32 %v387, %v428
    %v445 = vadd.f32 %v388, %v429
    %v446 = vadd.f32 %v389, %v430
    %v447 = vadd.f32 %v390, %v431
    %v448 = vadd.f32 %v391, %v432
    %v449 = vadd.f32 %v392, %v433
    %v450 = vadd.f32 %v393, %v434
    %v451 = vadd.f32 %v394, %v435
    %v452 = vadd.f32 %v395, %v436
    %v453 = vadd.f32 %v396, %v437
    %v454 = vadd.f32 %v397, %v438
    %v455 = vadd.f32 %v398, %v439
    %v456 = vadd.f32 %v399, %v440
    %v457 = vadd.f32 %v400, %v441
    %v458 = vadd.f32 %v401, %v442
    %v459 = vadd.f32 %v402, %v443
    %s460 = scalar_lea.vmem %s0, 1024
    %v461 = vld [vmem:[%s460] sm:$0xff]
    %v462 = vld [vmem:[%s460 + $0x8] sm:$0xff]
    %v463 = vld [vmem:[%s460 + $0x10] sm:$0xff]
    %v464 = vld [vmem:[%s460 + $0x18] sm:$0xff]
    %v465 = vld [vmem:[%s460 + $0x20] sm:$0xff]
    %v466 = vld [vmem:[%s460 + $0x28] sm:$0xff]
    %v467 = vld [vmem:[%s460 + $0x30] sm:$0xff]
    %v468 = vld [vmem:[%s460 + $0x38] sm:$0xff]
    %v469 = vld [vmem:[%s460 + $0x40] sm:$0xff]
    %v470 = vld [vmem:[%s460 + $0x48] sm:$0xff]
    %v471 = vld [vmem:[%s460 + $0x50] sm:$0xff]
    %v472 = vld [vmem:[%s460 + $0x58] sm:$0xff]
    %v473 = vld [vmem:[%s460 + $0x60] sm:$0xff]
    %v474 = vld [vmem:[%s460 + $0x68] sm:$0xff]
    %v475 = vld [vmem:[%s460 + $0x70] sm:$0xff]
    %v476 = vld [vmem:[%s460 + $0x78] sm:$0xff]
    %s477 = scalar_lea.vmem %s1, 8
    %v478 = vld [vmem:[%s477] sm:$0x1]
    %v480 = vlaneseq
    %v481 = vshrl.u32 %v480, 7
    %v482 = vsub.s32 0, %v481
    %v483 = vrot.slane %v478, %v482
    %v485 = vmul.f32 %v461, %v483
    %v486 = vmul.f32 %v462, %v483
    %v487 = vmul.f32 %v463, %v483
    %v488 = vmul.f32 %v464, %v483
    %v489 = vmul.f32 %v465, %v483
    %v490 = vmul.f32 %v466, %v483
    %v491 = vmul.f32 %v467, %v483
    %v492 = vmul.f32 %v468, %v483
    %v493 = vmul.f32 %v469, %v483
    %v494 = vmul.f32 %v470, %v483
    %v495 = vmul.f32 %v471, %v483
    %v496 = vmul.f32 %v472, %v483
    %v497 = vmul.f32 %v473, %v483
    %v498 = vmul.f32 %v474, %v483
    %v499 = vmul.f32 %v475, %v483
    %v500 = vmul.f32 %v476, %v483
    %v501 = vadd.f32 %v444, %v485
    %v502 = vadd.f32 %v445, %v486
    %v503 = vadd.f32 %v446, %v487
    %v504 = vadd.f32 %v447, %v488
    %v505 = vadd.f32 %v448, %v489
    %v506 = vadd.f32 %v449, %v490
    %v507 = vadd.f32 %v450, %v491
    %v508 = vadd.f32 %v451, %v492
    %v509 = vadd.f32 %v452, %v493
    %v510 = vadd.f32 %v453, %v494
    %v511 = vadd.f32 %v454, %v495
    %v512 = vadd.f32 %v455, %v496
    %v513 = vadd.f32 %v456, %v497
    %v514 = vadd.f32 %v457, %v498
    %v515 = vadd.f32 %v458, %v499
    %v516 = vadd.f32 %v459, %v500
    %v517 = vld [vmem:[%s2] sm:$0x1]
    %v519 = vlaneseq
    %v520 = vshrl.u32 %v519, 7
    %v521 = vsub.s32 0, %v520
    %v522 = vrot.slane %v517, %v521
    %v524 = vadd.f32 %v501, %v522
    %v525 = vadd.f32 %v502, %v522
    %v526 = vadd.f32 %v503, %v522
    %v527 = vadd.f32 %v504, %v522
    %v528 = vadd.f32 %v505, %v522
    %v529 = vadd.f32 %v506, %v522
    %v530 = vadd.f32 %v507, %v522
    %v531 = vadd.f32 %v508, %v522
    %v532 = vadd.f32 %v509, %v522
    %v533 = vadd.f32 %v510, %v522
    %v534 = vadd.f32 %v511, %v522
    %v535 = vadd.f32 %v512, %v522
    %v536 = vadd.f32 %v513, %v522
    %v537 = vadd.f32 %v514, %v522
    %v538 = vadd.f32 %v515, %v522
    %v539 = vadd.f32 %v516, %v522
    %v540 = vmax.f32 %v524, 0.0
    %v541 = vmax.f32 %v525, 0.0
    %v542 = vmax.f32 %v526, 0.0
    %v543 = vmax.f32 %v527, 0.0
    %v544 = vmax.f32 %v528, 0.0
    %v545 = vmax.f32 %v529, 0.0
    %v546 = vmax.f32 %v530, 0.0
    %v547 = vmax.f32 %v531, 0.0
    %v548 = vmax.f32 %v532, 0.0
    %v549 = vmax.f32 %v533, 0.0
    %v550 = vmax.f32 %v534, 0.0
    %v551 = vmax.f32 %v535, 0.0
    %v552 = vmax.f32 %v536, 0.0
    %v553 = vmax.f32 %v537, 0.0
    %v554 = vmax.f32 %v538, 0.0
    %v555 = vmax.f32 %v539, 0.0
    %v556 = vpack.c.bf16 %v541, %v540
    %v557 = vpack.c.bf16 %v543, %v542
    %v558 = vpack.c.bf16 %v545, %v544
    %v559 = vpack.c.bf16 %v547, %v546
    %v560 = vpack.c.bf16 %v549, %v548
    %v561 = vpack.c.bf16 %v551, %v550
    %v562 = vpack.c.bf16 %v553, %v552
    %v563 = vpack.c.bf16 %v555, %v554
    %v564 = vld [vmem:[%s3] sm:$0xf]
    %v565 = vld [vmem:[%s3 + $0x4] sm:$0xf]
    %v566 = vld [vmem:[%s3 + $0x8] sm:$0xf]
    %v567 = vld [vmem:[%s3 + $0xc] sm:$0xf]
    %v568 = vld [vmem:[%s3 + $0x10] sm:$0xf]
    %v569 = vld [vmem:[%s3 + $0x14] sm:$0xf]
    %v570 = vld [vmem:[%s4] sm:$0x1]
    %v572 = vlaneseq
    %v573 = vshrl.u32 %v572, 7
    %v574 = vsub.s32 0, %v573
    %v575 = vrot.slane %v570, %v574
    %v583 = vunpack.c.l.b16 %v564
    %v584 = vunpack.c.l.b16 %v565
    %v585 = vunpack.c.l.b16 %v566
    %v586 = vunpack.c.l.b16 %v567
    %v587 = vunpack.c.l.b16 %v568
    %v588 = vunpack.c.l.b16 %v569
    %v589 = vpack.c.b16 %v584, %v583
    %v590 = vpack.c.b16 %v586, %v585
    %v591 = vpack.c.b16 %v588, %v587
    %vm595 = vcmask 392192
    %v597 = vsel %vm595, %v556, 0
    %v600 = vsel %vm595, %v557, 0
    %v603 = vsel %vm595, %v558, 0
    %v606 = vsel %vm595, %v559, 0
    %v609 = vsel %vm595, %v560, 0
    %v612 = vsel %vm595, %v561, 0
    %v615 = vsel %vm595, %v562, 0
    %v618 = vsel %vm595, %v563, 0
    %620 = vmatprep.subr.bf16.mxu0 0
    %621 = vmatpush1.bf16.msra.mxu0 0
    %622 = vmatprep.subr.bf16.mxu0 0
    %623 = vmatpush1.bf16.msra.mxu0 0
    %624 = vmatprep.subr.bf16.mxu0 0
    %625 = vmatpush1.bf16.msra.mxu0 0
    %626 = vmatprep.subr.bf16.mxu0 0
    %627 = vmatpush1.bf16.msra.mxu0 0
    %628 = vmatprep.subr.bf16.mxu0 0
    %629 = vmatpush1.bf16.msra.mxu0 0
    %630 = vmatprep.subr.bf16.mxu0 0
    %631 = vmatpush1.bf16.msra.mxu0 %v591
    %632 = vmatprep.subr.bf16.mxu0 0
    %633 = vmatpush1.bf16.msra.mxu0 %v590
    %634 = vmatprep.subr.bf16.mxu0 0
    %635 = vmatpush1.bf16.msra.mxu0 %v589
    %636 = vmatprep.subr.bf16.mxu0 0
    %637 = vmatpush2.bf16.msra.mxu0 0
    %638 = vmatprep.subr.bf16.mxu0 0
    %639 = vmatpush2.bf16.msra.mxu0 0
    %640 = vmatprep.subr.bf16.mxu0 0
    %641 = vmatpush2.bf16.msra.mxu0 0
    %642 = vmatprep.subr.bf16.mxu0 0
    %643 = vmatpush2.bf16.msra.mxu0 0
    %644 = vmatprep.subr.bf16.mxu0 0
    %645 = vmatpush2.bf16.msra.mxu0 0
    %646 = vmatprep.subr.bf16.mxu0 0
    %647 = vmatpush2.bf16.msra.mxu0 0
    %648 = vmatprep.subr.bf16.mxu0 0
    %649 = vmatpush2.bf16.msra.mxu0 0
    %650 = vmatprep.subr.bf16.mxu0 0
    %651 = vmatpush2.bf16.msra.mxu0 0
    %652 = vmatprep.mubr.bf16.mxu0 0
    %653 = vmatmul.mubr.bf16.gmra.mxu0 %v597
    %v654 = vpop.f32.mrf.mxu0
    %v655 = vadd.f32 %v575, %v654
    %v656 = vpop.f32.mrf.mxu0
    %v657 = vpop.f32.mrf.mxu0
    %v658 = vadd.f32 %v575, %v657
    %v659 = vpop.f32.mrf.mxu0
    %660 = vmatprep.mubr.bf16.mxu0 0
    %661 = vmatmul.mubr.bf16.gmra.mxu0 %v600
    %v662 = vpop.f32.mrf.mxu0
    %v663 = vadd.f32 %v575, %v662
    %v664 = vpop.f32.mrf.mxu0
    %v665 = vpop.f32.mrf.mxu0
    %v666 = vadd.f32 %v575, %v665
    %v667 = vpop.f32.mrf.mxu0
    %668 = vmatprep.mubr.bf16.mxu0 0
    %669 = vmatmul.mubr.bf16.gmra.mxu0 %v603
    %v670 = vpop.f32.mrf.mxu0
    %v671 = vadd.f32 %v575, %v670
    %v672 = vpop.f32.mrf.mxu0
    %v673 = vpop.f32.mrf.mxu0
    %v674 = vadd.f32 %v575, %v673
    %v675 = vpop.f32.mrf.mxu0
    %676 = vmatprep.mubr.bf16.mxu0 0
    %677 = vmatmul.mubr.bf16.gmra.mxu0 %v606
    %v678 = vpop.f32.mrf.mxu0
    %v679 = vadd.f32 %v575, %v678
    %v680 = vpop.f32.mrf.mxu0
    %v681 = vpop.f32.mrf.mxu0
    %v682 = vadd.f32 %v575, %v681
    %v683 = vpop.f32.mrf.mxu0
    %684 = vmatprep.mubr.bf16.mxu0 0
    %685 = vmatmul.mubr.bf16.gmra.mxu0 %v609
    %v686 = vpop.f32.mrf.mxu0
    %v687 = vadd.f32 %v575, %v686
    %v688 = vpop.f32.mrf.mxu0
    %v689 = vpop.f32.mrf.mxu0
    %v690 = vadd.f32 %v575, %v689
    %v691 = vpop.f32.mrf.mxu0
    %692 = vmatprep.mubr.bf16.mxu0 0
    %693 = vmatmul.mubr.bf16.gmra.mxu0 %v612
    %v694 = vpop.f32.mrf.mxu0
    %v695 = vadd.f32 %v575, %v694
    %v696 = vpop.f32.mrf.mxu0
    %v697 = vpop.f32.mrf.mxu0
    %v698 = vadd.f32 %v575, %v697
    %v699 = vpop.f32.mrf.mxu0
    %700 = vmatprep.mubr.bf16.mxu0 0
    %701 = vmatmul.mubr.bf16.gmra.mxu0 %v615
    %v702 = vpop.f32.mrf.mxu0
    %v703 = vadd.f32 %v575, %v702
    %v704 = vpop.f32.mrf.mxu0
    %v705 = vpop.f32.mrf.mxu0
    %v706 = vadd.f32 %v575, %v705
    %v707 = vpop.f32.mrf.mxu0
    %708 = vmatprep.mubr.bf16.mxu0 0
    %709 = vmatmul.mubr.bf16.gmra.mxu0 %v618
    %v710 = vpop.f32.mrf.mxu0
    %v711 = vadd.f32 %v575, %v710
    %v712 = vpop.f32.mrf.mxu0
    %v713 = vpop.f32.mrf.mxu0
    %v714 = vadd.f32 %v575, %v713
    %v715 = vpop.f32.mrf.mxu0
    %716 = vdwg.mxu0
    %v717 = vmax.f32 %v655, 0.0
    %v718 = vmax.f32 %v658, 0.0
    %v719 = vmax.f32 %v663, 0.0
    %v720 = vmax.f32 %v666, 0.0
    %v721 = vmax.f32 %v671, 0.0
    %v722 = vmax.f32 %v674, 0.0
    %v723 = vmax.f32 %v679, 0.0
    %v724 = vmax.f32 %v682, 0.0
    %v725 = vmax.f32 %v687, 0.0
    %v726 = vmax.f32 %v690, 0.0
    %v727 = vmax.f32 %v695, 0.0
    %v728 = vmax.f32 %v698, 0.0
    %v729 = vmax.f32 %v703, 0.0
    %v730 = vmax.f32 %v706, 0.0
    %v731 = vmax.f32 %v711, 0.0
    %v732 = vmax.f32 %v714, 0.0
    %vm733 = vcmask 523264
    %734 = vst.msk [vmem:[#allocation2] sm:$0xff] %vm733, %v717
    %735 = vst.msk [vmem:[#allocation2 + $0x8] sm:$0xff] %vm733, %v718
    %736 = vst.msk [vmem:[#allocation2 + $0x10] sm:$0xff] %vm733, %v719
    %737 = vst.msk [vmem:[#allocation2 + $0x18] sm:$0xff] %vm733, %v720
    %738 = vst.msk [vmem:[#allocation2 + $0x20] sm:$0xff] %vm733, %v721
    %739 = vst.msk [vmem:[#allocation2 + $0x28] sm:$0xff] %vm733, %v722
    %740 = vst.msk [vmem:[#allocation2 + $0x30] sm:$0xff] %vm733, %v723
    %741 = vst.msk [vmem:[#allocation2 + $0x38] sm:$0xff] %vm733, %v724
    %742 = vst.msk [vmem:[#allocation2 + $0x40] sm:$0xff] %vm733, %v725
    %743 = vst.msk [vmem:[#allocation2 + $0x48] sm:$0xff] %vm733, %v726
    %744 = vst.msk [vmem:[#allocation2 + $0x50] sm:$0xff] %vm733, %v727
    %745 = vst.msk [vmem:[#allocation2 + $0x58] sm:$0xff] %vm733, %v728
    %746 = vst.msk [vmem:[#allocation2 + $0x60] sm:$0xff] %vm733, %v729
    %747 = vst.msk [vmem:[#allocation2 + $0x68] sm:$0xff] %vm733, %v730
    %748 = vst.msk [vmem:[#allocation2 + $0x70] sm:$0xff] %vm733, %v731
    %749 = vst.msk [vmem:[#allocation2 + $0x78] sm:$0xff] %vm733, %v732
    // Predicated region
    $region22: #{learning_to_downsample.5} parent=1 // pred_check
      _
    $region23: #{learning_to_downsample.5} parent=1 // pred_check_branch
      %751 = sbr.rel (0) target = $region25
    $region24: #{learning_to_downsample.5} parent=1 // pred_region
      %s753 = ssub.s32 2048, 2048
      %754 = vsyncadd [#allocation3], %s753
      %s755 = sshll.u32 [#allocation2], 4
      %s756 = int_to_ptr.vmem [resolvable:$true] %s755
      %761 = dma.vmem_to_hbm [thread:$0]  %s756, 2048, %s5, [#allocation3], 128, 128, 8
    $region25: #{learning_to_downsample.5} parent=1 // pred_fallthru
      _
    // Predicated region
    $region26: #{learning_to_downsample.5} parent=1 // pred_check
      _
    $region27: #{learning_to_downsample.5} parent=1 // pred_check_branch
      %763 = sbr.rel (0) target = $region29
    $region28: #{learning_to_downsample.5} parent=1 // pred_region
      %764 = dma.done [#allocation3], 2048
    $region29: #{learning_to_downsample.5} parent=1 // pred_fallthru
      _
    %765 = vsyncpa [#allocation3], 1

</llo_original>
